<compile_context>
chip_gen: v5e
topology: v5e:2x2
jax: 0.10.0
libtpu: 0.0.40
codegen_flags: <defaults>
</compile_context>

<pallas_src>
import jax
import jax.numpy as jnp
from jax import lax
from jax.experimental import pallas as pl
from jax.experimental.pallas import tpu as pltpu

IN_EPS = 1e-5      # nn.InstanceNorm2d default eps
GEM_P = 3.0        # gem p
GEM_EPS = 1e-6     # gem eps


def _head_kernel(x_ref, gamma_ref, beta_ref, w1_ref, w2_ref, g_ref):
    """Processes Bblk samples per grid step, NCHW-native (C=sublanes, HW=lanes).

    x_ref     : [Bblk, C, HW]  backbone features (f32)
    gamma_ref : [1, C, 1]      InstanceNorm affine weight (f32)
    beta_ref  : [1, C, 1]      InstanceNorm affine bias (f32)
    w1_ref    : [Crp, C]       Mask conv1 weight, zero-padded rows (bf16)
    w2_ref    : [C, Crp]       Mask conv2 weight, zero-padded cols (bf16)
    g_ref     : [1, Bblk, C]   pooled GeM descriptor (f32, lane-dense)
    """
    bblk, c, hw = x_ref.shape

    # --- InstanceNorm2d: per-sample, per-channel stats over spatial (lane reduce) ---
    x = x_ref[...].astype(jnp.float32)                              # [Bblk, C, HW]
    mean = jnp.mean(x, axis=2, keepdims=True)                       # [Bblk, C, 1]
    var = jnp.mean(jnp.square(x - mean), axis=2, keepdims=True)     # biased (PyTorch IN)
    scale = gamma_ref[...] * lax.rsqrt(var + IN_EPS)                # [Bblk, C, 1]
    shift = beta_ref[...] - mean * scale
    x_in = x * scale + shift                                        # [Bblk, C, HW]

    # --- Mask: 1x1 conv -> ReLU -> 1x1 conv (bf16 MXU, f32 accumulation) ---
    x_bf = x_in.astype(jnp.bfloat16)
    w1 = w1_ref[...]                                                # [Crp, C]
    w2 = w2_ref[...]                                                # [C, Crp]
    ms = []
    for s in range(bblk):                                           # static unroll
        h = jnp.dot(w1, x_bf[s], preferred_element_type=jnp.float32)    # [Crp, HW]
        h = jnp.maximum(h, 0.0)
        m = jnp.dot(w2, h.astype(jnp.bfloat16),
                    preferred_element_type=jnp.float32)                 # [C, HW]
        ms.append(m)
    m = jax.nn.sigmoid(jnp.stack(ms, axis=0))                       # [Bblk, C, HW]

    # --- gating + GeM pooling (p=3), f32 ---
    y = x_in * m
    yc = jnp.maximum(y, GEM_EPS)                                    # clamp(min=eps)
    y3 = yc * yc * yc                                               # pow(p), p=3
    g = jnp.mean(y3, axis=2)                                        # avg over HxW -> [Bblk, C]
    g = jnp.exp(jnp.log(g) * (1.0 / GEM_P))                         # pow(1/p); g > 0
    g_ref[0] = g                                                    # lane-dense store


def _const_spec(shape):
    """BlockSpec for a grid-invariant operand; single-buffered when supported."""
    nd = len(shape)
    kwargs = {}
    if hasattr(pl, "Buffered"):
        kwargs["pipeline_mode"] = pl.Buffered(1)
    return pl.BlockSpec(shape, lambda b: (0,) * nd, **kwargs)


@jax.jit
def ir_teacher_head(x_nchw, gamma, beta, w1, w2, wc):
    """x_nchw: [B, C, H, W] backbone features (PyTorch NCHW convention).

    w1: [C//r, C]  (Conv2d(C, C//r, 1, bias=False).weight squeezed)
    w2: [C, C//r]  (Conv2d(C//r, C, 1, bias=False).weight squeezed)
    wc: [NC, C]    (Linear(C, NC, bias=False).weight)
    returns logits [B, NC]
    """
    B, C, H, W = x_nchw.shape
    HW = H * W
    Cr = w1.shape[0]
    Crp = max(128, ((Cr + 127) // 128) * 128)   # pad mask bottleneck to 128 lanes
    Bblk = 2 if (B % 2 == 0) else 1             # 2 samples/step amortizes overhead
    nb = B // Bblk

    # Free, metadata-only reshape: stays NCHW, no transpose / cast HBM round-trip.
    x = x_nchw.reshape(B, C, HW)
    gamma3 = gamma.reshape(1, C, 1).astype(jnp.float32)
    beta3 = beta.reshape(1, C, 1).astype(jnp.float32)
    w1p = jnp.pad(w1, ((0, Crp - Cr), (0, 0))).astype(jnp.bfloat16)    # [Crp, C]
    w2p = jnp.pad(w2, ((0, 0), (0, Crp - Cr))).astype(jnp.bfloat16)    # [C, Crp]

    g = pl.pallas_call(
        _head_kernel,
        out_shape=jax.ShapeDtypeStruct((nb, Bblk, C), jnp.float32),
        grid_spec=pltpu.PrefetchScalarGridSpec(
            num_scalar_prefetch=0,
            grid=(nb,),
            in_specs=[
                pl.BlockSpec((Bblk, C, HW), lambda b: (b, 0, 0)),
                _const_spec((1, C, 1)),
                _const_spec((1, C, 1)),
                _const_spec((Crp, C)),
                _const_spec((C, Crp)),
            ],
            out_specs=pl.BlockSpec((1, Bblk, C), lambda b: (b, 0, 0)),
        ),
        compiler_params=pltpu.CompilerParams(
            dimension_semantics=("parallel",),
            vmem_limit_bytes=48 * 1024 * 1024),
    )(x, gamma3, beta3, w1p, w2p)

    g = g.reshape(B, C)
    # Bias-free classifier: one well-shaped [B, C] x [C, NC] matmul in XLA
    # (keeps the NC-wide classifier weight out of VMEM entirely).
    return g @ jnp.transpose(wc).astype(g.dtype)


def _reference_head(x_nchw, gamma, beta, w1, w2, wc):
    """Pure-JAX f32 reference mirroring the PyTorch ops (correctness check)."""
    x = x_nchw.astype(jnp.float32)
    mean = jnp.mean(x, axis=(2, 3), keepdims=True)
    var = jnp.var(x, axis=(2, 3), keepdims=True)
    x_in = (x - mean) / jnp.sqrt(var + IN_EPS)
    x_in = x_in * gamma[None, :, None, None] + beta[None, :, None, None]
    h = jnp.einsum("bchw,oc->bohw", x_in, w1)
    h = jnp.maximum(h, 0.0)
    m = jax.nn.sigmoid(jnp.einsum("bchw,oc->bohw", h, w2))
    y = x_in * m
    g = jnp.mean(jnp.maximum(y, GEM_EPS) ** GEM_P, axis=(2, 3)) ** (1.0 / GEM_P)
    return g @ wc.T


if __name__ == "__main__":
    # Small, module-consistent shapes (stand-ins for dim=2048, num_classes=1000).
    B, C, H, W = 2, 256, 8, 8
    R = 16                      # Mask reduction ratio
    CR = C // R                 # 16 (padded to 128 lanes inside the wrapper)
    NUM_CLASSES = 128

    key = jax.random.PRNGKey(0)
    kx, kg, kb, k1, k2, kc = jax.random.split(key, 6)

    x = jax.random.normal(kx, (B, C, H, W), dtype=jnp.float32)
    # InstanceNorm affine params (PyTorch init: weight=1, bias=0; perturbed
    # deterministically to exercise the affine path).
    gamma = 1.0 + 0.1 * jax.random.normal(kg, (C,), dtype=jnp.float32)
    beta = 0.1 * jax.random.normal(kb, (C,), dtype=jnp.float32)
    # Mask convs (1x1, no bias) and classifier (no bias).
    w1 = 0.05 * jax.random.normal(k1, (CR, C), dtype=jnp.float32)
    w2 = 0.05 * jax.random.normal(k2, (C, CR), dtype=jnp.float32)
    wc = 0.05 * jax.random.normal(kc, (NUM_CLASSES, C), dtype=jnp.float32)

    logits = ir_teacher_head(x, gamma, beta, w1, w2, wc)
    logits = jax.block_until_ready(logits)

    ref = _reference_head(x, gamma, beta, w1, w2, wc)
    assert logits.shape == (B, NUM_CLASSES), logits.shape
    # bf16 matmul operands -> slightly looser tolerance than the pure-f32 path.
    assert jnp.allclose(logits, ref, atol=3e-2, rtol=3e-2), (
        float(jnp.max(jnp.abs(logits - ref))))

    print("KERNEL_OK")
</pallas_src>

<mosaic_0001>
module attributes {stable_mosaic.version = 11 : i64} {
  func.func @_head_kernel(%arg0: i32, %arg1: memref<2x256x64xf32, #tpu.memory_space<vmem>>, %arg2: memref<1x256x1xf32, #tpu.memory_space<vmem>>, %arg3: memref<1x256x1xf32, #tpu.memory_space<vmem>>, %arg4: memref<128x256xbf16, #tpu.memory_space<vmem>>, %arg5: memref<256x128xbf16, #tpu.memory_space<vmem>>, %arg6: memref<1x2x256xf32, #tpu.memory_space<vmem>>) attributes {dimension_semantics = [#tpu.dimension_semantics<parallel>], iteration_bounds = array<i64: 1>, scalar_prefetch = 0 : i64, scratch_operands = 0 : i64, tpu.core_type = #tpu.core_type<tc>, window_params = [{transform_indices = @transform_0, window_bounds = array<i64: 2, 256, 64>}, {pipeline_mode = #tpu.pipeline_mode<synchronous>, transform_indices = @transform_1, window_bounds = array<i64: 1, 256, 1>}, {pipeline_mode = #tpu.pipeline_mode<synchronous>, transform_indices = @transform_2, window_bounds = array<i64: 1, 256, 1>}, {pipeline_mode = #tpu.pipeline_mode<synchronous>, transform_indices = @transform_3, window_bounds = array<i64: 128, 256>}, {pipeline_mode = #tpu.pipeline_mode<synchronous>, transform_indices = @transform_4, window_bounds = array<i64: 256, 128>}, {transform_indices = @transform_5, window_bounds = array<i64: 1, 2, 256>}]} {
    %c0 = arith.constant 0 : index
    %c0_0 = arith.constant 0 : index
    %c0_1 = arith.constant 0 : index
    %0 = vector.load %arg1[%c0, %c0_0, %c0_1] : memref<2x256x64xf32, #tpu.memory_space<vmem>>, vector<2x256x64xf32>
    %cst = arith.constant dense<0.000000e+00> : vector<2x256xf32>
    %1 = vector.multi_reduction <add>, %0, %cst [2] : vector<2x256x64xf32> to vector<2x256xf32>
    %2 = vector.shape_cast %1 : vector<2x256xf32> to vector<2x256x1xf32>
    %cst_2 = arith.constant 6.400000e+01 : f32
    %3 = vector.broadcast %cst_2 : f32 to vector<2x256x1xf32>
    %4 = arith.divf %2, %3 : vector<2x256x1xf32>
    %5 = vector.broadcast %4 : vector<2x256x1xf32> to vector<2x256x64xf32>
    %6 = arith.subf %0, %5 : vector<2x256x64xf32>
    %7 = arith.mulf %6, %6 : vector<2x256x64xf32>
    %cst_3 = arith.constant dense<0.000000e+00> : vector<2x256xf32>
    %8 = vector.multi_reduction <add>, %7, %cst_3 [2] : vector<2x256x64xf32> to vector<2x256xf32>
    %9 = vector.shape_cast %8 : vector<2x256xf32> to vector<2x256x1xf32>
    %cst_4 = arith.constant 6.400000e+01 : f32
    %10 = vector.broadcast %cst_4 : f32 to vector<2x256x1xf32>
    %11 = arith.divf %9, %10 : vector<2x256x1xf32>
    %c0_5 = arith.constant 0 : index
    %c0_6 = arith.constant 0 : index
    %c0_7 = arith.constant 0 : index
    %12 = vector.load %arg2[%c0_5, %c0_6, %c0_7] : memref<1x256x1xf32, #tpu.memory_space<vmem>>, vector<1x256x1xf32>
    %cst_8 = arith.constant 9.99999974E-6 : f32
    %13 = vector.broadcast %cst_8 : f32 to vector<2x256x1xf32>
    %14 = arith.addf %11, %13 : vector<2x256x1xf32>
    %15 = math.rsqrt %14 : vector<2x256x1xf32>
    %16 = vector.broadcast %12 : vector<1x256x1xf32> to vector<2x256x1xf32>
    %17 = arith.mulf %16, %15 : vector<2x256x1xf32>
    %c0_9 = arith.constant 0 : index
    %c0_10 = arith.constant 0 : index
    %c0_11 = arith.constant 0 : index
    %18 = vector.load %arg3[%c0_9, %c0_10, %c0_11] : memref<1x256x1xf32, #tpu.memory_space<vmem>>, vector<1x256x1xf32>
    %19 = arith.mulf %4, %17 : vector<2x256x1xf32>
    %20 = vector.broadcast %18 : vector<1x256x1xf32> to vector<2x256x1xf32>
    %21 = arith.subf %20, %19 : vector<2x256x1xf32>
    %22 = vector.broadcast %17 : vector<2x256x1xf32> to vector<2x256x64xf32>
    %23 = arith.mulf %0, %22 : vector<2x256x64xf32>
    %24 = vector.broadcast %21 : vector<2x256x1xf32> to vector<2x256x64xf32>
    %25 = arith.addf %23, %24 : vector<2x256x64xf32>
    %26 = arith.truncf %25 : vector<2x256x64xf32> to vector<2x256x64xbf16>
    %c0_12 = arith.constant 0 : index
    %c0_13 = arith.constant 0 : index
    %27 = vector.load %arg4[%c0_12, %c0_13] : memref<128x256xbf16, #tpu.memory_space<vmem>>, vector<128x256xbf16>
    %c0_14 = arith.constant 0 : index
    %c0_15 = arith.constant 0 : index
    %28 = vector.load %arg5[%c0_14, %c0_15] : memref<256x128xbf16, #tpu.memory_space<vmem>>, vector<256x128xbf16>
    %29 = vector.extract_strided_slice %26 {offsets = [0, 0, 0], sizes = [1, 256, 64], strides = [1, 1, 1]} : vector<2x256x64xbf16> to vector<1x256x64xbf16>
    %30 = vector.shape_cast %29 : vector<1x256x64xbf16> to vector<256x64xbf16>
    %cst_16 = arith.constant dense<0.000000e+00> : vector<128x64xf32>
    %31 = tpu.matmul %27, %30, %cst_16 {dimension_numbers = #tpu.dot_dimension_numbers<[1], [0], [0], [1], [0, 0, 1, 1], [], []>} : vector<128x256xbf16>, vector<256x64xbf16>, vector<128x64xf32> -> vector<128x64xf32>
    %cst_17 = arith.constant 0.000000e+00 : f32
    %32 = vector.broadcast %cst_17 : f32 to vector<128x64xf32>
    %33 = arith.maximumf %31, %32 : vector<128x64xf32>
    %34 = arith.truncf %33 : vector<128x64xf32> to vector<128x64xbf16>
    %cst_18 = arith.constant dense<0.000000e+00> : vector<256x64xf32>
    %35 = tpu.matmul %28, %34, %cst_18 {dimension_numbers = #tpu.dot_dimension_numbers<[1], [0], [0], [1], [0, 0, 1, 1], [], []>} : vector<256x128xbf16>, vector<128x64xbf16>, vector<256x64xf32> -> vector<256x64xf32>
    %36 = vector.extract_strided_slice %26 {offsets = [1, 0, 0], sizes = [1, 256, 64], strides = [1, 1, 1]} : vector<2x256x64xbf16> to vector<1x256x64xbf16>
    %37 = vector.shape_cast %36 : vector<1x256x64xbf16> to vector<256x64xbf16>
    %cst_19 = arith.constant dense<0.000000e+00> : vector<128x64xf32>
    %38 = tpu.matmul %27, %37, %cst_19 {dimension_numbers = #tpu.dot_dimension_numbers<[1], [0], [0], [1], [0, 0, 1, 1], [], []>} : vector<128x256xbf16>, vector<256x64xbf16>, vector<128x64xf32> -> vector<128x64xf32>
    %cst_20 = arith.constant 0.000000e+00 : f32
    %39 = vector.broadcast %cst_20 : f32 to vector<128x64xf32>
    %40 = arith.maximumf %38, %39 : vector<128x64xf32>
    %41 = arith.truncf %40 : vector<128x64xf32> to vector<128x64xbf16>
    %cst_21 = arith.constant dense<0.000000e+00> : vector<256x64xf32>
    %42 = tpu.matmul %28, %41, %cst_21 {dimension_numbers = #tpu.dot_dimension_numbers<[1], [0], [0], [1], [0, 0, 1, 1], [], []>} : vector<256x128xbf16>, vector<128x64xbf16>, vector<256x64xf32> -> vector<256x64xf32>
    %43 = vector.shape_cast %35 : vector<256x64xf32> to vector<1x256x64xf32>
    %44 = vector.shape_cast %42 : vector<256x64xf32> to vector<1x256x64xf32>
    %45 = tpu.concatenate %43, %44 in 0 : vector<1x256x64xf32>, vector<1x256x64xf32> -> vector<2x256x64xf32>
    %46 = arith.negf %45 : vector<2x256x64xf32>
    %47 = math.exp %46 : vector<2x256x64xf32>
    %cst_22 = arith.constant 1.000000e+00 : f32
    %48 = vector.broadcast %cst_22 : f32 to vector<2x256x64xf32>
    %49 = arith.addf %48, %47 : vector<2x256x64xf32>
    %50 = arith.divf %48, %49 : vector<2x256x64xf32>
    %51 = arith.mulf %25, %50 : vector<2x256x64xf32>
    %cst_23 = arith.constant 9.99999997E-7 : f32
    %52 = vector.broadcast %cst_23 : f32 to vector<2x256x64xf32>
    %53 = arith.maximumf %51, %52 : vector<2x256x64xf32>
    %54 = arith.mulf %53, %53 : vector<2x256x64xf32>
    %55 = arith.mulf %54, %53 : vector<2x256x64xf32>
    %cst_24 = arith.constant dense<0.000000e+00> : vector<2x256xf32>
    %56 = vector.multi_reduction <add>, %55, %cst_24 [2] : vector<2x256x64xf32> to vector<2x256xf32>
    %cst_25 = arith.constant 6.400000e+01 : f32
    %57 = vector.broadcast %cst_25 : f32 to vector<2x256xf32>
    %58 = arith.divf %56, %57 : vector<2x256xf32>
    %59 = math.log %58 : vector<2x256xf32>
    %cst_26 = arith.constant 0.333333343 : f32
    %60 = vector.broadcast %cst_26 : f32 to vector<2x256xf32>
    %61 = arith.mulf %59, %60 : vector<2x256xf32>
    %62 = math.exp %61 : vector<2x256xf32>
    %c0_27 = arith.constant 0 : index
    %c0_28 = arith.constant 0 : index
    %c0_29 = arith.constant 0 : index
    %63 = vector.load %arg6[%c0_27, %c0_28, %c0_29] : memref<1x2x256xf32, #tpu.memory_space<vmem>>, vector<1x2x256xf32>
    %64 = vector.shape_cast %63 : vector<1x2x256xf32> to vector<2x256xf32>
    %65 = vector.shape_cast %62 : vector<2x256xf32> to vector<1x2x256xf32>
    tpu.vector_store %arg6[%c0_27, %c0_28, %c0_29], %65 {strides = array<i32>} : memref<1x2x256xf32, #tpu.memory_space<vmem>>, vector<1x2x256xf32>,
    return
  }
  func.func @transform_0(%arg0: i32) -> (i32, i32, i32) {
    %c0_i32 = arith.constant 0 : i32
    %c0_i32_0 = arith.constant 0 : i32
    %c0_i32_1 = arith.constant 0 : i32
    return %arg0, %c0_i32, %c0_i32_0 : i32, i32, i32
  }
  func.func @transform_1(%arg0: i32) -> (i32, i32, i32) {
    %c0_i32 = arith.constant 0 : i32
    %c0_i32_0 = arith.constant 0 : i32
    %c0_i32_1 = arith.constant 0 : i32
    %c0_i32_2 = arith.constant 0 : i32
    return %c0_i32, %c0_i32_0, %c0_i32_1 : i32, i32, i32
  }
  func.func @transform_2(%arg0: i32) -> (i32, i32, i32) {
    %c0_i32 = arith.constant 0 : i32
    %c0_i32_0 = arith.constant 0 : i32
    %c0_i32_1 = arith.constant 0 : i32
    %c0_i32_2 = arith.constant 0 : i32
    return %c0_i32, %c0_i32_0, %c0_i32_1 : i32, i32, i32
  }
  func.func @transform_3(%arg0: i32) -> (i32, i32) {
    %c0_i32 = arith.constant 0 : i32
    %c0_i32_0 = arith.constant 0 : i32
    %c0_i32_1 = arith.constant 0 : i32
    return %c0_i32, %c0_i32_0 : i32, i32
  }
  func.func @transform_4(%arg0: i32) -> (i32, i32) {
    %c0_i32 = arith.constant 0 : i32
    %c0_i32_0 = arith.constant 0 : i32
    %c0_i32_1 = arith.constant 0 : i32
    return %c0_i32, %c0_i32_0 : i32, i32
  }
  func.func @transform_5(%arg0: i32) -> (i32, i32, i32) {
    %c0_i32 = arith.constant 0 : i32
    %c0_i32_0 = arith.constant 0 : i32
    %c0_i32_1 = arith.constant 0 : i32
    return %arg0, %c0_i32, %c0_i32_0 : i32, i32, i32
  }
}

</mosaic_0001>

<llo_original>
// kernel: ir_teacher_head.1
$region0: #{ir_teacher_head.1}
  #allocation0 [shape = 'u32[]', space=smem, size = 0x4, offset = 0x4, fixed_abs, tag = 'smem constant byte address 0x4 - core index']
  #allocation1 [shape = 'u32[72,128]{1,0:T(1,128)}', space=vmem, size = 0x9000, scoped, tag = 'internal scratch']
  %s0 = inlined_call_operand.vmem [shape: f32[2,256,64], index: 0, kind: input, shape index: {}]
  %s1 = inlined_call_operand.vmem [shape: f32[1,256,1], index: 1, kind: input, shape index: {}]
  %s2 = inlined_call_operand.vmem [shape: f32[1,256,1], index: 2, kind: input, shape index: {}]
  %s3 = inlined_call_operand.vmem [shape: bf16[128,256], index: 3, kind: input, shape index: {}]
  %s4 = inlined_call_operand.vmem [shape: bf16[256,128], index: 4, kind: input, shape index: {}]
  %s5 = inlined_call_operand.vmem [shape: f32[1,2,256], index: 5, kind: output, shape index: {}]
  %s6 = sld [smem:[#allocation0]]
  $region30: #{ir_teacher_head.1} parent=0
    _
  %s8 = ssub.s32 1, %s6
  %s9 = scalar_select 0, %s8, %s6
  // Predicated region
  $region2: #{ir_teacher_head.1} parent=0 // pred_check
    _
  $region3: #{ir_teacher_head.1} parent=0 // pred_check_branch
    %11 = sbr.rel (0) target = $region5
  $region4: #{ir_teacher_head.1} parent=0 // pred_region
    _
  $region5: #{ir_teacher_head.1} parent=0 // pred_fallthru
    _
  // Predicated region
  $region6: #{ir_teacher_head.1} parent=0 // pred_check
    _
  $region7: #{ir_teacher_head.1} parent=0 // pred_check_branch
    %13 = sbr.rel (0) target = $region9
  $region8: #{ir_teacher_head.1} parent=0 // pred_region
    _
  $region9: #{ir_teacher_head.1} parent=0 // pred_fallthru
    _
  // Predicated region
  $region10: #{ir_teacher_head.1} parent=0 // pred_check
    _
  $region11: #{ir_teacher_head.1} parent=0 // pred_check_branch
    %15 = sbr.rel (0) target = $region13
  $region12: #{ir_teacher_head.1} parent=0 // pred_region
    _
  $region13: #{ir_teacher_head.1} parent=0 // pred_fallthru
    _
  // Predicated region
  $region14: #{ir_teacher_head.1} parent=0 // pred_check
    _
  $region15: #{ir_teacher_head.1} parent=0 // pred_check_branch
    %17 = sbr.rel (0) target = $region17
  $region16: #{ir_teacher_head.1} parent=0 // pred_region
    _
  $region17: #{ir_teacher_head.1} parent=0 // pred_fallthru
    _
  // Predicated region
  $region18: #{ir_teacher_head.1} parent=0 // pred_check
    _
  $region19: #{ir_teacher_head.1} parent=0 // pred_check_branch
    %19 = sbr.rel (0) target = $region21
  $region20: #{ir_teacher_head.1} parent=0 // pred_region
    _
  $region21: #{ir_teacher_head.1} parent=0 // pred_fallthru
    _
  %v20 = vld [vmem:[%s0] sm:$0xff]
  %v21 = vld [vmem:[%s0 + $0x8] sm:$0xff]
  %v22 = vld [vmem:[%s0 + $0x10] sm:$0xff]
  %v23 = vld [vmem:[%s0 + $0x18] sm:$0xff]
  %v24 = vld [vmem:[%s0 + $0x20] sm:$0xff]
  %v25 = vld [vmem:[%s0 + $0x28] sm:$0xff]
  %v26 = vld [vmem:[%s0 + $0x30] sm:$0xff]
  %v27 = vld [vmem:[%s0 + $0x38] sm:$0xff]
  %v28 = vld [vmem:[%s0 + $0x40] sm:$0xff]
  %v29 = vld [vmem:[%s0 + $0x48] sm:$0xff]
  %v30 = vld [vmem:[%s0 + $0x50] sm:$0xff]
  %v31 = vld [vmem:[%s0 + $0x58] sm:$0xff]
  %v32 = vld [vmem:[%s0 + $0x60] sm:$0xff]
  %v33 = vld [vmem:[%s0 + $0x68] sm:$0xff]
  %v34 = vld [vmem:[%s0 + $0x70] sm:$0xff]
  %v35 = vld [vmem:[%s0 + $0x78] sm:$0xff]
  %v36 = vld [vmem:[%s0 + $0x80] sm:$0xff]
  %v37 = vld [vmem:[%s0 + $0x88] sm:$0xff]
  %v38 = vld [vmem:[%s0 + $0x90] sm:$0xff]
  %v39 = vld [vmem:[%s0 + $0x98] sm:$0xff]
  %v40 = vld [vmem:[%s0 + $0xa0] sm:$0xff]
  %v41 = vld [vmem:[%s0 + $0xa8] sm:$0xff]
  %v42 = vld [vmem:[%s0 + $0xb0] sm:$0xff]
  %v43 = vld [vmem:[%s0 + $0xb8] sm:$0xff]
  %v44 = vld [vmem:[%s0 + $0xc0] sm:$0xff]
  %v45 = vld [vmem:[%s0 + $0xc8] sm:$0xff]
  %v46 = vld [vmem:[%s0 + $0xd0] sm:$0xff]
  %v47 = vld [vmem:[%s0 + $0xd8] sm:$0xff]
  %v48 = vld [vmem:[%s0 + $0xe0] sm:$0xff]
  %v49 = vld [vmem:[%s0 + $0xe8] sm:$0xff]
  %v50 = vld [vmem:[%s0 + $0xf0] sm:$0xff]
  %v51 = vld [vmem:[%s0 + $0xf8] sm:$0xff]
  %v52 = vld [vmem:[%s0 + $0x100] sm:$0xff]
  %v53 = vld [vmem:[%s0 + $0x108] sm:$0xff]
  %v54 = vld [vmem:[%s0 + $0x110] sm:$0xff]
  %v55 = vld [vmem:[%s0 + $0x118] sm:$0xff]
  %v56 = vld [vmem:[%s0 + $0x120] sm:$0xff]
  %v57 = vld [vmem:[%s0 + $0x128] sm:$0xff]
  %v58 = vld [vmem:[%s0 + $0x130] sm:$0xff]
  %v59 = vld [vmem:[%s0 + $0x138] sm:$0xff]
  %v60 = vld [vmem:[%s0 + $0x140] sm:$0xff]
  %v61 = vld [vmem:[%s0 + $0x148] sm:$0xff]
  %v62 = vld [vmem:[%s0 + $0x150] sm:$0xff]
  %v63 = vld [vmem:[%s0 + $0x158] sm:$0xff]
  %v64 = vld [vmem:[%s0 + $0x160] sm:$0xff]
  %v65 = vld [vmem:[%s0 + $0x168] sm:$0xff]
  %v66 = vld [vmem:[%s0 + $0x170] sm:$0xff]
  %v67 = vld [vmem:[%s0 + $0x178] sm:$0xff]
  %v68 = vld [vmem:[%s0 + $0x180] sm:$0xff]
  %v69 = vld [vmem:[%s0 + $0x188] sm:$0xff]
  %v70 = vld [vmem:[%s0 + $0x190] sm:$0xff]
  %v71 = vld [vmem:[%s0 + $0x198] sm:$0xff]
  %v72 = vld [vmem:[%s0 + $0x1a0] sm:$0xff]
  %v73 = vld [vmem:[%s0 + $0x1a8] sm:$0xff]
  %v74 = vld [vmem:[%s0 + $0x1b0] sm:$0xff]
  %v75 = vld [vmem:[%s0 + $0x1b8] sm:$0xff]
  %v76 = vld [vmem:[%s0 + $0x1c0] sm:$0xff]
  %v77 = vld [vmem:[%s0 + $0x1c8] sm:$0xff]
  %v78 = vld [vmem:[%s0 + $0x1d0] sm:$0xff]
  %v79 = vld [vmem:[%s0 + $0x1d8] sm:$0xff]
  %v80 = vld [vmem:[%s0 + $0x1e0] sm:$0xff]
  %v81 = vld [vmem:[%s0 + $0x1e8] sm:$0xff]
  %v82 = vld [vmem:[%s0 + $0x1f0] sm:$0xff]
  %v83 = vld [vmem:[%s0 + $0x1f8] sm:$0xff]
  %vm84 = vcmask 523264
  %v85 = vsel %vm84, %v20, 0.0
  %86 = vadd.xlane.f32.xlu0 %v85
  %v87 = vpop.xlane.xlu0 %86
  %v88 = vsel %vm84, %v21, 0.0
  %89 = vadd.xlane.f32.xlu0 %v88
  %v90 = vpop.xlane.xlu0 %89
  %v91 = vsel %vm84, %v22, 0.0
  %92 = vadd.xlane.f32.xlu0 %v91
  %v93 = vpop.xlane.xlu0 %92
  %v94 = vsel %vm84, %v23, 0.0
  %95 = vadd.xlane.f32.xlu0 %v94
  %v96 = vpop.xlane.xlu0 %95
  %v97 = vsel %vm84, %v24, 0.0
  %98 = vadd.xlane.f32.xlu0 %v97
  %v99 = vpop.xlane.xlu0 %98
  %v100 = vsel %vm84, %v25, 0.0
  %101 = vadd.xlane.f32.xlu0 %v100
  %v102 = vpop.xlane.xlu0 %101
  %v103 = vsel %vm84, %v26, 0.0
  %104 = vadd.xlane.f32.xlu0 %v103
  %v105 = vpop.xlane.xlu0 %104
  %v106 = vsel %vm84, %v27, 0.0
  %107 = vadd.xlane.f32.xlu0 %v106
  %v108 = vpop.xlane.xlu0 %107
  %v109 = vsel %vm84, %v28, 0.0
  %110 = vadd.xlane.f32.xlu0 %v109
  %v111 = vpop.xlane.xlu0 %110
  %v112 = vsel %vm84, %v29, 0.0
  %113 = vadd.xlane.f32.xlu0 %v112
  %v114 = vpop.xlane.xlu0 %113
  %v115 = vsel %vm84, %v30, 0.0
  %116 = vadd.xlane.f32.xlu0 %v115
  %v117 = vpop.xlane.xlu0 %116
  %v118 = vsel %vm84, %v31, 0.0
  %119 = vadd.xlane.f32.xlu0 %v118
  %v120 = vpop.xlane.xlu0 %119
  %v121 = vsel %vm84, %v32, 0.0
  %122 = vadd.xlane.f32.xlu0 %v121
  %v123 = vpop.xlane.xlu0 %122
  %v124 = vsel %vm84, %v33, 0.0
  %125 = vadd.xlane.f32.xlu0 %v124
  %v126 = vpop.xlane.xlu0 %125
  %v127 = vsel %vm84, %v34, 0.0
  %128 = vadd.xlane.f32.xlu0 %v127
  %v129 = vpop.xlane.xlu0 %128
  %v130 = vsel %vm84, %v35, 0.0
  %131 = vadd.xlane.f32.xlu0 %v130
  %v132 = vpop.xlane.xlu0 %131
  %v133 = vsel %vm84, %v36, 0.0
  %134 = vadd.xlane.f32.xlu0 %v133
  %v135 = vpop.xlane.xlu0 %134
  %v136 = vsel %vm84, %v37, 0.0
  %137 = vadd.xlane.f32.xlu0 %v136
  %v138 = vpop.xlane.xlu0 %137
  %v139 = vsel %vm84, %v38, 0.0
  %140 = vadd.xlane.f32.xlu0 %v139
  %v141 = vpop.xlane.xlu0 %140
  %v142 = vsel %vm84, %v39, 0.0
  %143 = vadd.xlane.f32.xlu0 %v142
  %v144 = vpop.xlane.xlu0 %143
  %v145 = vsel %vm84, %v40, 0.0
  %146 = vadd.xlane.f32.xlu0 %v145
  %v147 = vpop.xlane.xlu0 %146
  %v148 = vsel %vm84, %v41, 0.0
  %149 = vadd.xlane.f32.xlu0 %v148
  %v150 = vpop.xlane.xlu0 %149
  %v151 = vsel %vm84, %v42, 0.0
  %152 = vadd.xlane.f32.xlu0 %v151
  %v153 = vpop.xlane.xlu0 %152
  %v154 = vsel %vm84, %v43, 0.0
  %155 = vadd.xlane.f32.xlu0 %v154
  %v156 = vpop.xlane.xlu0 %155
  %v157 = vsel %vm84, %v44, 0.0
  %158 = vadd.xlane.f32.xlu0 %v157
  %v159 = vpop.xlane.xlu0 %158
  %v160 = vsel %vm84, %v45, 0.0
  %161 = vadd.xlane.f32.xlu0 %v160
  %v162 = vpop.xlane.xlu0 %161
  %v163 = vsel %vm84, %v46, 0.0
  %164 = vadd.xlane.f32.xlu0 %v163
  %v165 = vpop.xlane.xlu0 %164
  %v166 = vsel %vm84, %v47, 0.0
  %167 = vadd.xlane.f32.xlu0 %v166
  %v168 = vpop.xlane.xlu0 %167
  %v169 = vsel %vm84, %v48, 0.0
  %170 = vadd.xlane.f32.xlu0 %v169
  %v171 = vpop.xlane.xlu0 %170
  %v172 = vsel %vm84, %v49, 0.0
  %173 = vadd.xlane.f32.xlu0 %v172
  %v174 = vpop.xlane.xlu0 %173
  %v175 = vsel %vm84, %v50, 0.0
  %176 = vadd.xlane.f32.xlu0 %v175
  %v177 = vpop.xlane.xlu0 %176
  %v178 = vsel %vm84, %v51, 0.0
  %179 = vadd.xlane.f32.xlu0 %v178
  %v180 = vpop.xlane.xlu0 %179
  %v181 = vsel %vm84, %v52, 0.0
  %182 = vadd.xlane.f32.xlu0 %v181
  %v183 = vpop.xlane.xlu0 %182
  %v184 = vsel %vm84, %v53, 0.0
  %185 = vadd.xlane.f32.xlu0 %v184
  %v186 = vpop.xlane.xlu0 %185
  %v187 = vsel %vm84, %v54, 0.0
  %188 = vadd.xlane.f32.xlu0 %v187
  %v189 = vpop.xlane.xlu0 %188
  %v190 = vsel %vm84, %v55, 0.0
  %191 = vadd.xlane.f32.xlu0 %v190
  %v192 = vpop.xlane.xlu0 %191
  %v193 = vsel %vm84, %v56, 0.0
  %194 = vadd.xlane.f32.xlu0 %v193
  %v195 = vpop.xlane.xlu0 %194
  %v196 = vsel %vm84, %v57, 0.0
  %197 = vadd.xlane.f32.xlu0 %v196
  %v198 = vpop.xlane.xlu0 %197
  %v199 = vsel %vm84, %v58, 0.0
  %200 = vadd.xlane.f32.xlu0 %v199
  %v201 = vpop.xlane.xlu0 %200
  %v202 = vsel %vm84, %v59, 0.0
  %203 = vadd.xlane.f32.xlu0 %v202
  %v204 = vpop.xlane.xlu0 %203
  %v205 = vsel %vm84, %v60, 0.0
  %206 = vadd.xlane.f32.xlu0 %v205
  %v207 = vpop.xlane.xlu0 %206
  %v208 = vsel %vm84, %v61, 0.0
  %209 = vadd.xlane.f32.xlu0 %v208
  %v210 = vpop.xlane.xlu0 %209
  %v211 = vsel %vm84, %v62, 0.0
  %212 = vadd.xlane.f32.xlu0 %v211
  %v213 = vpop.xlane.xlu0 %212
  %v214 = vsel %vm84, %v63, 0.0
  %215 = vadd.xlane.f32.xlu0 %v214
  %v216 = vpop.xlane.xlu0 %215
  %v217 = vsel %vm84, %v64, 0.0
  %218 = vadd.xlane.f32.xlu0 %v217
  %v219 = vpop.xlane.xlu0 %218
  %v220 = vsel %vm84, %v65, 0.0
  %221 = vadd.xlane.f32.xlu0 %v220
  %v222 = vpop.xlane.xlu0 %221
  %v223 = vsel %vm84, %v66, 0.0
  %224 = vadd.xlane.f32.xlu0 %v223
  %v225 = vpop.xlane.xlu0 %224
  %v226 = vsel %vm84, %v67, 0.0
  %227 = vadd.xlane.f32.xlu0 %v226
  %v228 = vpop.xlane.xlu0 %227
  %v229 = vsel %vm84, %v68, 0.0
  %230 = vadd.xlane.f32.xlu0 %v229
  %v231 = vpop.xlane.xlu0 %230
  %v232 = vsel %vm84, %v69, 0.0
  %233 = vadd.xlane.f32.xlu0 %v232
  %v234 = vpop.xlane.xlu0 %233
  %v235 = vsel %vm84, %v70, 0.0
  %236 = vadd.xlane.f32.xlu0 %v235
  %v237 = vpop.xlane.xlu0 %236
  %v238 = vsel %vm84, %v71, 0.0
  %239 = vadd.xlane.f32.xlu0 %v238
  %v240 = vpop.xlane.xlu0 %239
  %v241 = vsel %vm84, %v72, 0.0
  %242 = vadd.xlane.f32.xlu0 %v241
  %v243 = vpop.xlane.xlu0 %242
  %v244 = vsel %vm84, %v73, 0.0
  %245 = vadd.xlane.f32.xlu0 %v244
  %v246 = vpop.xlane.xlu0 %245
  %v247 = vsel %vm84, %v74, 0.0
  %248 = vadd.xlane.f32.xlu0 %v247
  %v249 = vpop.xlane.xlu0 %248
  %v250 = vsel %vm84, %v75, 0.0
  %251 = vadd.xlane.f32.xlu0 %v250
  %v252 = vpop.xlane.xlu0 %251
  %v253 = vsel %vm84, %v76, 0.0
  %254 = vadd.xlane.f32.xlu0 %v253
  %v255 = vpop.xlane.xlu0 %254
  %v256 = vsel %vm84, %v77, 0.0
  %257 = vadd.xlane.f32.xlu0 %v256
  %v258 = vpop.xlane.xlu0 %257
  %v259 = vsel %vm84, %v78, 0.0
  %260 = vadd.xlane.f32.xlu0 %v259
  %v261 = vpop.xlane.xlu0 %260
  %v262 = vsel %vm84, %v79, 0.0
  %263 = vadd.xlane.f32.xlu0 %v262
  %v264 = vpop.xlane.xlu0 %263
  %v265 = vsel %vm84, %v80, 0.0
  %266 = vadd.xlane.f32.xlu0 %v265
  %v267 = vpop.xlane.xlu0 %266
  %v268 = vsel %vm84, %v81, 0.0
  %269 = vadd.xlane.f32.xlu0 %v268
  %v270 = vpop.xlane.xlu0 %269
  %v271 = vsel %vm84, %v82, 0.0
  %272 = vadd.xlane.f32.xlu0 %v271
  %v273 = vpop.xlane.xlu0 %272
  %v274 = vsel %vm84, %v83, 0.0
  %275 = vadd.xlane.f32.xlu0 %v274
  %v276 = vpop.xlane.xlu0 %275
  %v277 = vrcp.pop 64.0
  %v278 = vmul.f32 64.0, %v277
  %v279 = vsub.f32 1.0, %v278
  %v280 = vmul.f32 %v277, %v279
  %v281 = vadd.f32 %v277, %v280
  %vm282 = vweird.f32 %v277
  %v283 = vsel %vm282, %v277, %v281
  %v284 = vmul.f32 %v87, %v283
  %v285 = vmul.f32 %v90, %v283
  %v286 = vmul.f32 %v93, %v283
  %v287 = vmul.f32 %v96, %v283
  %v288 = vmul.f32 %v99, %v283
  %v289 = vmul.f32 %v102, %v283
  %v290 = vmul.f32 %v105, %v283
  %v291 = vmul.f32 %v108, %v283
  %v292 = vmul.f32 %v111, %v283
  %v293 = vmul.f32 %v114, %v283
  %v294 = vmul.f32 %v117, %v283
  %v295 = vmul.f32 %v120, %v283
  %v296 = vmul.f32 %v123, %v283
  %v297 = vmul.f32 %v126, %v283
  %v298 = vmul.f32 %v129, %v283
  %v299 = vmul.f32 %v132, %v283
  %v300 = vmul.f32 %v135, %v283
  %v301 = vmul.f32 %v138, %v283
  %v302 = vmul.f32 %v141, %v283
  %v303 = vmul.f32 %v144, %v283
  %v304 = vmul.f32 %v147, %v283
  %v305 = vmul.f32 %v150, %v283
  %v306 = vmul.f32 %v153, %v283
  %v307 = vmul.f32 %v156, %v283
  %v308 = vmul.f32 %v159, %v283
  %v309 = vmul.f32 %v162, %v283
  %v310 = vmul.f32 %v165, %v283
  %v311 = vmul.f32 %v168, %v283
  %v312 = vmul.f32 %v171, %v283
  %v313 = vmul.f32 %v174, %v283
  %v314 = vmul.f32 %v177, %v283
  %v315 = vmul.f32 %v180, %v283
  %v316 = vmul.f32 %v183, %v283
  %v317 = vmul.f32 %v186, %v283
  %v318 = vmul.f32 %v189, %v283
  %v319 = vmul.f32 %v192, %v283
  %v320 = vmul.f32 %v195, %v283
  %v321 = vmul.f32 %v198, %v283
  %v322 = vmul.f32 %v201, %v283
  %v323 = vmul.f32 %v204, %v283
  %v324 = vmul.f32 %v207, %v283
  %v325 = vmul.f32 %v210, %v283
  %v326 = vmul.f32 %v213, %v283
  %v327 = vmul.f32 %v216, %v283
  %v328 = vmul.f32 %v219, %v283
  %v329 = vmul.f32 %v222, %v283
  %v330 = vmul.f32 %v225, %v283
  %v331 = vmul.f32 %v228, %v283
  %v332 = vmul.f32 %v231, %v283
  %v333 = vmul.f32 %v234, %v283
  %v334 = vmul.f32 %v237, %v283
  %v335 = vmul.f32 %v240, %v283
  %v336 = vmul.f32 %v243, %v283
  %v337 = vmul.f32 %v246, %v283
  %v338 = vmul.f32 %v249, %v283
  %v339 = vmul.f32 %v252, %v283
  %v340 = vmul.f32 %v255, %v283
  %v341 = vmul.f32 %v258, %v283
  %v342 = vmul.f32 %v261, %v283
  %v343 = vmul.f32 %v264, %v283
  %v344 = vmul.f32 %v267, %v283
  %v345 = vmul.f32 %v270, %v283
  %v346 = vmul.f32 %v273, %v283
  %v347 = vmul.f32 %v276, %v283
  %v348 = vsub.f32 %v20, %v284
  %v349 = vsub.f32 %v21, %v285
  %v350 = vsub.f32 %v22, %v286
  %v351 = vsub.f32 %v23, %v287
  %v352 = vsub.f32 %v24, %v288
  %v353 = vsub.f32 %v25, %v289
  %v354 = vsub.f32 %v26, %v290
  %v355 = vsub.f32 %v27, %v291
  %v356 = vsub.f32 %v28, %v292
  %v357 = vsub.f32 %v29, %v293
  %v358 = vsub.f32 %v30, %v294
  %v359 = vsub.f32 %v31, %v295
  %v360 = vsub.f32 %v32, %v296
  %v361 = vsub.f32 %v33, %v297
  %v362 = vsub.f32 %v34, %v298
  %v363 = vsub.f32 %v35, %v299
  %v364 = vsub.f32 %v36, %v300
  %v365 = vsub.f32 %v37, %v301
  %v366 = vsub.f32 %v38, %v302
  %v367 = vsub.f32 %v39, %v303
  %v368 = vsub.f32 %v40, %v304
  %v369 = vsub.f32 %v41, %v305
  %v370 = vsub.f32 %v42, %v306
  %v371 = vsub.f32 %v43, %v307
  %v372 = vsub.f32 %v44, %v308
  %v373 = vsub.f32 %v45, %v309
  %v374 = vsub.f32 %v46, %v310
  %v375 = vsub.f32 %v47, %v311
  %v376 = vsub.f32 %v48, %v312
  %v377 = vsub.f32 %v49, %v313
  %v378 = vsub.f32 %v50, %v314
  %v379 = vsub.f32 %v51, %v315
  %v380 = vsub.f32 %v52, %v316
  %v381 = vsub.f32 %v53, %v317
  %v382 = vsub.f32 %v54, %v318
  %v383 = vsub.f32 %v55, %v319
  %v384 = vsub.f32 %v56, %v320
  %v385 = vsub.f32 %v57, %v321
  %v386 = vsub.f32 %v58, %v322
  %v387 = vsub.f32 %v59, %v323
  %v388 = vsub.f32 %v60, %v324
  %v389 = vsub.f32 %v61, %v325
  %v390 = vsub.f32 %v62, %v326
  %v391 = vsub.f32 %v63, %v327
  %v392 = vsub.f32 %v64, %v328
  %v393 = vsub.f32 %v65, %v329
  %v394 = vsub.f32 %v66, %v330
  %v395 = vsub.f32 %v67, %v331
  %v396 = vsub.f32 %v68, %v332
  %v397 = vsub.f32 %v69, %v333
  %v398 = vsub.f32 %v70, %v334
  %v399 = vsub.f32 %v71, %v335
  %v400 = vsub.f32 %v72, %v336
  %v401 = vsub.f32 %v73, %v337
  %v402 = vsub.f32 %v74, %v338
  %v403 = vsub.f32 %v75, %v339
  %v404 = vsub.f32 %v76, %v340
  %v405 = vsub.f32 %v77, %v341
  %v406 = vsub.f32 %v78, %v342
  %v407 = vsub.f32 %v79, %v343
  %v408 = vsub.f32 %v80, %v344
  %v409 = vsub.f32 %v81, %v345
  %v410 = vsub.f32 %v82, %v346
  %v411 = vsub.f32 %v83, %v347
  %v412 = vmul.f32 %v348, %v348
  %v413 = vmul.f32 %v349, %v349
  %v414 = vmul.f32 %v350, %v350
  %v415 = vmul.f32 %v351, %v351
  %v416 = vmul.f32 %v352, %v352
  %v417 = vmul.f32 %v353, %v353
  %v418 = vmul.f32 %v354, %v354
  %v419 = vmul.f32 %v355, %v355
  %v420 = vmul.f32 %v356, %v356
  %v421 = vmul.f32 %v357, %v357
  %v422 = vmul.f32 %v358, %v358
  %v423 = vmul.f32 %v359, %v359
  %v424 = vmul.f32 %v360, %v360
  %v425 = vmul.f32 %v361, %v361
  %v426 = vmul.f32 %v362, %v362
  %v427 = vmul.f32 %v363, %v363
  %v428 = vmul.f32 %v364, %v364
  %v429 = vmul.f32 %v365, %v365
  %v430 = vmul.f32 %v366, %v366
  %v431 = vmul.f32 %v367, %v367
  %v432 = vmul.f32 %v368, %v368
  %v433 = vmul.f32 %v369, %v369
  %v434 = vmul.f32 %v370, %v370
  %v435 = vmul.f32 %v371, %v371
  %v436 = vmul.f32 %v372, %v372
  %v437 = vmul.f32 %v373, %v373
  %v438 = vmul.f32 %v374, %v374
  %v439 = vmul.f32 %v375, %v375
  %v440 = vmul.f32 %v376, %v376
  %v441 = vmul.f32 %v377, %v377
  %v442 = vmul.f32 %v378, %v378
  %v443 = vmul.f32 %v379, %v379
  %v444 = vmul.f32 %v380, %v380
  %v445 = vmul.f32 %v381, %v381
  %v446 = vmul.f32 %v382, %v382
  %v447 = vmul.f32 %v383, %v383
  %v448 = vmul.f32 %v384, %v384
  %v449 = vmul.f32 %v385, %v385
  %v450 = vmul.f32 %v386, %v386
  %v451 = vmul.f32 %v387, %v387
  %v452 = vmul.f32 %v388, %v388
  %v453 = vmul.f32 %v389, %v389
  %v454 = vmul.f32 %v390, %v390
  %v455 = vmul.f32 %v391, %v391
  %v456 = vmul.f32 %v392, %v392
  %v457 = vmul.f32 %v393, %v393
  %v458 = vmul.f32 %v394, %v394
  %v459 = vmul.f32 %v395, %v395
  %v460 = vmul.f32 %v396, %v396
  %v461 = vmul.f32 %v397, %v397
  %v462 = vmul.f32 %v398, %v398
  %v463 = vmul.f32 %v399, %v399
  %v464 = vmul.f32 %v400, %v400
  %v465 = vmul.f32 %v401, %v401
  %v466 = vmul.f32 %v402, %v402
  %v467 = vmul.f32 %v403, %v403
  %v468 = vmul.f32 %v404, %v404
  %v469 = vmul.f32 %v405, %v405
  %v470 = vmul.f32 %v406, %v406
  %v471 = vmul.f32 %v407, %v407
  %v472 = vmul.f32 %v408, %v408
  %v473 = vmul.f32 %v409, %v409
  %v474 = vmul.f32 %v410, %v410
  %v475 = vmul.f32 %v411, %v411
  %v476 = vsel %vm84, %v412, 0.0
  %477 = vadd.xlane.f32.xlu0 %v476
  %v478 = vpop.xlane.xlu0 %477
  %v479 = vsel %vm84, %v413, 0.0
  %480 = vadd.xlane.f32.xlu0 %v479
  %v481 = vpop.xlane.xlu0 %480
  %v482 = vsel %vm84, %v414, 0.0
  %483 = vadd.xlane.f32.xlu0 %v482
  %v484 = vpop.xlane.xlu0 %483
  %v485 = vsel %vm84, %v415, 0.0
  %486 = vadd.xlane.f32.xlu0 %v485
  %v487 = vpop.xlane.xlu0 %486
  %v488 = vsel %vm84, %v416, 0.0
  %489 = vadd.xlane.f32.xlu0 %v488
  %v490 = vpop.xlane.xlu0 %489
  %v491 = vsel %vm84, %v417, 0.0
  %492 = vadd.xlane.f32.xlu0 %v491
  %v493 = vpop.xlane.xlu0 %492
  %v494 = vsel %vm84, %v418, 0.0
  %495 = vadd.xlane.f32.xlu0 %v494
  %v496 = vpop.xlane.xlu0 %495
  %v497 = vsel %vm84, %v419, 0.0
  %498 = vadd.xlane.f32.xlu0 %v497
  %v499 = vpop.xlane.xlu0 %498
  %v500 = vsel %vm84, %v420, 0.0
  %501 = vadd.xlane.f32.xlu0 %v500
  %v502 = vpop.xlane.xlu0 %501
  %v503 = vsel %vm84, %v421, 0.0
  %504 = vadd.xlane.f32.xlu0 %v503
  %v505 = vpop.xlane.xlu0 %504
  %v506 = vsel %vm84, %v422, 0.0
  %507 = vadd.xlane.f32.xlu0 %v506
  %v508 = vpop.xlane.xlu0 %507
  %v509 = vsel %vm84, %v423, 0.0
  %510 = vadd.xlane.f32.xlu0 %v509
  %v511 = vpop.xlane.xlu0 %510
  %v512 = vsel %vm84, %v424, 0.0
  %513 = vadd.xlane.f32.xlu0 %v512
  %v514 = vpop.xlane.xlu0 %513
  %v515 = vsel %vm84, %v425, 0.0
  %516 = vadd.xlane.f32.xlu0 %v515
  %v517 = vpop.xlane.xlu0 %516
  %v518 = vsel %vm84, %v426, 0.0
  %519 = vadd.xlane.f32.xlu0 %v518
  %v520 = vpop.xlane.xlu0 %519
  %v521 = vsel %vm84, %v427, 0.0
  %522 = vadd.xlane.f32.xlu0 %v521
  %v523 = vpop.xlane.xlu0 %522
  %v524 = vsel %vm84, %v428, 0.0
  %525 = vadd.xlane.f32.xlu0 %v524
  %v526 = vpop.xlane.xlu0 %525
  %v527 = vsel %vm84, %v429, 0.0
  %528 = vadd.xlane.f32.xlu0 %v527
  %v529 = vpop.xlane.xlu0 %528
  %v530 = vsel %vm84, %v430, 0.0
  %531 = vadd.xlane.f32.xlu0 %v530
  %v532 = vpop.xlane.xlu0 %531
  %v533 = vsel %vm84, %v431, 0.0
  %534 = vadd.xlane.f32.xlu0 %v533
  %v535 = vpop.xlane.xlu0 %534
  %v536 = vsel %vm84, %v432, 0.0
  %537 = vadd.xlane.f32.xlu0 %v536
  %v538 = vpop.xlane.xlu0 %537
  %v539 = vsel %vm84, %v433, 0.0
  %540 = vadd.xlane.f32.xlu0 %v539
  %v541 = vpop.xlane.xlu0 %540
  %v542 = vsel %vm84, %v434, 0.0
  %543 = vadd.xlane.f32.xlu0 %v542
  %v544 = vpop.xlane.xlu0 %543
  %v545 = vsel %vm84, %v435, 0.0
  %546 = vadd.xlane.f32.xlu0 %v545
  %v547 = vpop.xlane.xlu0 %546
  %v548 = vsel %vm84, %v436, 0.0
  %549 = vadd.xlane.f32.xlu0 %v548
  %v550 = vpop.xlane.xlu0 %549
  %v551 = vsel %vm84, %v437, 0.0
  %552 = vadd.xlane.f32.xlu0 %v551
  %v553 = vpop.xlane.xlu0 %552
  %v554 = vsel %vm84, %v438, 0.0
  %555 = vadd.xlane.f32.xlu0 %v554
  %v556 = vpop.xlane.xlu0 %555
  %v557 = vsel %vm84, %v439, 0.0
  %558 = vadd.xlane.f32.xlu0 %v557
  %v559 = vpop.xlane.xlu0 %558
  %v560 = vsel %vm84, %v440, 0.0
  %561 = vadd.xlane.f32.xlu0 %v560
  %v562 = vpop.xlane.xlu0 %561
  %v563 = vsel %vm84, %v441, 0.0
  %564 = vadd.xlane.f32.xlu0 %v563
  %v565 = vpop.xlane.xlu0 %564
  %v566 = vsel %vm84, %v442, 0.0
  %567 = vadd.xlane.f32.xlu0 %v566
  %v568 = vpop.xlane.xlu0 %567
  %v569 = vsel %vm84, %v443, 0.0
  %570 = vadd.xlane.f32.xlu0 %v569
  %v571 = vpop.xlane.xlu0 %570
  %v572 = vsel %vm84, %v444, 0.0
  %573 = vadd.xlane.f32.xlu0 %v572
  %v574 = vpop.xlane.xlu0 %573
  %v575 = vsel %vm84, %v445, 0.0
  %576 = vadd.xlane.f32.xlu0 %v575
  %v577 = vpop.xlane.xlu0 %576
  %v578 = vsel %vm84, %v446, 0.0
  %579 = vadd.xlane.f32.xlu0 %v578
  %v580 = vpop.xlane.xlu0 %579
  %v581 = vsel %vm84, %v447, 0.0
  %582 = vadd.xlane.f32.xlu0 %v581
  %v583 = vpop.xlane.xlu0 %582
  %v584 = vsel %vm84, %v448, 0.0
  %585 = vadd.xlane.f32.xlu0 %v584
  %v586 = vpop.xlane.xlu0 %585
  %v587 = vsel %vm84, %v449, 0.0
  %588 = vadd.xlane.f32.xlu0 %v587
  %v589 = vpop.xlane.xlu0 %588
  %v590 = vsel %vm84, %v450, 0.0
  %591 = vadd.xlane.f32.xlu0 %v590
  %v592 = vpop.xlane.xlu0 %591
  %v593 = vsel %vm84, %v451, 0.0
  %594 = vadd.xlane.f32.xlu0 %v593
  %v595 = vpop.xlane.xlu0 %594
  %v596 = vsel %vm84, %v452, 0.0
  %597 = vadd.xlane.f32.xlu0 %v596
  %v598 = vpop.xlane.xlu0 %597
  %v599 = vsel %vm84, %v453, 0.0
  %600 = vadd.xlane.f32.xlu0 %v599
  %v601 = vpop.xlane.xlu0 %600
  %v602 = vsel %vm84, %v454, 0.0
  %603 = vadd.xlane.f32.xlu0 %v602
  %v604 = vpop.xlane.xlu0 %603
  %v605 = vsel %vm84, %v455, 0.0
  %606 = vadd.xlane.f32.xlu0 %v605
  %v607 = vpop.xlane.xlu0 %606
  %v608 = vsel %vm84, %v456, 0.0
  %609 = vadd.xlane.f32.xlu0 %v608
  %v610 = vpop.xlane.xlu0 %609
  %v611 = vsel %vm84, %v457, 0.0
  %612 = vadd.xlane.f32.xlu0 %v611
  %v613 = vpop.xlane.xlu0 %612
  %v614 = vsel %vm84, %v458, 0.0
  %615 = vadd.xlane.f32.xlu0 %v614
  %v616 = vpop.xlane.xlu0 %615
  %v617 = vsel %vm84, %v459, 0.0
  %618 = vadd.xlane.f32.xlu0 %v617
  %v619 = vpop.xlane.xlu0 %618
  %v620 = vsel %vm84, %v460, 0.0
  %621 = vadd.xlane.f32.xlu0 %v620
  %v622 = vpop.xlane.xlu0 %621
  %v623 = vsel %vm84, %v461, 0.0
  %624 = vadd.xlane.f32.xlu0 %v623
  %v625 = vpop.xlane.xlu0 %624
  %v626 = vsel %vm84, %v462, 0.0
  %627 = vadd.xlane.f32.xlu0 %v626
  %v628 = vpop.xlane.xlu0 %627
  %v629 = vsel %vm84, %v463, 0.0
  %630 = vadd.xlane.f32.xlu0 %v629
  %v631 = vpop.xlane.xlu0 %630
  %v632 = vsel %vm84, %v464, 0.0
  %633 = vadd.xlane.f32.xlu0 %v632
  %v634 = vpop.xlane.xlu0 %633
  %v635 = vsel %vm84, %v465, 0.0
  %636 = vadd.xlane.f32.xlu0 %v635
  %v637 = vpop.xlane.xlu0 %636
  %v638 = vsel %vm84, %v466, 0.0
  %639 = vadd.xlane.f32.xlu0 %v638
  %v640 = vpop.xlane.xlu0 %639
  %v641 = vsel %vm84, %v467, 0.0
  %642 = vadd.xlane.f32.xlu0 %v641
  %v643 = vpop.xlane.xlu0 %642
  %v644 = vsel %vm84, %v468, 0.0
  %645 = vadd.xlane.f32.xlu0 %v644
  %v646 = vpop.xlane.xlu0 %645
  %v647 = vsel %vm84, %v469, 0.0
  %648 = vadd.xlane.f32.xlu0 %v647
  %v649 = vpop.xlane.xlu0 %648
  %v650 = vsel %vm84, %v470, 0.0
  %651 = vadd.xlane.f32.xlu0 %v650
  %v652 = vpop.xlane.xlu0 %651
  %v653 = vsel %vm84, %v471, 0.0
  %654 = vadd.xlane.f32.xlu0 %v653
  %v655 = vpop.xlane.xlu0 %654
  %v656 = vsel %vm84, %v472, 0.0
  %657 = vadd.xlane.f32.xlu0 %v656
  %v658 = vpop.xlane.xlu0 %657
  %v659 = vsel %vm84, %v473, 0.0
  %660 = vadd.xlane.f32.xlu0 %v659
  %v661 = vpop.xlane.xlu0 %660
  %v662 = vsel %vm84, %v474, 0.0
  %663 = vadd.xlane.f32.xlu0 %v662
  %v664 = vpop.xlane.xlu0 %663
  %v665 = vsel %vm84, %v475, 0.0
  %666 = vadd.xlane.f32.xlu0 %v665
  %v667 = vpop.xlane.xlu0 %666
  %v668 = vmul.f32 %v478, %v283
  %v669 = vmul.f32 %v481, %v283
  %v670 = vmul.f32 %v484, %v283
  %v671 = vmul.f32 %v487, %v283
  %v672 = vmul.f32 %v490, %v283
  %v673 = vmul.f32 %v493, %v283
  %v674 = vmul.f32 %v496, %v283
  %v675 = vmul.f32 %v499, %v283
  %v676 = vmul.f32 %v502, %v283
  %v677 = vmul.f32 %v505, %v283
  %v678 = vmul.f32 %v508, %v283
  %v679 = vmul.f32 %v511, %v283
  %v680 = vmul.f32 %v514, %v283
  %v681 = vmul.f32 %v517, %v283
  %v682 = vmul.f32 %v520, %v283
  %v683 = vmul.f32 %v523, %v283
  %v684 = vmul.f32 %v526, %v283
  %v685 = vmul.f32 %v529, %v283
  %v686 = vmul.f32 %v532, %v283
  %v687 = vmul.f32 %v535, %v283
  %v688 = vmul.f32 %v538, %v283
  %v689 = vmul.f32 %v541, %v283
  %v690 = vmul.f32 %v544, %v283
  %v691 = vmul.f32 %v547, %v283
  %v692 = vmul.f32 %v550, %v283
  %v693 = vmul.f32 %v553, %v283
  %v694 = vmul.f32 %v556, %v283
  %v695 = vmul.f32 %v559, %v283
  %v696 = vmul.f32 %v562, %v283
  %v697 = vmul.f32 %v565, %v283
  %v698 = vmul.f32 %v568, %v283
  %v699 = vmul.f32 %v571, %v283
  %v700 = vmul.f32 %v574, %v283
  %v701 = vmul.f32 %v577, %v283
  %v702 = vmul.f32 %v580, %v283
  %v703 = vmul.f32 %v583, %v283
  %v704 = vmul.f32 %v586, %v283
  %v705 = vmul.f32 %v589, %v283
  %v706 = vmul.f32 %v592, %v283
  %v707 = vmul.f32 %v595, %v283
  %v708 = vmul.f32 %v598, %v283
  %v709 = vmul.f32 %v601, %v283
  %v710 = vmul.f32 %v604, %v283
  %v711 = vmul.f32 %v607, %v283
  %v712 = vmul.f32 %v610, %v283
  %v713 = vmul.f32 %v613, %v283
  %v714 = vmul.f32 %v616, %v283
  %v715 = vmul.f32 %v619, %v283
  %v716 = vmul.f32 %v622, %v283
  %v717 = vmul.f32 %v625, %v283
  %v718 = vmul.f32 %v628, %v283
  %v719 = vmul.f32 %v631, %v283
  %v720 = vmul.f32 %v634, %v283
  %v721 = vmul.f32 %v637, %v283
  %v722 = vmul.f32 %v640, %v283
  %v723 = vmul.f32 %v643, %v283
  %v724 = vmul.f32 %v646, %v283
  %v725 = vmul.f32 %v649, %v283
  %v726 = vmul.f32 %v652, %v283
  %v727 = vmul.f32 %v655, %v283
  %v728 = vmul.f32 %v658, %v283
  %v729 = vmul.f32 %v661, %v283
  %v730 = vmul.f32 %v664, %v283
  %v731 = vmul.f32 %v667, %v283
  %v732 = vld [vmem:[%s1] sm:$0xff]
  %v733 = vld [vmem:[%s1 + $0x8] sm:$0xff]
  %v734 = vld [vmem:[%s1 + $0x10] sm:$0xff]
  %v735 = vld [vmem:[%s1 + $0x18] sm:$0xff]
  %v736 = vld [vmem:[%s1 + $0x20] sm:$0xff]
  %v737 = vld [vmem:[%s1 + $0x28] sm:$0xff]
  %v738 = vld [vmem:[%s1 + $0x30] sm:$0xff]
  %v739 = vld [vmem:[%s1 + $0x38] sm:$0xff]
  %v740 = vld [vmem:[%s1 + $0x40] sm:$0xff]
  %v741 = vld [vmem:[%s1 + $0x48] sm:$0xff]
  %v742 = vld [vmem:[%s1 + $0x50] sm:$0xff]
  %v743 = vld [vmem:[%s1 + $0x58] sm:$0xff]
  %v744 = vld [vmem:[%s1 + $0x60] sm:$0xff]
  %v745 = vld [vmem:[%s1 + $0x68] sm:$0xff]
  %v746 = vld [vmem:[%s1 + $0x70] sm:$0xff]
  %v747 = vld [vmem:[%s1 + $0x78] sm:$0xff]
  %v748 = vld [vmem:[%s1 + $0x80] sm:$0xff]
  %v749 = vld [vmem:[%s1 + $0x88] sm:$0xff]
  %v750 = vld [vmem:[%s1 + $0x90] sm:$0xff]
  %v751 = vld [vmem:[%s1 + $0x98] sm:$0xff]
  %v752 = vld [vmem:[%s1 + $0xa0] sm:$0xff]
  %v753 = vld [vmem:[%s1 + $0xa8] sm:$0xff]
  %v754 = vld [vmem:[%s1 + $0xb0] sm:$0xff]
  %v755 = vld [vmem:[%s1 + $0xb8] sm:$0xff]
  %v756 = vld [vmem:[%s1 + $0xc0] sm:$0xff]
  %v757 = vld [vmem:[%s1 + $0xc8] sm:$0xff]
  %v758 = vld [vmem:[%s1 + $0xd0] sm:$0xff]
  %v759 = vld [vmem:[%s1 + $0xd8] sm:$0xff]
  %v760 = vld [vmem:[%s1 + $0xe0] sm:$0xff]
  %v761 = vld [vmem:[%s1 + $0xe8] sm:$0xff]
  %v762 = vld [vmem:[%s1 + $0xf0] sm:$0xff]
  %v763 = vld [vmem:[%s1 + $0xf8] sm:$0xff]
  %v764 = vadd.f32 %v668, 1e-05
  %v765 = vadd.f32 %v669, 1e-05
  %v766 = vadd.f32 %v670, 1e-05
  %v767 = vadd.f32 %v671, 1e-05
  %v768 = vadd.f32 %v672, 1e-05
  %v769 = vadd.f32 %v673, 1e-05
  %v770 = vadd.f32 %v674, 1e-05
  %v771 = vadd.f32 %v675, 1e-05
  %v772 = vadd.f32 %v676, 1e-05
  %v773 = vadd.f32 %v677, 1e-05
  %v774 = vadd.f32 %v678, 1e-05
  %v775 = vadd.f32 %v679, 1e-05
  %v776 = vadd.f32 %v680, 1e-05
  %v777 = vadd.f32 %v681, 1e-05
  %v778 = vadd.f32 %v682, 1e-05
  %v779 = vadd.f32 %v683, 1e-05
  %v780 = vadd.f32 %v684, 1e-05
  %v781 = vadd.f32 %v685, 1e-05
  %v782 = vadd.f32 %v686, 1e-05
  %v783 = vadd.f32 %v687, 1e-05
  %v784 = vadd.f32 %v688, 1e-05
  %v785 = vadd.f32 %v689, 1e-05
  %v786 = vadd.f32 %v690, 1e-05
  %v787 = vadd.f32 %v691, 1e-05
  %v788 = vadd.f32 %v692, 1e-05
  %v789 = vadd.f32 %v693, 1e-05
  %v790 = vadd.f32 %v694, 1e-05
  %v791 = vadd.f32 %v695, 1e-05
  %v792 = vadd.f32 %v696, 1e-05
  %v793 = vadd.f32 %v697, 1e-05
  %v794 = vadd.f32 %v698, 1e-05
  %v795 = vadd.f32 %v699, 1e-05
  %v796 = vadd.f32 %v700, 1e-05
  %v797 = vadd.f32 %v701, 1e-05
  %v798 = vadd.f32 %v702, 1e-05
  %v799 = vadd.f32 %v703, 1e-05
  %v800 = vadd.f32 %v704, 1e-05
  %v801 = vadd.f32 %v705, 1e-05
  %v802 = vadd.f32 %v706, 1e-05
  %v803 = vadd.f32 %v707, 1e-05
  %v804 = vadd.f32 %v708, 1e-05
  %v805 = vadd.f32 %v709, 1e-05
  %v806 = vadd.f32 %v710, 1e-05
  %v807 = vadd.f32 %v711, 1e-05
  %v808 = vadd.f32 %v712, 1e-05
  %v809 = vadd.f32 %v713, 1e-05
  %v810 = vadd.f32 %v714, 1e-05
  %v811 = vadd.f32 %v715, 1e-05
  %v812 = vadd.f32 %v716, 1e-05
  %v813 = vadd.f32 %v717, 1e-05
  %v814 = vadd.f32 %v718, 1e-05
  %v815 = vadd.f32 %v719, 1e-05
  %v816 = vadd.f32 %v720, 1e-05
  %v817 = vadd.f32 %v721, 1e-05
  %v818 = vadd.f32 %v722, 1e-05
  %v819 = vadd.f32 %v723, 1e-05
  %v820 = vadd.f32 %v724, 1e-05
  %v821 = vadd.f32 %v725, 1e-05
  %v822 = vadd.f32 %v726, 1e-05
  %v823 = vadd.f32 %v727, 1e-05
  %v824 = vadd.f32 %v728, 1e-05
  %v825 = vadd.f32 %v729, 1e-05
  %v826 = vadd.f32 %v730, 1e-05
  %v827 = vadd.f32 %v731, 1e-05
  %v828 = vrsqrt.pop %v764
  %v829 = vmul.f32 %v828, %v764
  %v830 = vmul.f32 %v829, %v828
  %v831 = vmul.f32 0.5, %v830
  %v832 = vsub.f32 1.5, %v831
  %v833 = vmul.f32 %v828, %v832
  %vm834 = vweird.f32 %v764
  %vm835 = vweird.f32 %v828
  %vm836 = vmor %vm834, %vm835
  %v837 = vsel %vm836, %v828, %v833
  %v838 = vrsqrt.pop %v765
  %v839 = vmul.f32 %v838, %v765
  %v840 = vmul.f32 %v839, %v838
  %v841 = vmul.f32 0.5, %v840
  %v842 = vsub.f32 1.5, %v841
  %v843 = vmul.f32 %v838, %v842
  %vm844 = vweird.f32 %v765
  %vm845 = vweird.f32 %v838
  %vm846 = vmor %vm844, %vm845
  %v847 = vsel %vm846, %v838, %v843
  %v848 = vrsqrt.pop %v766
  %v849 = vmul.f32 %v848, %v766
  %v850 = vmul.f32 %v849, %v848
  %v851 = vmul.f32 0.5, %v850
  %v852 = vsub.f32 1.5, %v851
  %v853 = vmul.f32 %v848, %v852
  %vm854 = vweird.f32 %v766
  %vm855 = vweird.f32 %v848
  %vm856 = vmor %vm854, %vm855
  %v857 = vsel %vm856, %v848, %v853
  %v858 = vrsqrt.pop %v767
  %v859 = vmul.f32 %v858, %v767
  %v860 = vmul.f32 %v859, %v858
  %v861 = vmul.f32 0.5, %v860
  %v862 = vsub.f32 1.5, %v861
  %v863 = vmul.f32 %v858, %v862
  %vm864 = vweird.f32 %v767
  %vm865 = vweird.f32 %v858
  %vm866 = vmor %vm864, %vm865
  %v867 = vsel %vm866, %v858, %v863
  %v868 = vrsqrt.pop %v768
  %v869 = vmul.f32 %v868, %v768
  %v870 = vmul.f32 %v869, %v868
  %v871 = vmul.f32 0.5, %v870
  %v872 = vsub.f32 1.5, %v871
  %v873 = vmul.f32 %v868, %v872
  %vm874 = vweird.f32 %v768
  %vm875 = vweird.f32 %v868
  %vm876 = vmor %vm874, %vm875
  %v877 = vsel %vm876, %v868, %v873
  %v878 = vrsqrt.pop %v769
  %v879 = vmul.f32 %v878, %v769
  %v880 = vmul.f32 %v879, %v878
  %v881 = vmul.f32 0.5, %v880
  %v882 = vsub.f32 1.5, %v881
  %v883 = vmul.f32 %v878, %v882
  %vm884 = vweird.f32 %v769
  %vm885 = vweird.f32 %v878
  %vm886 = vmor %vm884, %vm885
  %v887 = vsel %vm886, %v878, %v883
  %v888 = vrsqrt.pop %v770
  %v889 = vmul.f32 %v888, %v770
  %v890 = vmul.f32 %v889, %v888
  %v891 = vmul.f32 0.5, %v890
  %v892 = vsub.f32 1.5, %v891
  %v893 = vmul.f32 %v888, %v892
  %vm894 = vweird.f32 %v770
  %vm895 = vweird.f32 %v888
  %vm896 = vmor %vm894, %vm895
  %v897 = vsel %vm896, %v888, %v893
  %v898 = vrsqrt.pop %v771
  %v899 = vmul.f32 %v898, %v771
  %v900 = vmul.f32 %v899, %v898
  %v901 = vmul.f32 0.5, %v900
  %v902 = vsub.f32 1.5, %v901
  %v903 = vmul.f32 %v898, %v902
  %vm904 = vweird.f32 %v771
  %vm905 = vweird.f32 %v898
  %vm906 = vmor %vm904, %vm905
  %v907 = vsel %vm906, %v898, %v903
  %v908 = vrsqrt.pop %v772
  %v909 = vmul.f32 %v908, %v772
  %v910 = vmul.f32 %v909, %v908
  %v911 = vmul.f32 0.5, %v910
  %v912 = vsub.f32 1.5, %v911
  %v913 = vmul.f32 %v908, %v912
  %vm914 = vweird.f32 %v772
  %vm915 = vweird.f32 %v908
  %vm916 = vmor %vm914, %vm915
  %v917 = vsel %vm916, %v908, %v913
  %v918 = vrsqrt.pop %v773
  %v919 = vmul.f32 %v918, %v773
  %v920 = vmul.f32 %v919, %v918
  %v921 = vmul.f32 0.5, %v920
  %v922 = vsub.f32 1.5, %v921
  %v923 = vmul.f32 %v918, %v922
  %vm924 = vweird.f32 %v773
  %vm925 = vweird.f32 %v918
  %vm926 = vmor %vm924, %vm925
  %v927 = vsel %vm926, %v918, %v923
  %v928 = vrsqrt.pop %v774
  %v929 = vmul.f32 %v928, %v774
  %v930 = vmul.f32 %v929, %v928
  %v931 = vmul.f32 0.5, %v930
  %v932 = vsub.f32 1.5, %v931
  %v933 = vmul.f32 %v928, %v932
  %vm934 = vweird.f32 %v774
  %vm935 = vweird.f32 %v928
  %vm936 = vmor %vm934, %vm935
  %v937 = vsel %vm936, %v928, %v933
  %v938 = vrsqrt.pop %v775
  %v939 = vmul.f32 %v938, %v775
  %v940 = vmul.f32 %v939, %v938
  %v941 = vmul.f32 0.5, %v940
  %v942 = vsub.f32 1.5, %v941
  %v943 = vmul.f32 %v938, %v942
  %vm944 = vweird.f32 %v775
  %vm945 = vweird.f32 %v938
  %vm946 = vmor %vm944, %vm945
  %v947 = vsel %vm946, %v938, %v943
  %v948 = vrsqrt.pop %v776
  %v949 = vmul.f32 %v948, %v776
  %v950 = vmul.f32 %v949, %v948
  %v951 = vmul.f32 0.5, %v950
  %v952 = vsub.f32 1.5, %v951
  %v953 = vmul.f32 %v948, %v952
  %vm954 = vweird.f32 %v776
  %vm955 = vweird.f32 %v948
  %vm956 = vmor %vm954, %vm955
  %v957 = vsel %vm956, %v948, %v953
  %v958 = vrsqrt.pop %v777
  %v959 = vmul.f32 %v958, %v777
  %v960 = vmul.f32 %v959, %v958
  %v961 = vmul.f32 0.5, %v960
  %v962 = vsub.f32 1.5, %v961
  %v963 = vmul.f32 %v958, %v962
  %vm964 = vweird.f32 %v777
  %vm965 = vweird.f32 %v958
  %vm966 = vmor %vm964, %vm965
  %v967 = vsel %vm966, %v958, %v963
  %v968 = vrsqrt.pop %v778
  %v969 = vmul.f32 %v968, %v778
  %v970 = vmul.f32 %v969, %v968
  %v971 = vmul.f32 0.5, %v970
  %v972 = vsub.f32 1.5, %v971
  %v973 = vmul.f32 %v968, %v972
  %vm974 = vweird.f32 %v778
  %vm975 = vweird.f32 %v968
  %vm976 = vmor %vm974, %vm975
  %v977 = vsel %vm976, %v968, %v973
  %v978 = vrsqrt.pop %v779
  %v979 = vmul.f32 %v978, %v779
  %v980 = vmul.f32 %v979, %v978
  %v981 = vmul.f32 0.5, %v980
  %v982 = vsub.f32 1.5, %v981
  %v983 = vmul.f32 %v978, %v982
  %vm984 = vweird.f32 %v779
  %vm985 = vweird.f32 %v978
  %vm986 = vmor %vm984, %vm985
  %v987 = vsel %vm986, %v978, %v983
  %v988 = vrsqrt.pop %v780
  %v989 = vmul.f32 %v988, %v780
  %v990 = vmul.f32 %v989, %v988
  %v991 = vmul.f32 0.5, %v990
  %v992 = vsub.f32 1.5, %v991
  %v993 = vmul.f32 %v988, %v992
  %vm994 = vweird.f32 %v780
  %vm995 = vweird.f32 %v988
  %vm996 = vmor %vm994, %vm995
  %v997 = vsel %vm996, %v988, %v993
  %v998 = vrsqrt.pop %v781
  %v999 = vmul.f32 %v998, %v781
  %v1000 = vmul.f32 %v999, %v998
  %v1001 = vmul.f32 0.5, %v1000
  %v1002 = vsub.f32 1.5, %v1001
  %v1003 = vmul.f32 %v998, %v1002
  %vm1004 = vweird.f32 %v781
  %vm1005 = vweird.f32 %v998
  %vm1006 = vmor %vm1004, %vm1005
  %v1007 = vsel %vm1006, %v998, %v1003
  %v1008 = vrsqrt.pop %v782
  %v1009 = vmul.f32 %v1008, %v782
  %v1010 = vmul.f32 %v1009, %v1008
  %v1011 = vmul.f32 0.5, %v1010
  %v1012 = vsub.f32 1.5, %v1011
  %v1013 = vmul.f32 %v1008, %v1012
  %vm1014 = vweird.f32 %v782
  %vm1015 = vweird.f32 %v1008
  %vm1016 = vmor %vm1014, %vm1015
  %v1017 = vsel %vm1016, %v1008, %v1013
  %v1018 = vrsqrt.pop %v783
  %v1019 = vmul.f32 %v1018, %v783
  %v1020 = vmul.f32 %v1019, %v1018
  %v1021 = vmul.f32 0.5, %v1020
  %v1022 = vsub.f32 1.5, %v1021
  %v1023 = vmul.f32 %v1018, %v1022
  %vm1024 = vweird.f32 %v783
  %vm1025 = vweird.f32 %v1018
  %vm1026 = vmor %vm1024, %vm1025
  %v1027 = vsel %vm1026, %v1018, %v1023
  %v1028 = vrsqrt.pop %v784
  %v1029 = vmul.f32 %v1028, %v784
  %v1030 = vmul.f32 %v1029, %v1028
  %v1031 = vmul.f32 0.5, %v1030
  %v1032 = vsub.f32 1.5, %v1031
  %v1033 = vmul.f32 %v1028, %v1032
  %vm1034 = vweird.f32 %v784
  %vm1035 = vweird.f32 %v1028
  %vm1036 = vmor %vm1034, %vm1035
  %v1037 = vsel %vm1036, %v1028, %v1033
  %v1038 = vrsqrt.pop %v785
  %v1039 = vmul.f32 %v1038, %v785
  %v1040 = vmul.f32 %v1039, %v1038
  %v1041 = vmul.f32 0.5, %v1040
  %v1042 = vsub.f32 1.5, %v1041
  %v1043 = vmul.f32 %v1038, %v1042
  %vm1044 = vweird.f32 %v785
  %vm1045 = vweird.f32 %v1038
  %vm1046 = vmor %vm1044, %vm1045
  %v1047 = vsel %vm1046, %v1038, %v1043
  %v1048 = vrsqrt.pop %v786
  %v1049 = vmul.f32 %v1048, %v786
  %v1050 = vmul.f32 %v1049, %v1048
  %v1051 = vmul.f32 0.5, %v1050
  %v1052 = vsub.f32 1.5, %v1051
  %v1053 = vmul.f32 %v1048, %v1052
  %vm1054 = vweird.f32 %v786
  %vm1055 = vweird.f32 %v1048
  %vm1056 = vmor %vm1054, %vm1055
  %v1057 = vsel %vm1056, %v1048, %v1053
  %v1058 = vrsqrt.pop %v787
  %v1059 = vmul.f32 %v1058, %v787
  %v1060 = vmul.f32 %v1059, %v1058
  %v1061 = vmul.f32 0.5, %v1060
  %v1062 = vsub.f32 1.5, %v1061
  %v1063 = vmul.f32 %v1058, %v1062
  %vm1064 = vweird.f32 %v787
  %vm1065 = vweird.f32 %v1058
  %vm1066 = vmor %vm1064, %vm1065
  %v1067 = vsel %vm1066, %v1058, %v1063
  %v1068 = vrsqrt.pop %v788
  %v1069 = vmul.f32 %v1068, %v788
  %v1070 = vmul.f32 %v1069, %v1068
  %v1071 = vmul.f32 0.5, %v1070
  %v1072 = vsub.f32 1.5, %v1071
  %v1073 = vmul.f32 %v1068, %v1072
  %vm1074 = vweird.f32 %v788
  %vm1075 = vweird.f32 %v1068
  %vm1076 = vmor %vm1074, %vm1075
  %v1077 = vsel %vm1076, %v1068, %v1073
  %v1078 = vrsqrt.pop %v789
  %v1079 = vmul.f32 %v1078, %v789
  %v1080 = vmul.f32 %v1079, %v1078
  %v1081 = vmul.f32 0.5, %v1080
  %v1082 = vsub.f32 1.5, %v1081
  %v1083 = vmul.f32 %v1078, %v1082
  %vm1084 = vweird.f32 %v789
  %vm1085 = vweird.f32 %v1078
  %vm1086 = vmor %vm1084, %vm1085
  %v1087 = vsel %vm1086, %v1078, %v1083
  %v1088 = vrsqrt.pop %v790
  %v1089 = vmul.f32 %v1088, %v790
  %v1090 = vmul.f32 %v1089, %v1088
  %v1091 = vmul.f32 0.5, %v1090
  %v1092 = vsub.f32 1.5, %v1091
  %v1093 = vmul.f32 %v1088, %v1092
  %vm1094 = vweird.f32 %v790
  %vm1095 = vweird.f32 %v1088
  %vm1096 = vmor %vm1094, %vm1095
  %v1097 = vsel %vm1096, %v1088, %v1093
  %v1098 = vrsqrt.pop %v791
  %v1099 = vmul.f32 %v1098, %v791
  %v1100 = vmul.f32 %v1099, %v1098
  %v1101 = vmul.f32 0.5, %v1100
  %v1102 = vsub.f32 1.5, %v1101
  %v1103 = vmul.f32 %v1098, %v1102
  %vm1104 = vweird.f32 %v791
  %vm1105 = vweird.f32 %v1098
  %vm1106 = vmor %vm1104, %vm1105
  %v1107 = vsel %vm1106, %v1098, %v1103
  %v1108 = vrsqrt.pop %v792
  %v1109 = vmul.f32 %v1108, %v792
  %v1110 = vmul.f32 %v1109, %v1108
  %v1111 = vmul.f32 0.5, %v1110
  %v1112 = vsub.f32 1.5, %v1111
  %v1113 = vmul.f32 %v1108, %v1112
  %vm1114 = vweird.f32 %v792
  %vm1115 = vweird.f32 %v1108
  %vm1116 = vmor %vm1114, %vm1115
  %v1117 = vsel %vm1116, %v1108, %v1113
  %v1118 = vrsqrt.pop %v793
  %v1119 = vmul.f32 %v1118, %v793
  %v1120 = vmul.f32 %v1119, %v1118
  %v1121 = vmul.f32 0.5, %v1120
  %v1122 = vsub.f32 1.5, %v1121
  %v1123 = vmul.f32 %v1118, %v1122
  %vm1124 = vweird.f32 %v793
  %vm1125 = vweird.f32 %v1118
  %vm1126 = vmor %vm1124, %vm1125
  %v1127 = vsel %vm1126, %v1118, %v1123
  %v1128 = vrsqrt.pop %v794
  %v1129 = vmul.f32 %v1128, %v794
  %v1130 = vmul.f32 %v1129, %v1128
  %v1131 = vmul.f32 0.5, %v1130
  %v1132 = vsub.f32 1.5, %v1131
  %v1133 = vmul.f32 %v1128, %v1132
  %vm1134 = vweird.f32 %v794
  %vm1135 = vweird.f32 %v1128
  %vm1136 = vmor %vm1134, %vm1135
  %v1137 = vsel %vm1136, %v1128, %v1133
  %v1138 = vrsqrt.pop %v795
  %v1139 = vmul.f32 %v1138, %v795
  %v1140 = vmul.f32 %v1139, %v1138
  %v1141 = vmul.f32 0.5, %v1140
  %v1142 = vsub.f32 1.5, %v1141
  %v1143 = vmul.f32 %v1138, %v1142
  %vm1144 = vweird.f32 %v795
  %vm1145 = vweird.f32 %v1138
  %vm1146 = vmor %vm1144, %vm1145
  %v1147 = vsel %vm1146, %v1138, %v1143
  %v1148 = vrsqrt.pop %v796
  %v1149 = vmul.f32 %v1148, %v796
  %v1150 = vmul.f32 %v1149, %v1148
  %v1151 = vmul.f32 0.5, %v1150
  %v1152 = vsub.f32 1.5, %v1151
  %v1153 = vmul.f32 %v1148, %v1152
  %vm1154 = vweird.f32 %v796
  %vm1155 = vweird.f32 %v1148
  %vm1156 = vmor %vm1154, %vm1155
  %v1157 = vsel %vm1156, %v1148, %v1153
  %v1158 = vrsqrt.pop %v797
  %v1159 = vmul.f32 %v1158, %v797
  %v1160 = vmul.f32 %v1159, %v1158
  %v1161 = vmul.f32 0.5, %v1160
  %v1162 = vsub.f32 1.5, %v1161
  %v1163 = vmul.f32 %v1158, %v1162
  %vm1164 = vweird.f32 %v797
  %vm1165 = vweird.f32 %v1158
  %vm1166 = vmor %vm1164, %vm1165
  %v1167 = vsel %vm1166, %v1158, %v1163
  %v1168 = vrsqrt.pop %v798
  %v1169 = vmul.f32 %v1168, %v798
  %v1170 = vmul.f32 %v1169, %v1168
  %v1171 = vmul.f32 0.5, %v1170
  %v1172 = vsub.f32 1.5, %v1171
  %v1173 = vmul.f32 %v1168, %v1172
  %vm1174 = vweird.f32 %v798
  %vm1175 = vweird.f32 %v1168
  %vm1176 = vmor %vm1174, %vm1175
  %v1177 = vsel %vm1176, %v1168, %v1173
  %v1178 = vrsqrt.pop %v799
  %v1179 = vmul.f32 %v1178, %v799
  %v1180 = vmul.f32 %v1179, %v1178
  %v1181 = vmul.f32 0.5, %v1180
  %v1182 = vsub.f32 1.5, %v1181
  %v1183 = vmul.f32 %v1178, %v1182
  %vm1184 = vweird.f32 %v799
  %vm1185 = vweird.f32 %v1178
  %vm1186 = vmor %vm1184, %vm1185
  %v1187 = vsel %vm1186, %v1178, %v1183
  %v1188 = vrsqrt.pop %v800
  %v1189 = vmul.f32 %v1188, %v800
  %v1190 = vmul.f32 %v1189, %v1188
  %v1191 = vmul.f32 0.5, %v1190
  %v1192 = vsub.f32 1.5, %v1191
  %v1193 = vmul.f32 %v1188, %v1192
  %vm1194 = vweird.f32 %v800
  %vm1195 = vweird.f32 %v1188
  %vm1196 = vmor %vm1194, %vm1195
  %v1197 = vsel %vm1196, %v1188, %v1193
  %v1198 = vrsqrt.pop %v801
  %v1199 = vmul.f32 %v1198, %v801
  %v1200 = vmul.f32 %v1199, %v1198
  %v1201 = vmul.f32 0.5, %v1200
  %v1202 = vsub.f32 1.5, %v1201
  %v1203 = vmul.f32 %v1198, %v1202
  %vm1204 = vweird.f32 %v801
  %vm1205 = vweird.f32 %v1198
  %vm1206 = vmor %vm1204, %vm1205
  %v1207 = vsel %vm1206, %v1198, %v1203
  %v1208 = vrsqrt.pop %v802
  %v1209 = vmul.f32 %v1208, %v802
  %v1210 = vmul.f32 %v1209, %v1208
  %v1211 = vmul.f32 0.5, %v1210
  %v1212 = vsub.f32 1.5, %v1211
  %v1213 = vmul.f32 %v1208, %v1212
  %vm1214 = vweird.f32 %v802
  %vm1215 = vweird.f32 %v1208
  %vm1216 = vmor %vm1214, %vm1215
  %v1217 = vsel %vm1216, %v1208, %v1213
  %v1218 = vrsqrt.pop %v803
  %v1219 = vmul.f32 %v1218, %v803
  %v1220 = vmul.f32 %v1219, %v1218
  %v1221 = vmul.f32 0.5, %v1220
  %v1222 = vsub.f32 1.5, %v1221
  %v1223 = vmul.f32 %v1218, %v1222
  %vm1224 = vweird.f32 %v803
  %vm1225 = vweird.f32 %v1218
  %vm1226 = vmor %vm1224, %vm1225
  %v1227 = vsel %vm1226, %v1218, %v1223
  %v1228 = vrsqrt.pop %v804
  %v1229 = vmul.f32 %v1228, %v804
  %v1230 = vmul.f32 %v1229, %v1228
  %v1231 = vmul.f32 0.5, %v1230
  %v1232 = vsub.f32 1.5, %v1231
  %v1233 = vmul.f32 %v1228, %v1232
  %vm1234 = vweird.f32 %v804
  %vm1235 = vweird.f32 %v1228
  %vm1236 = vmor %vm1234, %vm1235
  %v1237 = vsel %vm1236, %v1228, %v1233
  %v1238 = vrsqrt.pop %v805
  %v1239 = vmul.f32 %v1238, %v805
  %v1240 = vmul.f32 %v1239, %v1238
  %v1241 = vmul.f32 0.5, %v1240
  %v1242 = vsub.f32 1.5, %v1241
  %v1243 = vmul.f32 %v1238, %v1242
  %vm1244 = vweird.f32 %v805
  %vm1245 = vweird.f32 %v1238
  %vm1246 = vmor %vm1244, %vm1245
  %v1247 = vsel %vm1246, %v1238, %v1243
  %v1248 = vrsqrt.pop %v806
  %v1249 = vmul.f32 %v1248, %v806
  %v1250 = vmul.f32 %v1249, %v1248
  %v1251 = vmul.f32 0.5, %v1250
  %v1252 = vsub.f32 1.5, %v1251
  %v1253 = vmul.f32 %v1248, %v1252
  %vm1254 = vweird.f32 %v806
  %vm1255 = vweird.f32 %v1248
  %vm1256 = vmor %vm1254, %vm1255
  %v1257 = vsel %vm1256, %v1248, %v1253
  %v1258 = vrsqrt.pop %v807
  %v1259 = vmul.f32 %v1258, %v807
  %v1260 = vmul.f32 %v1259, %v1258
  %v1261 = vmul.f32 0.5, %v1260
  %v1262 = vsub.f32 1.5, %v1261
  %v1263 = vmul.f32 %v1258, %v1262
  %vm1264 = vweird.f32 %v807
  %vm1265 = vweird.f32 %v1258
  %vm1266 = vmor %vm1264, %vm1265
  %v1267 = vsel %vm1266, %v1258, %v1263
  %v1268 = vrsqrt.pop %v808
  %v1269 = vmul.f32 %v1268, %v808
  %v1270 = vmul.f32 %v1269, %v1268
  %v1271 = vmul.f32 0.5, %v1270
  %v1272 = vsub.f32 1.5, %v1271
  %v1273 = vmul.f32 %v1268, %v1272
  %vm1274 = vweird.f32 %v808
  %vm1275 = vweird.f32 %v1268
  %vm1276 = vmor %vm1274, %vm1275
  %v1277 = vsel %vm1276, %v1268, %v1273
  %v1278 = vrsqrt.pop %v809
  %v1279 = vmul.f32 %v1278, %v809
  %v1280 = vmul.f32 %v1279, %v1278
  %v1281 = vmul.f32 0.5, %v1280
  %v1282 = vsub.f32 1.5, %v1281
  %v1283 = vmul.f32 %v1278, %v1282
  %vm1284 = vweird.f32 %v809
  %vm1285 = vweird.f32 %v1278
  %vm1286 = vmor %vm1284, %vm1285
  %v1287 = vsel %vm1286, %v1278, %v1283
  %v1288 = vrsqrt.pop %v810
  %v1289 = vmul.f32 %v1288, %v810
  %v1290 = vmul.f32 %v1289, %v1288
  %v1291 = vmul.f32 0.5, %v1290
  %v1292 = vsub.f32 1.5, %v1291
  %v1293 = vmul.f32 %v1288, %v1292
  %vm1294 = vweird.f32 %v810
  %vm1295 = vweird.f32 %v1288
  %vm1296 = vmor %vm1294, %vm1295
  %v1297 = vsel %vm1296, %v1288, %v1293
  %v1298 = vrsqrt.pop %v811
  %v1299 = vmul.f32 %v1298, %v811
  %v1300 = vmul.f32 %v1299, %v1298
  %v1301 = vmul.f32 0.5, %v1300
  %v1302 = vsub.f32 1.5, %v1301
  %v1303 = vmul.f32 %v1298, %v1302
  %vm1304 = vweird.f32 %v811
  %vm1305 = vweird.f32 %v1298
  %vm1306 = vmor %vm1304, %vm1305
  %v1307 = vsel %vm1306, %v1298, %v1303
  %v1308 = vrsqrt.pop %v812
  %v1309 = vmul.f32 %v1308, %v812
  %v1310 = vmul.f32 %v1309, %v1308
  %v1311 = vmul.f32 0.5, %v1310
  %v1312 = vsub.f32 1.5, %v1311
  %v1313 = vmul.f32 %v1308, %v1312
  %vm1314 = vweird.f32 %v812
  %vm1315 = vweird.f32 %v1308
  %vm1316 = vmor %vm1314, %vm1315
  %v1317 = vsel %vm1316, %v1308, %v1313
  %v1318 = vrsqrt.pop %v813
  %v1319 = vmul.f32 %v1318, %v813
  %v1320 = vmul.f32 %v1319, %v1318
  %v1321 = vmul.f32 0.5, %v1320
  %v1322 = vsub.f32 1.5, %v1321
  %v1323 = vmul.f32 %v1318, %v1322
  %vm1324 = vweird.f32 %v813
  %vm1325 = vweird.f32 %v1318
  %vm1326 = vmor %vm1324, %vm1325
  %v1327 = vsel %vm1326, %v1318, %v1323
  %v1328 = vrsqrt.pop %v814
  %v1329 = vmul.f32 %v1328, %v814
  %v1330 = vmul.f32 %v1329, %v1328
  %v1331 = vmul.f32 0.5, %v1330
  %v1332 = vsub.f32 1.5, %v1331
  %v1333 = vmul.f32 %v1328, %v1332
  %vm1334 = vweird.f32 %v814
  %vm1335 = vweird.f32 %v1328
  %vm1336 = vmor %vm1334, %vm1335
  %v1337 = vsel %vm1336, %v1328, %v1333
  %v1338 = vrsqrt.pop %v815
  %v1339 = vmul.f32 %v1338, %v815
  %v1340 = vmul.f32 %v1339, %v1338
  %v1341 = vmul.f32 0.5, %v1340
  %v1342 = vsub.f32 1.5, %v1341
  %v1343 = vmul.f32 %v1338, %v1342
  %vm1344 = vweird.f32 %v815
  %vm1345 = vweird.f32 %v1338
  %vm1346 = vmor %vm1344, %vm1345
  %v1347 = vsel %vm1346, %v1338, %v1343
  %v1348 = vrsqrt.pop %v816
  %v1349 = vmul.f32 %v1348, %v816
  %v1350 = vmul.f32 %v1349, %v1348
  %v1351 = vmul.f32 0.5, %v1350
  %v1352 = vsub.f32 1.5, %v1351
  %v1353 = vmul.f32 %v1348, %v1352
  %vm1354 = vweird.f32 %v816
  %vm1355 = vweird.f32 %v1348
  %vm1356 = vmor %vm1354, %vm1355
  %v1357 = vsel %vm1356, %v1348, %v1353
  %v1358 = vrsqrt.pop %v817
  %v1359 = vmul.f32 %v1358, %v817
  %v1360 = vmul.f32 %v1359, %v1358
  %v1361 = vmul.f32 0.5, %v1360
  %v1362 = vsub.f32 1.5, %v1361
  %v1363 = vmul.f32 %v1358, %v1362
  %vm1364 = vweird.f32 %v817
  %vm1365 = vweird.f32 %v1358
  %vm1366 = vmor %vm1364, %vm1365
  %v1367 = vsel %vm1366, %v1358, %v1363
  %v1368 = vrsqrt.pop %v818
  %v1369 = vmul.f32 %v1368, %v818
  %v1370 = vmul.f32 %v1369, %v1368
  %v1371 = vmul.f32 0.5, %v1370
  %v1372 = vsub.f32 1.5, %v1371
  %v1373 = vmul.f32 %v1368, %v1372
  %vm1374 = vweird.f32 %v818
  %vm1375 = vweird.f32 %v1368
  %vm1376 = vmor %vm1374, %vm1375
  %v1377 = vsel %vm1376, %v1368, %v1373
  %v1378 = vrsqrt.pop %v819
  %v1379 = vmul.f32 %v1378, %v819
  %v1380 = vmul.f32 %v1379, %v1378
  %v1381 = vmul.f32 0.5, %v1380
  %v1382 = vsub.f32 1.5, %v1381
  %v1383 = vmul.f32 %v1378, %v1382
  %vm1384 = vweird.f32 %v819
  %vm1385 = vweird.f32 %v1378
  %vm1386 = vmor %vm1384, %vm1385
  %v1387 = vsel %vm1386, %v1378, %v1383
  %v1388 = vrsqrt.pop %v820
  %v1389 = vmul.f32 %v1388, %v820
  %v1390 = vmul.f32 %v1389, %v1388
  %v1391 = vmul.f32 0.5, %v1390
  %v1392 = vsub.f32 1.5, %v1391
  %v1393 = vmul.f32 %v1388, %v1392
  %vm1394 = vweird.f32 %v820
  %vm1395 = vweird.f32 %v1388
  %vm1396 = vmor %vm1394, %vm1395
  %v1397 = vsel %vm1396, %v1388, %v1393
  %v1398 = vrsqrt.pop %v821
  %v1399 = vmul.f32 %v1398, %v821
  %v1400 = vmul.f32 %v1399, %v1398
  %v1401 = vmul.f32 0.5, %v1400
  %v1402 = vsub.f32 1.5, %v1401
  %v1403 = vmul.f32 %v1398, %v1402
  %vm1404 = vweird.f32 %v821
  %vm1405 = vweird.f32 %v1398
  %vm1406 = vmor %vm1404, %vm1405
  %v1407 = vsel %vm1406, %v1398, %v1403
  %v1408 = vrsqrt.pop %v822
  %v1409 = vmul.f32 %v1408, %v822
  %v1410 = vmul.f32 %v1409, %v1408
  %v1411 = vmul.f32 0.5, %v1410
  %v1412 = vsub.f32 1.5, %v1411
  %v1413 = vmul.f32 %v1408, %v1412
  %vm1414 = vweird.f32 %v822
  %vm1415 = vweird.f32 %v1408
  %vm1416 = vmor %vm1414, %vm1415
  %v1417 = vsel %vm1416, %v1408, %v1413
  %v1418 = vrsqrt.pop %v823
  %v1419 = vmul.f32 %v1418, %v823
  %v1420 = vmul.f32 %v1419, %v1418
  %v1421 = vmul.f32 0.5, %v1420
  %v1422 = vsub.f32 1.5, %v1421
  %v1423 = vmul.f32 %v1418, %v1422
  %vm1424 = vweird.f32 %v823
  %vm1425 = vweird.f32 %v1418
  %vm1426 = vmor %vm1424, %vm1425
  %v1427 = vsel %vm1426, %v1418, %v1423
  %v1428 = vrsqrt.pop %v824
  %v1429 = vmul.f32 %v1428, %v824
  %v1430 = vmul.f32 %v1429, %v1428
  %v1431 = vmul.f32 0.5, %v1430
  %v1432 = vsub.f32 1.5, %v1431
  %v1433 = vmul.f32 %v1428, %v1432
  %vm1434 = vweird.f32 %v824
  %vm1435 = vweird.f32 %v1428
  %vm1436 = vmor %vm1434, %vm1435
  %v1437 = vsel %vm1436, %v1428, %v1433
  %v1438 = vrsqrt.pop %v825
  %v1439 = vmul.f32 %v1438, %v825
  %v1440 = vmul.f32 %v1439, %v1438
  %v1441 = vmul.f32 0.5, %v1440
  %v1442 = vsub.f32 1.5, %v1441
  %v1443 = vmul.f32 %v1438, %v1442
  %vm1444 = vweird.f32 %v825
  %vm1445 = vweird.f32 %v1438
  %vm1446 = vmor %vm1444, %vm1445
  %v1447 = vsel %vm1446, %v1438, %v1443
  %v1448 = vrsqrt.pop %v826
  %v1449 = vmul.f32 %v1448, %v826
  %v1450 = vmul.f32 %v1449, %v1448
  %v1451 = vmul.f32 0.5, %v1450
  %v1452 = vsub.f32 1.5, %v1451
  %v1453 = vmul.f32 %v1448, %v1452
  %vm1454 = vweird.f32 %v826
  %vm1455 = vweird.f32 %v1448
  %vm1456 = vmor %vm1454, %vm1455
  %v1457 = vsel %vm1456, %v1448, %v1453
  %v1458 = vrsqrt.pop %v827
  %v1459 = vmul.f32 %v1458, %v827
  %v1460 = vmul.f32 %v1459, %v1458
  %v1461 = vmul.f32 0.5, %v1460
  %v1462 = vsub.f32 1.5, %v1461
  %v1463 = vmul.f32 %v1458, %v1462
  %vm1464 = vweird.f32 %v827
  %vm1465 = vweird.f32 %v1458
  %vm1466 = vmor %vm1464, %vm1465
  %v1467 = vsel %vm1466, %v1458, %v1463
  %v1468 = vmul.f32 %v732, %v837
  %v1469 = vmul.f32 %v733, %v847
  %v1470 = vmul.f32 %v734, %v857
  %v1471 = vmul.f32 %v735, %v867
  %v1472 = vmul.f32 %v736, %v877
  %v1473 = vmul.f32 %v737, %v887
  %v1474 = vmul.f32 %v738, %v897
  %v1475 = vmul.f32 %v739, %v907
  %v1476 = vmul.f32 %v740, %v917
  %v1477 = vmul.f32 %v741, %v927
  %v1478 = vmul.f32 %v742, %v937
  %v1479 = vmul.f32 %v743, %v947
  %v1480 = vmul.f32 %v744, %v957
  %v1481 = vmul.f32 %v745, %v967
  %v1482 = vmul.f32 %v746, %v977
  %v1483 = vmul.f32 %v747, %v987
  %v1484 = vmul.f32 %v748, %v997
  %v1485 = vmul.f32 %v749, %v1007
  %v1486 = vmul.f32 %v750, %v1017
  %v1487 = vmul.f32 %v751, %v1027
  %v1488 = vmul.f32 %v752, %v1037
  %v1489 = vmul.f32 %v753, %v1047
  %v1490 = vmul.f32 %v754, %v1057
  %v1491 = vmul.f32 %v755, %v1067
  %v1492 = vmul.f32 %v756, %v1077
  %v1493 = vmul.f32 %v757, %v1087
  %v1494 = vmul.f32 %v758, %v1097
  %v1495 = vmul.f32 %v759, %v1107
  %v1496 = vmul.f32 %v760, %v1117
  %v1497 = vmul.f32 %v761, %v1127
  %v1498 = vmul.f32 %v762, %v1137
  %v1499 = vmul.f32 %v763, %v1147
  %v1500 = vmul.f32 %v732, %v1157
  %v1501 = vmul.f32 %v733, %v1167
  %v1502 = vmul.f32 %v734, %v1177
  %v1503 = vmul.f32 %v735, %v1187
  %v1504 = vmul.f32 %v736, %v1197
  %v1505 = vmul.f32 %v737, %v1207
  %v1506 = vmul.f32 %v738, %v1217
  %v1507 = vmul.f32 %v739, %v1227
  %v1508 = vmul.f32 %v740, %v1237
  %v1509 = vmul.f32 %v741, %v1247
  %v1510 = vmul.f32 %v742, %v1257
  %v1511 = vmul.f32 %v743, %v1267
  %v1512 = vmul.f32 %v744, %v1277
  %v1513 = vmul.f32 %v745, %v1287
  %v1514 = vmul.f32 %v746, %v1297
  %v1515 = vmul.f32 %v747, %v1307
  %v1516 = vmul.f32 %v748, %v1317
  %v1517 = vmul.f32 %v749, %v1327
  %v1518 = vmul.f32 %v750, %v1337
  %v1519 = vmul.f32 %v751, %v1347
  %v1520 = vmul.f32 %v752, %v1357
  %v1521 = vmul.f32 %v753, %v1367
  %v1522 = vmul.f32 %v754, %v1377
  %v1523 = vmul.f32 %v755, %v1387
  %v1524 = vmul.f32 %v756, %v1397
  %v1525 = vmul.f32 %v757, %v1407
  %v1526 = vmul.f32 %v758, %v1417
  %v1527 = vmul.f32 %v759, %v1427
  %v1528 = vmul.f32 %v760, %v1437
  %v1529 = vmul.f32 %v761, %v1447
  %v1530 = vmul.f32 %v762, %v1457
  %v1531 = vmul.f32 %v763, %v1467
  %v1532 = vld [vmem:[%s2] sm:$0xff]
  %v1533 = vld [vmem:[%s2 + $0x8] sm:$0xff]
  %v1534 = vld [vmem:[%s2 + $0x10] sm:$0xff]
  %v1535 = vld [vmem:[%s2 + $0x18] sm:$0xff]
  %v1536 = vld [vmem:[%s2 + $0x20] sm:$0xff]
  %v1537 = vld [vmem:[%s2 + $0x28] sm:$0xff]
  %v1538 = vld [vmem:[%s2 + $0x30] sm:$0xff]
  %v1539 = vld [vmem:[%s2 + $0x38] sm:$0xff]
  %v1540 = vld [vmem:[%s2 + $0x40] sm:$0xff]
  %v1541 = vld [vmem:[%s2 + $0x48] sm:$0xff]
  %v1542 = vld [vmem:[%s2 + $0x50] sm:$0xff]
  %v1543 = vld [vmem:[%s2 + $0x58] sm:$0xff]
  %v1544 = vld [vmem:[%s2 + $0x60] sm:$0xff]
  %v1545 = vld [vmem:[%s2 + $0x68] sm:$0xff]
  %v1546 = vld [vmem:[%s2 + $0x70] sm:$0xff]
  %v1547 = vld [vmem:[%s2 + $0x78] sm:$0xff]
  %v1548 = vld [vmem:[%s2 + $0x80] sm:$0xff]
  %v1549 = vld [vmem:[%s2 + $0x88] sm:$0xff]
  %v1550 = vld [vmem:[%s2 + $0x90] sm:$0xff]
  %v1551 = vld [vmem:[%s2 + $0x98] sm:$0xff]
  %v1552 = vld [vmem:[%s2 + $0xa0] sm:$0xff]
  %v1553 = vld [vmem:[%s2 + $0xa8] sm:$0xff]
  %v1554 = vld [vmem:[%s2 + $0xb0] sm:$0xff]
  %v1555 = vld [vmem:[%s2 + $0xb8] sm:$0xff]
  %v1556 = vld [vmem:[%s2 + $0xc0] sm:$0xff]
  %v1557 = vld [vmem:[%s2 + $0xc8] sm:$0xff]
  %v1558 = vld [vmem:[%s2 + $0xd0] sm:$0xff]
  %v1559 = vld [vmem:[%s2 + $0xd8] sm:$0xff]
  %v1560 = vld [vmem:[%s2 + $0xe0] sm:$0xff]
  %v1561 = vld [vmem:[%s2 + $0xe8] sm:$0xff]
  %v1562 = vld [vmem:[%s2 + $0xf0] sm:$0xff]
  %v1563 = vld [vmem:[%s2 + $0xf8] sm:$0xff]
  %v1564 = vmul.f32 %v284, %v1468
  %v1565 = vmul.f32 %v285, %v1469
  %v1566 = vmul.f32 %v286, %v1470
  %v1567 = vmul.f32 %v287, %v1471
  %v1568 = vmul.f32 %v288, %v1472
  %v1569 = vmul.f32 %v289, %v1473
  %v1570 = vmul.f32 %v290, %v1474
  %v1571 = vmul.f32 %v291, %v1475
  %v1572 = vmul.f32 %v292, %v1476
  %v1573 = vmul.f32 %v293, %v1477
  %v1574 = vmul.f32 %v294, %v1478
  %v1575 = vmul.f32 %v295, %v1479
  %v1576 = vmul.f32 %v296, %v1480
  %v1577 = vmul.f32 %v297, %v1481
  %v1578 = vmul.f32 %v298, %v1482
  %v1579 = vmul.f32 %v299, %v1483
  %v1580 = vmul.f32 %v300, %v1484
  %v1581 = vmul.f32 %v301, %v1485
  %v1582 = vmul.f32 %v302, %v1486
  %v1583 = vmul.f32 %v303, %v1487
  %v1584 = vmul.f32 %v304, %v1488
  %v1585 = vmul.f32 %v305, %v1489
  %v1586 = vmul.f32 %v306, %v1490
  %v1587 = vmul.f32 %v307, %v1491
  %v1588 = vmul.f32 %v308, %v1492
  %v1589 = vmul.f32 %v309, %v1493
  %v1590 = vmul.f32 %v310, %v1494
  %v1591 = vmul.f32 %v311, %v1495
  %v1592 = vmul.f32 %v312, %v1496
  %v1593 = vmul.f32 %v313, %v1497
  %v1594 = vmul.f32 %v314, %v1498
  %v1595 = vmul.f32 %v315, %v1499
  %v1596 = vmul.f32 %v316, %v1500
  %v1597 = vmul.f32 %v317, %v1501
  %v1598 = vmul.f32 %v318, %v1502
  %v1599 = vmul.f32 %v319, %v1503
  %v1600 = vmul.f32 %v320, %v1504
  %v1601 = vmul.f32 %v321, %v1505
  %v1602 = vmul.f32 %v322, %v1506
  %v1603 = vmul.f32 %v323, %v1507
  %v1604 = vmul.f32 %v324, %v1508
  %v1605 = vmul.f32 %v325, %v1509
  %v1606 = vmul.f32 %v326, %v1510
  %v1607 = vmul.f32 %v327, %v1511
  %v1608 = vmul.f32 %v328, %v1512
  %v1609 = vmul.f32 %v329, %v1513
  %v1610 = vmul.f32 %v330, %v1514
  %v1611 = vmul.f32 %v331, %v1515
  %v1612 = vmul.f32 %v332, %v1516
  %v1613 = vmul.f32 %v333, %v1517
  %v1614 = vmul.f32 %v334, %v1518
  %v1615 = vmul.f32 %v335, %v1519
  %v1616 = vmul.f32 %v336, %v1520
  %v1617 = vmul.f32 %v337, %v1521
  %v1618 = vmul.f32 %v338, %v1522
  %v1619 = vmul.f32 %v339, %v1523
  %v1620 = vmul.f32 %v340, %v1524
  %v1621 = vmul.f32 %v341, %v1525
  %v1622 = vmul.f32 %v342, %v1526
  %v1623 = vmul.f32 %v343, %v1527
  %v1624 = vmul.f32 %v344, %v1528
  %v1625 = vmul.f32 %v345, %v1529
  %v1626 = vmul.f32 %v346, %v1530
  %v1627 = vmul.f32 %v347, %v1531
  %v1628 = vsub.f32 %v1532, %v1564
  %v1629 = vsub.f32 %v1533, %v1565
  %v1630 = vsub.f32 %v1534, %v1566
  %v1631 = vsub.f32 %v1535, %v1567
  %v1632 = vsub.f32 %v1536, %v1568
  %v1633 = vsub.f32 %v1537, %v1569
  %v1634 = vsub.f32 %v1538, %v1570
  %v1635 = vsub.f32 %v1539, %v1571
  %v1636 = vsub.f32 %v1540, %v1572
  %v1637 = vsub.f32 %v1541, %v1573
  %v1638 = vsub.f32 %v1542, %v1574
  %v1639 = vsub.f32 %v1543, %v1575
  %v1640 = vsub.f32 %v1544, %v1576
  %v1641 = vsub.f32 %v1545, %v1577
  %v1642 = vsub.f32 %v1546, %v1578
  %v1643 = vsub.f32 %v1547, %v1579
  %v1644 = vsub.f32 %v1548, %v1580
  %v1645 = vsub.f32 %v1549, %v1581
  %v1646 = vsub.f32 %v1550, %v1582
  %v1647 = vsub.f32 %v1551, %v1583
  %v1648 = vsub.f32 %v1552, %v1584
  %v1649 = vsub.f32 %v1553, %v1585
  %v1650 = vsub.f32 %v1554, %v1586
  %v1651 = vsub.f32 %v1555, %v1587
  %v1652 = vsub.f32 %v1556, %v1588
  %v1653 = vsub.f32 %v1557, %v1589
  %v1654 = vsub.f32 %v1558, %v1590
  %v1655 = vsub.f32 %v1559, %v1591
  %v1656 = vsub.f32 %v1560, %v1592
  %v1657 = vsub.f32 %v1561, %v1593
  %v1658 = vsub.f32 %v1562, %v1594
  %v1659 = vsub.f32 %v1563, %v1595
  %v1660 = vsub.f32 %v1532, %v1596
  %v1661 = vsub.f32 %v1533, %v1597
  %v1662 = vsub.f32 %v1534, %v1598
  %v1663 = vsub.f32 %v1535, %v1599
  %v1664 = vsub.f32 %v1536, %v1600
  %v1665 = vsub.f32 %v1537, %v1601
  %v1666 = vsub.f32 %v1538, %v1602
  %v1667 = vsub.f32 %v1539, %v1603
  %v1668 = vsub.f32 %v1540, %v1604
  %v1669 = vsub.f32 %v1541, %v1605
  %v1670 = vsub.f32 %v1542, %v1606
  %v1671 = vsub.f32 %v1543, %v1607
  %v1672 = vsub.f32 %v1544, %v1608
  %v1673 = vsub.f32 %v1545, %v1609
  %v1674 = vsub.f32 %v1546, %v1610
  %v1675 = vsub.f32 %v1547, %v1611
  %v1676 = vsub.f32 %v1548, %v1612
  %v1677 = vsub.f32 %v1549, %v1613
  %v1678 = vsub.f32 %v1550, %v1614
  %v1679 = vsub.f32 %v1551, %v1615
  %v1680 = vsub.f32 %v1552, %v1616
  %v1681 = vsub.f32 %v1553, %v1617
  %v1682 = vsub.f32 %v1554, %v1618
  %v1683 = vsub.f32 %v1555, %v1619
  %v1684 = vsub.f32 %v1556, %v1620
  %v1685 = vsub.f32 %v1557, %v1621
  %v1686 = vsub.f32 %v1558, %v1622
  %v1687 = vsub.f32 %v1559, %v1623
  %v1688 = vsub.f32 %v1560, %v1624
  %v1689 = vsub.f32 %v1561, %v1625
  %v1690 = vsub.f32 %v1562, %v1626
  %v1691 = vsub.f32 %v1563, %v1627
  %1693 = vset.pattern.permute.xlu0 0
  %1694 = vperm.xlu0 %1693, %v1468
  %v1695 = vpop.permute.xlu0 %1694
  %1698 = vset.pattern.permute.xlu0 0
  %1699 = vperm.xlu0 %1698, %v1469
  %v1700 = vpop.permute.xlu0 %1699
  %1703 = vset.pattern.permute.xlu0 0
  %1704 = vperm.xlu0 %1703, %v1470
  %v1705 = vpop.permute.xlu0 %1704
  %1708 = vset.pattern.permute.xlu0 0
  %1709 = vperm.xlu0 %1708, %v1471
  %v1710 = vpop.permute.xlu0 %1709
  %1713 = vset.pattern.permute.xlu0 0
  %1714 = vperm.xlu0 %1713, %v1472
  %v1715 = vpop.permute.xlu0 %1714
  %1718 = vset.pattern.permute.xlu0 0
  %1719 = vperm.xlu0 %1718, %v1473
  %v1720 = vpop.permute.xlu0 %1719
  %1723 = vset.pattern.permute.xlu0 0
  %1724 = vperm.xlu0 %1723, %v1474
  %v1725 = vpop.permute.xlu0 %1724
  %1728 = vset.pattern.permute.xlu0 0
  %1729 = vperm.xlu0 %1728, %v1475
  %v1730 = vpop.permute.xlu0 %1729
  %1733 = vset.pattern.permute.xlu0 0
  %1734 = vperm.xlu0 %1733, %v1476
  %v1735 = vpop.permute.xlu0 %1734
  %1738 = vset.pattern.permute.xlu0 0
  %1739 = vperm.xlu0 %1738, %v1477
  %v1740 = vpop.permute.xlu0 %1739
  %1743 = vset.pattern.permute.xlu0 0
  %1744 = vperm.xlu0 %1743, %v1478
  %v1745 = vpop.permute.xlu0 %1744
  %1748 = vset.pattern.permute.xlu0 0
  %1749 = vperm.xlu0 %1748, %v1479
  %v1750 = vpop.permute.xlu0 %1749
  %1753 = vset.pattern.permute.xlu0 0
  %1754 = vperm.xlu0 %1753, %v1480
  %v1755 = vpop.permute.xlu0 %1754
  %1758 = vset.pattern.permute.xlu0 0
  %1759 = vperm.xlu0 %1758, %v1481
  %v1760 = vpop.permute.xlu0 %1759
  %1763 = vset.pattern.permute.xlu0 0
  %1764 = vperm.xlu0 %1763, %v1482
  %v1765 = vpop.permute.xlu0 %1764
  %1768 = vset.pattern.permute.xlu0 0
  %1769 = vperm.xlu0 %1768, %v1483
  %v1770 = vpop.permute.xlu0 %1769
  %1773 = vset.pattern.permute.xlu0 0
  %1774 = vperm.xlu0 %1773, %v1484
  %v1775 = vpop.permute.xlu0 %1774
  %1778 = vset.pattern.permute.xlu0 0
  %1779 = vperm.xlu0 %1778, %v1485
  %v1780 = vpop.permute.xlu0 %1779
  %1783 = vset.pattern.permute.xlu0 0
  %1784 = vperm.xlu0 %1783, %v1486
  %v1785 = vpop.permute.xlu0 %1784
  %1788 = vset.pattern.permute.xlu0 0
  %1789 = vperm.xlu0 %1788, %v1487
  %v1790 = vpop.permute.xlu0 %1789
  %1793 = vset.pattern.permute.xlu0 0
  %1794 = vperm.xlu0 %1793, %v1488
  %v1795 = vpop.permute.xlu0 %1794
  %1798 = vset.pattern.permute.xlu0 0
  %1799 = vperm.xlu0 %1798, %v1489
  %v1800 = vpop.permute.xlu0 %1799
  %1803 = vset.pattern.permute.xlu0 0
  %1804 = vperm.xlu0 %1803, %v1490
  %v1805 = vpop.permute.xlu0 %1804
  %1808 = vset.pattern.permute.xlu0 0
  %1809 = vperm.xlu0 %1808, %v1491
  %v1810 = vpop.permute.xlu0 %1809
  %1813 = vset.pattern.permute.xlu0 0
  %1814 = vperm.xlu0 %1813, %v1492
  %v1815 = vpop.permute.xlu0 %1814
  %1818 = vset.pattern.permute.xlu0 0
  %1819 = vperm.xlu0 %1818, %v1493
  %v1820 = vpop.permute.xlu0 %1819
  %1823 = vset.pattern.permute.xlu0 0
  %1824 = vperm.xlu0 %1823, %v1494
  %v1825 = vpop.permute.xlu0 %1824
  %1828 = vset.pattern.permute.xlu0 0
  %1829 = vperm.xlu0 %1828, %v1495
  %v1830 = vpop.permute.xlu0 %1829
  %1833 = vset.pattern.permute.xlu0 0
  %1834 = vperm.xlu0 %1833, %v1496
  %v1835 = vpop.permute.xlu0 %1834
  %1838 = vset.pattern.permute.xlu0 0
  %1839 = vperm.xlu0 %1838, %v1497
  %v1840 = vpop.permute.xlu0 %1839
  %1843 = vset.pattern.permute.xlu0 0
  %1844 = vperm.xlu0 %1843, %v1498
  %v1845 = vpop.permute.xlu0 %1844
  %1848 = vset.pattern.permute.xlu0 0
  %1849 = vperm.xlu0 %1848, %v1499
  %v1850 = vpop.permute.xlu0 %1849
  %1853 = vset.pattern.permute.xlu0 0
  %1854 = vperm.xlu0 %1853, %v1500
  %v1855 = vpop.permute.xlu0 %1854
  %1858 = vset.pattern.permute.xlu0 0
  %1859 = vperm.xlu0 %1858, %v1501
  %v1860 = vpop.permute.xlu0 %1859
  %1863 = vset.pattern.permute.xlu0 0
  %1864 = vperm.xlu0 %1863, %v1502
  %v1865 = vpop.permute.xlu0 %1864
  %1868 = vset.pattern.permute.xlu0 0
  %1869 = vperm.xlu0 %1868, %v1503
  %v1870 = vpop.permute.xlu0 %1869
  %1873 = vset.pattern.permute.xlu0 0
  %1874 = vperm.xlu0 %1873, %v1504
  %v1875 = vpop.permute.xlu0 %1874
  %1878 = vset.pattern.permute.xlu0 0
  %1879 = vperm.xlu0 %1878, %v1505
  %v1880 = vpop.permute.xlu0 %1879
  %1883 = vset.pattern.permute.xlu0 0
  %1884 = vperm.xlu0 %1883, %v1506
  %v1885 = vpop.permute.xlu0 %1884
  %1888 = vset.pattern.permute.xlu0 0
  %1889 = vperm.xlu0 %1888, %v1507
  %v1890 = vpop.permute.xlu0 %1889
  %1893 = vset.pattern.permute.xlu0 0
  %1894 = vperm.xlu0 %1893, %v1508
  %v1895 = vpop.permute.xlu0 %1894
  %1898 = vset.pattern.permute.xlu0 0
  %1899 = vperm.xlu0 %1898, %v1509
  %v1900 = vpop.permute.xlu0 %1899
  %1903 = vset.pattern.permute.xlu0 0
  %1904 = vperm.xlu0 %1903, %v1510
  %v1905 = vpop.permute.xlu0 %1904
  %1908 = vset.pattern.permute.xlu0 0
  %1909 = vperm.xlu0 %1908, %v1511
  %v1910 = vpop.permute.xlu0 %1909
  %1913 = vset.pattern.permute.xlu0 0
  %1914 = vperm.xlu0 %1913, %v1512
  %v1915 = vpop.permute.xlu0 %1914
  %1918 = vset.pattern.permute.xlu0 0
  %1919 = vperm.xlu0 %1918, %v1513
  %v1920 = vpop.permute.xlu0 %1919
  %1923 = vset.pattern.permute.xlu0 0
  %1924 = vperm.xlu0 %1923, %v1514
  %v1925 = vpop.permute.xlu0 %1924
  %1928 = vset.pattern.permute.xlu0 0
  %1929 = vperm.xlu0 %1928, %v1515
  %v1930 = vpop.permute.xlu0 %1929
  %1933 = vset.pattern.permute.xlu0 0
  %1934 = vperm.xlu0 %1933, %v1516
  %v1935 = vpop.permute.xlu0 %1934
  %1938 = vset.pattern.permute.xlu0 0
  %1939 = vperm.xlu0 %1938, %v1517
  %v1940 = vpop.permute.xlu0 %1939
  %1943 = vset.pattern.permute.xlu0 0
  %1944 = vperm.xlu0 %1943, %v1518
  %v1945 = vpop.permute.xlu0 %1944
  %1948 = vset.pattern.permute.xlu0 0
  %1949 = vperm.xlu0 %1948, %v1519
  %v1950 = vpop.permute.xlu0 %1949
  %1953 = vset.pattern.permute.xlu0 0
  %1954 = vperm.xlu0 %1953, %v1520
  %v1955 = vpop.permute.xlu0 %1954
  %1958 = vset.pattern.permute.xlu0 0
  %1959 = vperm.xlu0 %1958, %v1521
  %v1960 = vpop.permute.xlu0 %1959
  %1963 = vset.pattern.permute.xlu0 0
  %1964 = vperm.xlu0 %1963, %v1522
  %v1965 = vpop.permute.xlu0 %1964
  %1968 = vset.pattern.permute.xlu0 0
  %1969 = vperm.xlu0 %1968, %v1523
  %v1970 = vpop.permute.xlu0 %1969
  %1973 = vset.pattern.permute.xlu0 0
  %1974 = vperm.xlu0 %1973, %v1524
  %v1975 = vpop.permute.xlu0 %1974
  %1978 = vset.pattern.permute.xlu0 0
  %1979 = vperm.xlu0 %1978, %v1525
  %v1980 = vpop.permute.xlu0 %1979
  %1983 = vset.pattern.permute.xlu0 0
  %1984 = vperm.xlu0 %1983, %v1526
  %v1985 = vpop.permute.xlu0 %1984
  %1988 = vset.pattern.permute.xlu0 0
  %1989 = vperm.xlu0 %1988, %v1527
  %v1990 = vpop.permute.xlu0 %1989
  %1993 = vset.pattern.permute.xlu0 0
  %1994 = vperm.xlu0 %1993, %v1528
  %v1995 = vpop.permute.xlu0 %1994
  %1998 = vset.pattern.permute.xlu0 0
  %1999 = vperm.xlu0 %1998, %v1529
  %v2000 = vpop.permute.xlu0 %1999
  %2003 = vset.pattern.permute.xlu0 0
  %2004 = vperm.xlu0 %2003, %v1530
  %v2005 = vpop.permute.xlu0 %2004
  %2008 = vset.pattern.permute.xlu0 0
  %2009 = vperm.xlu0 %2008, %v1531
  %v2010 = vpop.permute.xlu0 %2009
  %v2012 = vmul.f32 %v20, %v1695
  %v2013 = vmul.f32 %v21, %v1700
  %v2014 = vmul.f32 %v22, %v1705
  %v2015 = vmul.f32 %v23, %v1710
  %v2016 = vmul.f32 %v24, %v1715
  %v2017 = vmul.f32 %v25, %v1720
  %v2018 = vmul.f32 %v26, %v1725
  %v2019 = vmul.f32 %v27, %v1730
  %v2020 = vmul.f32 %v28, %v1735
  %v2021 = vmul.f32 %v29, %v1740
  %v2022 = vmul.f32 %v30, %v1745
  %v2023 = vmul.f32 %v31, %v1750
  %v2024 = vmul.f32 %v32, %v1755
  %v2025 = vmul.f32 %v33, %v1760
  %v2026 = vmul.f32 %v34, %v1765
  %v2027 = vmul.f32 %v35, %v1770
  %v2028 = vmul.f32 %v36, %v1775
  %v2029 = vmul.f32 %v37, %v1780
  %v2030 = vmul.f32 %v38, %v1785
  %v2031 = vmul.f32 %v39, %v1790
  %v2032 = vmul.f32 %v40, %v1795
  %v2033 = vmul.f32 %v41, %v1800
  %v2034 = vmul.f32 %v42, %v1805
  %v2035 = vmul.f32 %v43, %v1810
  %v2036 = vmul.f32 %v44, %v1815
  %v2037 = vmul.f32 %v45, %v1820
  %v2038 = vmul.f32 %v46, %v1825
  %v2039 = vmul.f32 %v47, %v1830
  %v2040 = vmul.f32 %v48, %v1835
  %v2041 = vmul.f32 %v49, %v1840
  %v2042 = vmul.f32 %v50, %v1845
  %v2043 = vmul.f32 %v51, %v1850
  %v2044 = vmul.f32 %v52, %v1855
  %v2045 = vmul.f32 %v53, %v1860
  %v2046 = vmul.f32 %v54, %v1865
  %v2047 = vmul.f32 %v55, %v1870
  %v2048 = vmul.f32 %v56, %v1875
  %v2049 = vmul.f32 %v57, %v1880
  %v2050 = vmul.f32 %v58, %v1885
  %v2051 = vmul.f32 %v59, %v1890
  %v2052 = vmul.f32 %v60, %v1895
  %v2053 = vmul.f32 %v61, %v1900
  %v2054 = vmul.f32 %v62, %v1905
  %v2055 = vmul.f32 %v63, %v1910
  %v2056 = vmul.f32 %v64, %v1915
  %v2057 = vmul.f32 %v65, %v1920
  %v2058 = vmul.f32 %v66, %v1925
  %v2059 = vmul.f32 %v67, %v1930
  %v2060 = vmul.f32 %v68, %v1935
  %v2061 = vmul.f32 %v69, %v1940
  %v2062 = vmul.f32 %v70, %v1945
  %v2063 = vmul.f32 %v71, %v1950
  %v2064 = vmul.f32 %v72, %v1955
  %v2065 = vmul.f32 %v73, %v1960
  %v2066 = vmul.f32 %v74, %v1965
  %v2067 = vmul.f32 %v75, %v1970
  %v2068 = vmul.f32 %v76, %v1975
  %v2069 = vmul.f32 %v77, %v1980
  %v2070 = vmul.f32 %v78, %v1985
  %v2071 = vmul.f32 %v79, %v1990
  %v2072 = vmul.f32 %v80, %v1995
  %v2073 = vmul.f32 %v81, %v2000
  %v2074 = vmul.f32 %v82, %v2005
  %v2075 = vmul.f32 %v83, %v2010
  %2077 = vset.pattern.permute.xlu0 0
  %2078 = vperm.xlu0 %2077, %v1628
  %v2079 = vpop.permute.xlu0 %2078
  %2082 = vset.pattern.permute.xlu0 0
  %2083 = vperm.xlu0 %2082, %v1629
  %v2084 = vpop.permute.xlu0 %2083
  %2087 = vset.pattern.permute.xlu0 0
  %2088 = vperm.xlu0 %2087, %v1630
  %v2089 = vpop.permute.xlu0 %2088
  %2092 = vset.pattern.permute.xlu0 0
  %2093 = vperm.xlu0 %2092, %v1631
  %v2094 = vpop.permute.xlu0 %2093
  %2097 = vset.pattern.permute.xlu0 0
  %2098 = vperm.xlu0 %2097, %v1632
  %v2099 = vpop.permute.xlu0 %2098
  %2102 = vset.pattern.permute.xlu0 0
  %2103 = vperm.xlu0 %2102, %v1633
  %v2104 = vpop.permute.xlu0 %2103
  %2107 = vset.pattern.permute.xlu0 0
  %2108 = vperm.xlu0 %2107, %v1634
  %v2109 = vpop.permute.xlu0 %2108
  %2112 = vset.pattern.permute.xlu0 0
  %2113 = vperm.xlu0 %2112, %v1635
  %v2114 = vpop.permute.xlu0 %2113
  %2117 = vset.pattern.permute.xlu0 0
  %2118 = vperm.xlu0 %2117, %v1636
  %v2119 = vpop.permute.xlu0 %2118
  %2122 = vset.pattern.permute.xlu0 0
  %2123 = vperm.xlu0 %2122, %v1637
  %v2124 = vpop.permute.xlu0 %2123
  %2127 = vset.pattern.permute.xlu0 0
  %2128 = vperm.xlu0 %2127, %v1638
  %v2129 = vpop.permute.xlu0 %2128
  %2132 = vset.pattern.permute.xlu0 0
  %2133 = vperm.xlu0 %2132, %v1639
  %v2134 = vpop.permute.xlu0 %2133
  %2137 = vset.pattern.permute.xlu0 0
  %2138 = vperm.xlu0 %2137, %v1640
  %v2139 = vpop.permute.xlu0 %2138
  %2142 = vset.pattern.permute.xlu0 0
  %2143 = vperm.xlu0 %2142, %v1641
  %v2144 = vpop.permute.xlu0 %2143
  %2147 = vset.pattern.permute.xlu0 0
  %2148 = vperm.xlu0 %2147, %v1642
  %v2149 = vpop.permute.xlu0 %2148
  %2152 = vset.pattern.permute.xlu0 0
  %2153 = vperm.xlu0 %2152, %v1643
  %v2154 = vpop.permute.xlu0 %2153
  %2157 = vset.pattern.permute.xlu0 0
  %2158 = vperm.xlu0 %2157, %v1644
  %v2159 = vpop.permute.xlu0 %2158
  %2162 = vset.pattern.permute.xlu0 0
  %2163 = vperm.xlu0 %2162, %v1645
  %v2164 = vpop.permute.xlu0 %2163
  %2167 = vset.pattern.permute.xlu0 0
  %2168 = vperm.xlu0 %2167, %v1646
  %v2169 = vpop.permute.xlu0 %2168
  %2172 = vset.pattern.permute.xlu0 0
  %2173 = vperm.xlu0 %2172, %v1647
  %v2174 = vpop.permute.xlu0 %2173
  %2177 = vset.pattern.permute.xlu0 0
  %2178 = vperm.xlu0 %2177, %v1648
  %v2179 = vpop.permute.xlu0 %2178
  %2182 = vset.pattern.permute.xlu0 0
  %2183 = vperm.xlu0 %2182, %v1649
  %v2184 = vpop.permute.xlu0 %2183
  %2187 = vset.pattern.permute.xlu0 0
  %2188 = vperm.xlu0 %2187, %v1650
  %v2189 = vpop.permute.xlu0 %2188
  %2192 = vset.pattern.permute.xlu0 0
  %2193 = vperm.xlu0 %2192, %v1651
  %v2194 = vpop.permute.xlu0 %2193
  %2197 = vset.pattern.permute.xlu0 0
  %2198 = vperm.xlu0 %2197, %v1652
  %v2199 = vpop.permute.xlu0 %2198
  %2202 = vset.pattern.permute.xlu0 0
  %2203 = vperm.xlu0 %2202, %v1653
  %v2204 = vpop.permute.xlu0 %2203
  %2207 = vset.pattern.permute.xlu0 0
  %2208 = vperm.xlu0 %2207, %v1654
  %v2209 = vpop.permute.xlu0 %2208
  %2212 = vset.pattern.permute.xlu0 0
  %2213 = vperm.xlu0 %2212, %v1655
  %v2214 = vpop.permute.xlu0 %2213
  %2217 = vset.pattern.permute.xlu0 0
  %2218 = vperm.xlu0 %2217, %v1656
  %v2219 = vpop.permute.xlu0 %2218
  %2222 = vset.pattern.permute.xlu0 0
  %2223 = vperm.xlu0 %2222, %v1657
  %v2224 = vpop.permute.xlu0 %2223
  %2227 = vset.pattern.permute.xlu0 0
  %2228 = vperm.xlu0 %2227, %v1658
  %v2229 = vpop.permute.xlu0 %2228
  %2232 = vset.pattern.permute.xlu0 0
  %2233 = vperm.xlu0 %2232, %v1659
  %v2234 = vpop.permute.xlu0 %2233
  %2237 = vset.pattern.permute.xlu0 0
  %2238 = vperm.xlu0 %2237, %v1660
  %v2239 = vpop.permute.xlu0 %2238
  %2242 = vset.pattern.permute.xlu0 0
  %2243 = vperm.xlu0 %2242, %v1661
  %v2244 = vpop.permute.xlu0 %2243
  %2247 = vset.pattern.permute.xlu0 0
  %2248 = vperm.xlu0 %2247, %v1662
  %v2249 = vpop.permute.xlu0 %2248
  %2252 = vset.pattern.permute.xlu0 0
  %2253 = vperm.xlu0 %2252, %v1663
  %v2254 = vpop.permute.xlu0 %2253
  %2257 = vset.pattern.permute.xlu0 0
  %2258 = vperm.xlu0 %2257, %v1664
  %v2259 = vpop.permute.xlu0 %2258
  %2262 = vset.pattern.permute.xlu0 0
  %2263 = vperm.xlu0 %2262, %v1665
  %v2264 = vpop.permute.xlu0 %2263
  %2267 = vset.pattern.permute.xlu0 0
  %2268 = vperm.xlu0 %2267, %v1666
  %v2269 = vpop.permute.xlu0 %2268
  %2272 = vset.pattern.permute.xlu0 0
  %2273 = vperm.xlu0 %2272, %v1667
  %v2274 = vpop.permute.xlu0 %2273
  %2277 = vset.pattern.permute.xlu0 0
  %2278 = vperm.xlu0 %2277, %v1668
  %v2279 = vpop.permute.xlu0 %2278
  %2282 = vset.pattern.permute.xlu0 0
  %2283 = vperm.xlu0 %2282, %v1669
  %v2284 = vpop.permute.xlu0 %2283
  %2287 = vset.pattern.permute.xlu0 0
  %2288 = vperm.xlu0 %2287, %v1670
  %v2289 = vpop.permute.xlu0 %2288
  %2292 = vset.pattern.permute.xlu0 0
  %2293 = vperm.xlu0 %2292, %v1671
  %v2294 = vpop.permute.xlu0 %2293
  %2297 = vset.pattern.permute.xlu0 0
  %2298 = vperm.xlu0 %2297, %v1672
  %v2299 = vpop.permute.xlu0 %2298
  %2302 = vset.pattern.permute.xlu0 0
  %2303 = vperm.xlu0 %2302, %v1673
  %v2304 = vpop.permute.xlu0 %2303
  %2307 = vset.pattern.permute.xlu0 0
  %2308 = vperm.xlu0 %2307, %v1674
  %v2309 = vpop.permute.xlu0 %2308
  %2312 = vset.pattern.permute.xlu0 0
  %2313 = vperm.xlu0 %2312, %v1675
  %v2314 = vpop.permute.xlu0 %2313
  %2317 = vset.pattern.permute.xlu0 0
  %2318 = vperm.xlu0 %2317, %v1676
  %v2319 = vpop.permute.xlu0 %2318
  %2322 = vset.pattern.permute.xlu0 0
  %2323 = vperm.xlu0 %2322, %v1677
  %v2324 = vpop.permute.xlu0 %2323
  %2327 = vset.pattern.permute.xlu0 0
  %2328 = vperm.xlu0 %2327, %v1678
  %v2329 = vpop.permute.xlu0 %2328
  %2332 = vset.pattern.permute.xlu0 0
  %2333 = vperm.xlu0 %2332, %v1679
  %v2334 = vpop.permute.xlu0 %2333
  %2337 = vset.pattern.permute.xlu0 0
  %2338 = vperm.xlu0 %2337, %v1680
  %v2339 = vpop.permute.xlu0 %2338
  %2342 = vset.pattern.permute.xlu0 0
  %2343 = vperm.xlu0 %2342, %v1681
  %v2344 = vpop.permute.xlu0 %2343
  %2347 = vset.pattern.permute.xlu0 0
  %2348 = vperm.xlu0 %2347, %v1682
  %v2349 = vpop.permute.xlu0 %2348
  %2352 = vset.pattern.permute.xlu0 0
  %2353 = vperm.xlu0 %2352, %v1683
  %v2354 = vpop.permute.xlu0 %2353
  %2357 = vset.pattern.permute.xlu0 0
  %2358 = vperm.xlu0 %2357, %v1684
  %v2359 = vpop.permute.xlu0 %2358
  %2362 = vset.pattern.permute.xlu0 0
  %2363 = vperm.xlu0 %2362, %v1685
  %v2364 = vpop.permute.xlu0 %2363
  %2367 = vset.pattern.permute.xlu0 0
  %2368 = vperm.xlu0 %2367, %v1686
  %v2369 = vpop.permute.xlu0 %2368
  %2372 = vset.pattern.permute.xlu0 0
  %2373 = vperm.xlu0 %2372, %v1687
  %v2374 = vpop.permute.xlu0 %2373
  %2377 = vset.pattern.permute.xlu0 0
  %2378 = vperm.xlu0 %2377, %v1688
  %v2379 = vpop.permute.xlu0 %2378
  %2382 = vset.pattern.permute.xlu0 0
  %2383 = vperm.xlu0 %2382, %v1689
  %v2384 = vpop.permute.xlu0 %2383
  %2387 = vset.pattern.permute.xlu0 0
  %2388 = vperm.xlu0 %2387, %v1690
  %v2389 = vpop.permute.xlu0 %2388
  %2392 = vset.pattern.permute.xlu0 0
  %2393 = vperm.xlu0 %2392, %v1691
  %v2394 = vpop.permute.xlu0 %2393
  %v2396 = vadd.f32 %v2012, %v2079
  %v2397 = vadd.f32 %v2013, %v2084
  %v2398 = vadd.f32 %v2014, %v2089
  %v2399 = vadd.f32 %v2015, %v2094
  %v2400 = vadd.f32 %v2016, %v2099
  %v2401 = vadd.f32 %v2017, %v2104
  %v2402 = vadd.f32 %v2018, %v2109
  %v2403 = vadd.f32 %v2019, %v2114
  %v2404 = vadd.f32 %v2020, %v2119
  %v2405 = vadd.f32 %v2021, %v2124
  %v2406 = vadd.f32 %v2022, %v2129
  %v2407 = vadd.f32 %v2023, %v2134
  %v2408 = vadd.f32 %v2024, %v2139
  %v2409 = vadd.f32 %v2025, %v2144
  %v2410 = vadd.f32 %v2026, %v2149
  %v2411 = vadd.f32 %v2027, %v2154
  %v2412 = vadd.f32 %v2028, %v2159
  %v2413 = vadd.f32 %v2029, %v2164
  %v2414 = vadd.f32 %v2030, %v2169
  %v2415 = vadd.f32 %v2031, %v2174
  %v2416 = vadd.f32 %v2032, %v2179
  %v2417 = vadd.f32 %v2033, %v2184
  %v2418 = vadd.f32 %v2034, %v2189
  %v2419 = vadd.f32 %v2035, %v2194
  %v2420 = vadd.f32 %v2036, %v2199
  %v2421 = vadd.f32 %v2037, %v2204
  %v2422 = vadd.f32 %v2038, %v2209
  %v2423 = vadd.f32 %v2039, %v2214
  %v2424 = vadd.f32 %v2040, %v2219
  %v2425 = vadd.f32 %v2041, %v2224
  %v2426 = vadd.f32 %v2042, %v2229
  %v2427 = vadd.f32 %v2043, %v2234
  %v2428 = vadd.f32 %v2044, %v2239
  %v2429 = vadd.f32 %v2045, %v2244
  %v2430 = vadd.f32 %v2046, %v2249
  %v2431 = vadd.f32 %v2047, %v2254
  %v2432 = vadd.f32 %v2048, %v2259
  %v2433 = vadd.f32 %v2049, %v2264
  %v2434 = vadd.f32 %v2050, %v2269
  %v2435 = vadd.f32 %v2051, %v2274
  %v2436 = vadd.f32 %v2052, %v2279
  %v2437 = vadd.f32 %v2053, %v2284
  %v2438 = vadd.f32 %v2054, %v2289
  %v2439 = vadd.f32 %v2055, %v2294
  %v2440 = vadd.f32 %v2056, %v2299
  %v2441 = vadd.f32 %v2057, %v2304
  %v2442 = vadd.f32 %v2058, %v2309
  %v2443 = vadd.f32 %v2059, %v2314
  %v2444 = vadd.f32 %v2060, %v2319
  %v2445 = vadd.f32 %v2061, %v2324
  %v2446 = vadd.f32 %v2062, %v2329
  %v2447 = vadd.f32 %v2063, %v2334
  %v2448 = vadd.f32 %v2064, %v2339
  %v2449 = vadd.f32 %v2065, %v2344
  %v2450 = vadd.f32 %v2066, %v2349
  %v2451 = vadd.f32 %v2067, %v2354
  %v2452 = vadd.f32 %v2068, %v2359
  %v2453 = vadd.f32 %v2069, %v2364
  %v2454 = vadd.f32 %v2070, %v2369
  %v2455 = vadd.f32 %v2071, %v2374
  %v2456 = vadd.f32 %v2072, %v2379
  %v2457 = vadd.f32 %v2073, %v2384
  %v2458 = vadd.f32 %v2074, %v2389
  %v2459 = vadd.f32 %v2075, %v2394
  %v2460 = vpack.c.bf16 %v2396, %v2396
  %v2461 = vpack.c.bf16 %v2397, %v2397
  %v2462 = vpack.c.bf16 %v2398, %v2398
  %v2463 = vpack.c.bf16 %v2399, %v2399
  %v2464 = vpack.c.bf16 %v2400, %v2400
  %v2465 = vpack.c.bf16 %v2401, %v2401
  %v2466 = vpack.c.bf16 %v2402, %v2402
  %v2467 = vpack.c.bf16 %v2403, %v2403
  %v2468 = vpack.c.bf16 %v2404, %v2404
  %v2469 = vpack.c.bf16 %v2405, %v2405
  %v2470 = vpack.c.bf16 %v2406, %v2406
  %v2471 = vpack.c.bf16 %v2407, %v2407
  %v2472 = vpack.c.bf16 %v2408, %v2408
  %v2473 = vpack.c.bf16 %v2409, %v2409
  %v2474 = vpack.c.bf16 %v2410, %v2410
  %v2475 = vpack.c.bf16 %v2411, %v2411
  %v2476 = vpack.c.bf16 %v2412, %v2412
  %v2477 = vpack.c.bf16 %v2413, %v2413
  %v2478 = vpack.c.bf16 %v2414, %v2414
  %v2479 = vpack.c.bf16 %v2415, %v2415
  %v2480 = vpack.c.bf16 %v2416, %v2416
  %v2481 = vpack.c.bf16 %v2417, %v2417
  %v2482 = vpack.c.bf16 %v2418, %v2418
  %v2483 = vpack.c.bf16 %v2419, %v2419
  %v2484 = vpack.c.bf16 %v2420, %v2420
  %v2485 = vpack.c.bf16 %v2421, %v2421
  %v2486 = vpack.c.bf16 %v2422, %v2422
  %v2487 = vpack.c.bf16 %v2423, %v2423
  %v2488 = vpack.c.bf16 %v2424, %v2424
  %v2489 = vpack.c.bf16 %v2425, %v2425
  %v2490 = vpack.c.bf16 %v2426, %v2426
  %v2491 = vpack.c.bf16 %v2427, %v2427
  %v2492 = vpack.c.bf16 %v2428, %v2428
  %v2493 = vpack.c.bf16 %v2429, %v2429
  %v2494 = vpack.c.bf16 %v2430, %v2430
  %v2495 = vpack.c.bf16 %v2431, %v2431
  %v2496 = vpack.c.bf16 %v2432, %v2432
  %v2497 = vpack.c.bf16 %v2433, %v2433
  %v2498 = vpack.c.bf16 %v2434, %v2434
  %v2499 = vpack.c.bf16 %v2435, %v2435
  %v2500 = vpack.c.bf16 %v2436, %v2436
  %v2501 = vpack.c.bf16 %v2437, %v2437
  %v2502 = vpack.c.bf16 %v2438, %v2438
  %v2503 = vpack.c.bf16 %v2439, %v2439
  %v2504 = vpack.c.bf16 %v2440, %v2440
  %v2505 = vpack.c.bf16 %v2441, %v2441
  %v2506 = vpack.c.bf16 %v2442, %v2442
  %v2507 = vpack.c.bf16 %v2443, %v2443
  %v2508 = vpack.c.bf16 %v2444, %v2444
  %v2509 = vpack.c.bf16 %v2445, %v2445
  %v2510 = vpack.c.bf16 %v2446, %v2446
  %v2511 = vpack.c.bf16 %v2447, %v2447
  %v2512 = vpack.c.bf16 %v2448, %v2448
  %v2513 = vpack.c.bf16 %v2449, %v2449
  %v2514 = vpack.c.bf16 %v2450, %v2450
  %v2515 = vpack.c.bf16 %v2451, %v2451
  %v2516 = vpack.c.bf16 %v2452, %v2452
  %v2517 = vpack.c.bf16 %v2453, %v2453
  %v2518 = vpack.c.bf16 %v2454, %v2454
  %v2519 = vpack.c.bf16 %v2455, %v2455
  %v2520 = vpack.c.bf16 %v2456, %v2456
  %v2521 = vpack.c.bf16 %v2457, %v2457
  %v2522 = vpack.c.bf16 %v2458, %v2458
  %v2523 = vpack.c.bf16 %v2459, %v2459
  %v2524 = vld [vmem:[%s3] sm:$0xff]
  %v2525 = vld [vmem:[%s3 + $0x8] sm:$0xff]
  %v2526 = vld [vmem:[%s3 + $0x10] sm:$0xff]
  %v2527 = vld [vmem:[%s3 + $0x18] sm:$0xff]
  %v2528 = vld [vmem:[%s3 + $0x20] sm:$0xff]
  %v2529 = vld [vmem:[%s3 + $0x28] sm:$0xff]
  %v2530 = vld [vmem:[%s3 + $0x30] sm:$0xff]
  %v2531 = vld [vmem:[%s3 + $0x38] sm:$0xff]
  %v2532 = vld [vmem:[%s3 + $0x40] sm:$0xff]
  %v2533 = vld [vmem:[%s3 + $0x48] sm:$0xff]
  %v2534 = vld [vmem:[%s3 + $0x50] sm:$0xff]
  %v2535 = vld [vmem:[%s3 + $0x58] sm:$0xff]
  %v2536 = vld [vmem:[%s3 + $0x60] sm:$0xff]
  %v2537 = vld [vmem:[%s3 + $0x68] sm:$0xff]
  %v2538 = vld [vmem:[%s3 + $0x70] sm:$0xff]
  %v2539 = vld [vmem:[%s3 + $0x78] sm:$0xff]
  %v2540 = vld [vmem:[%s4] sm:$0xf]
  %v2541 = vld [vmem:[%s4 + $0x4] sm:$0xf]
  %v2542 = vld [vmem:[%s4 + $0x8] sm:$0xf]
  %v2543 = vld [vmem:[%s4 + $0xc] sm:$0xf]
  %v2544 = vld [vmem:[%s4 + $0x10] sm:$0xf]
  %v2545 = vld [vmem:[%s4 + $0x14] sm:$0xf]
  %v2546 = vld [vmem:[%s4 + $0x18] sm:$0xf]
  %v2547 = vld [vmem:[%s4 + $0x1c] sm:$0xf]
  %v2548 = vld [vmem:[%s4 + $0x20] sm:$0xf]
  %v2549 = vld [vmem:[%s4 + $0x24] sm:$0xf]
  %v2550 = vld [vmem:[%s4 + $0x28] sm:$0xf]
  %v2551 = vld [vmem:[%s4 + $0x2c] sm:$0xf]
  %v2552 = vld [vmem:[%s4 + $0x30] sm:$0xf]
  %v2553 = vld [vmem:[%s4 + $0x34] sm:$0xf]
  %v2554 = vld [vmem:[%s4 + $0x38] sm:$0xf]
  %v2555 = vld [vmem:[%s4 + $0x3c] sm:$0xf]
  %v2556 = vld [vmem:[%s4 + $0x40] sm:$0xf]
  %v2557 = vld [vmem:[%s4 + $0x44] sm:$0xf]
  %v2558 = vld [vmem:[%s4 + $0x48] sm:$0xf]
  %v2559 = vld [vmem:[%s4 + $0x4c] sm:$0xf]
  %v2560 = vld [vmem:[%s4 + $0x50] sm:$0xf]
  %v2561 = vld [vmem:[%s4 + $0x54] sm:$0xf]
  %v2562 = vld [vmem:[%s4 + $0x58] sm:$0xf]
  %v2563 = vld [vmem:[%s4 + $0x5c] sm:$0xf]
  %v2564 = vld [vmem:[%s4 + $0x60] sm:$0xf]
  %v2565 = vld [vmem:[%s4 + $0x64] sm:$0xf]
  %v2566 = vld [vmem:[%s4 + $0x68] sm:$0xf]
  %v2567 = vld [vmem:[%s4 + $0x6c] sm:$0xf]
  %v2568 = vld [vmem:[%s4 + $0x70] sm:$0xf]
  %v2569 = vld [vmem:[%s4 + $0x74] sm:$0xf]
  %v2570 = vld [vmem:[%s4 + $0x78] sm:$0xf]
  %v2571 = vld [vmem:[%s4 + $0x7c] sm:$0xf]
  %v2588 = vunpack.c.l.b16 %v2524
  %v2589 = vunpack.c.h.b16 %v2524
  %v2590 = vunpack.c.l.b16 %v2525
  %v2591 = vunpack.c.h.b16 %v2525
  %v2592 = vunpack.c.l.b16 %v2526
  %v2593 = vunpack.c.h.b16 %v2526
  %v2594 = vunpack.c.l.b16 %v2527
  %v2595 = vunpack.c.h.b16 %v2527
  %v2596 = vunpack.c.l.b16 %v2528
  %v2597 = vunpack.c.h.b16 %v2528
  %v2598 = vunpack.c.l.b16 %v2529
  %v2599 = vunpack.c.h.b16 %v2529
  %v2600 = vunpack.c.l.b16 %v2530
  %v2601 = vunpack.c.h.b16 %v2530
  %v2602 = vunpack.c.l.b16 %v2531
  %v2603 = vunpack.c.h.b16 %v2531
  %v2604 = vunpack.c.l.b16 %v2532
  %v2605 = vunpack.c.h.b16 %v2532
  %v2606 = vunpack.c.l.b16 %v2533
  %v2607 = vunpack.c.h.b16 %v2533
  %v2608 = vunpack.c.l.b16 %v2534
  %v2609 = vunpack.c.h.b16 %v2534
  %v2610 = vunpack.c.l.b16 %v2535
  %v2611 = vunpack.c.h.b16 %v2535
  %v2612 = vunpack.c.l.b16 %v2536
  %v2613 = vunpack.c.h.b16 %v2536
  %v2614 = vunpack.c.l.b16 %v2537
  %v2615 = vunpack.c.h.b16 %v2537
  %v2616 = vunpack.c.l.b16 %v2538
  %v2617 = vunpack.c.h.b16 %v2538
  %v2618 = vunpack.c.l.b16 %v2539
  %v2619 = vunpack.c.h.b16 %v2539
  %v2620 = vpack.c.b16 %v2590, %v2588
  %v2621 = vpack.c.b16 %v2591, %v2589
  %v2622 = vpack.c.b16 %v2594, %v2592
  %v2623 = vpack.c.b16 %v2595, %v2593
  %v2624 = vpack.c.b16 %v2598, %v2596
  %v2625 = vpack.c.b16 %v2599, %v2597
  %v2626 = vpack.c.b16 %v2602, %v2600
  %v2627 = vpack.c.b16 %v2603, %v2601
  %v2628 = vpack.c.b16 %v2606, %v2604
  %v2629 = vpack.c.b16 %v2607, %v2605
  %v2630 = vpack.c.b16 %v2610, %v2608
  %v2631 = vpack.c.b16 %v2611, %v2609
  %v2632 = vpack.c.b16 %v2614, %v2612
  %v2633 = vpack.c.b16 %v2615, %v2613
  %v2634 = vpack.c.b16 %v2618, %v2616
  %v2635 = vpack.c.b16 %v2619, %v2617
  %v2684 = vunpack.c.l.b16 %v2460
  %v2685 = vunpack.c.l.b16 %v2461
  %v2686 = vunpack.c.l.b16 %v2462
  %v2687 = vunpack.c.l.b16 %v2463
  %v2688 = vunpack.c.l.b16 %v2464
  %v2689 = vunpack.c.l.b16 %v2465
  %v2690 = vunpack.c.l.b16 %v2466
  %v2691 = vunpack.c.l.b16 %v2467
  %v2692 = vunpack.c.l.b16 %v2468
  %v2693 = vunpack.c.l.b16 %v2469
  %v2694 = vunpack.c.l.b16 %v2470
  %v2695 = vunpack.c.l.b16 %v2471
  %v2696 = vunpack.c.l.b16 %v2472
  %v2697 = vunpack.c.l.b16 %v2473
  %v2698 = vunpack.c.l.b16 %v2474
  %v2699 = vunpack.c.l.b16 %v2475
  %v2700 = vunpack.c.l.b16 %v2476
  %v2701 = vunpack.c.l.b16 %v2477
  %v2702 = vunpack.c.l.b16 %v2478
  %v2703 = vunpack.c.l.b16 %v2479
  %v2704 = vunpack.c.l.b16 %v2480
  %v2705 = vunpack.c.l.b16 %v2481
  %v2706 = vunpack.c.l.b16 %v2482
  %v2707 = vunpack.c.l.b16 %v2483
  %v2708 = vunpack.c.l.b16 %v2484
  %v2709 = vunpack.c.l.b16 %v2485
  %v2710 = vunpack.c.l.b16 %v2486
  %v2711 = vunpack.c.l.b16 %v2487
  %v2712 = vunpack.c.l.b16 %v2488
  %v2713 = vunpack.c.l.b16 %v2489
  %v2714 = vunpack.c.l.b16 %v2490
  %v2715 = vunpack.c.l.b16 %v2491
  %v2716 = vpack.c.b16 %v2685, %v2684
  %v2717 = vpack.c.b16 %v2687, %v2686
  %v2718 = vpack.c.b16 %v2689, %v2688
  %v2719 = vpack.c.b16 %v2691, %v2690
  %v2720 = vpack.c.b16 %v2693, %v2692
  %v2721 = vpack.c.b16 %v2695, %v2694
  %v2722 = vpack.c.b16 %v2697, %v2696
  %v2723 = vpack.c.b16 %v2699, %v2698
  %v2724 = vpack.c.b16 %v2701, %v2700
  %v2725 = vpack.c.b16 %v2703, %v2702
  %v2726 = vpack.c.b16 %v2705, %v2704
  %v2727 = vpack.c.b16 %v2707, %v2706
  %v2728 = vpack.c.b16 %v2709, %v2708
  %v2729 = vpack.c.b16 %v2711, %v2710
  %v2730 = vpack.c.b16 %v2713, %v2712
  %v2731 = vpack.c.b16 %v2715, %v2714
  %2748 = vmatpush.bf16.msra.mxu0 %v2723
  %2749 = vmatpush.bf16.msra.mxu0 %v2722
  %2750 = vmatpush.bf16.msra.mxu0 %v2721
  %2751 = vmatpush.bf16.msra.mxu0 %v2720
  %2752 = vmatpush.bf16.msra.mxu0 %v2719
  %2753 = vmatpush.bf16.msra.mxu0 %v2718
  %2754 = vmatpush.bf16.msra.mxu0 %v2717
  %2755 = vmatpush.bf16.msra.mxu0 %v2716
  %2756 = vmatmul.bf16.gmra.mxu0 %v2620
  %v2757 = vpop.f32.mrf.mxu0
  %v2758 = vadd.f32 0.0, %v2757
  %v2759 = vpop.f32.mrf.mxu0
  %v2760 = vadd.f32 0.0, %v2759
  %2761 = vmatmul.bf16.gmra.mxu0 %v2622
  %v2762 = vpop.f32.mrf.mxu0
  %v2763 = vadd.f32 0.0, %v2762
  %v2764 = vpop.f32.mrf.mxu0
  %v2765 = vadd.f32 0.0, %v2764
  %2766 = vmatmul.bf16.gmra.mxu0 %v2624
  %v2767 = vpop.f32.mrf.mxu0
  %v2768 = vadd.f32 0.0, %v2767
  %v2769 = vpop.f32.mrf.mxu0
  %v2770 = vadd.f32 0.0, %v2769
  %2771 = vmatmul.bf16.gmra.mxu0 %v2626
  %v2772 = vpop.f32.mrf.mxu0
  %v2773 = vadd.f32 0.0, %v2772
  %v2774 = vpop.f32.mrf.mxu0
  %v2775 = vadd.f32 0.0, %v2774
  %2776 = vmatmul.bf16.gmra.mxu0 %v2628
  %v2777 = vpop.f32.mrf.mxu0
  %v2778 = vadd.f32 0.0, %v2777
  %v2779 = vpop.f32.mrf.mxu0
  %v2780 = vadd.f32 0.0, %v2779
  %2781 = vmatmul.bf16.gmra.mxu0 %v2630
  %v2782 = vpop.f32.mrf.mxu0
  %v2783 = vadd.f32 0.0, %v2782
  %v2784 = vpop.f32.mrf.mxu0
  %v2785 = vadd.f32 0.0, %v2784
  %2786 = vmatmul.bf16.gmra.mxu0 %v2632
  %v2787 = vpop.f32.mrf.mxu0
  %v2788 = vadd.f32 0.0, %v2787
  %v2789 = vpop.f32.mrf.mxu0
  %v2790 = vadd.f32 0.0, %v2789
  %2791 = vmatmul.bf16.gmra.mxu0 %v2634
  %v2792 = vpop.f32.mrf.mxu0
  %v2793 = vadd.f32 0.0, %v2792
  %v2794 = vpop.f32.mrf.mxu0
  %v2795 = vadd.f32 0.0, %v2794
  %2796 = vdwg.mxu0
  %2797 = vmatpush.bf16.msra.mxu0 %v2731
  %2798 = vmatpush.bf16.msra.mxu0 %v2730
  %2799 = vmatpush.bf16.msra.mxu0 %v2729
  %2800 = vmatpush.bf16.msra.mxu0 %v2728
  %2801 = vmatpush.bf16.msra.mxu0 %v2727
  %2802 = vmatpush.bf16.msra.mxu0 %v2726
  %2803 = vmatpush.bf16.msra.mxu0 %v2725
  %2804 = vmatpush.bf16.msra.mxu0 %v2724
  %2805 = vmatmul.bf16.gmra.mxu0 %v2621
  %v2806 = vpop.f32.mrf.mxu0
  %v2807 = vadd.f32 %v2758, %v2806
  %v2808 = vpop.f32.mrf.mxu0
  %v2809 = vadd.f32 %v2760, %v2808
  %2810 = vmatmul.bf16.gmra.mxu0 %v2623
  %v2811 = vpop.f32.mrf.mxu0
  %v2812 = vadd.f32 %v2763, %v2811
  %v2813 = vpop.f32.mrf.mxu0
  %v2814 = vadd.f32 %v2765, %v2813
  %2815 = vmatmul.bf16.gmra.mxu0 %v2625
  %v2816 = vpop.f32.mrf.mxu0
  %v2817 = vadd.f32 %v2768, %v2816
  %v2818 = vpop.f32.mrf.mxu0
  %v2819 = vadd.f32 %v2770, %v2818
  %2820 = vmatmul.bf16.gmra.mxu0 %v2627
  %v2821 = vpop.f32.mrf.mxu0
  %v2822 = vadd.f32 %v2773, %v2821
  %v2823 = vpop.f32.mrf.mxu0
  %v2824 = vadd.f32 %v2775, %v2823
  %2825 = vmatmul.bf16.gmra.mxu0 %v2629
  %v2826 = vpop.f32.mrf.mxu0
  %v2827 = vadd.f32 %v2778, %v2826
  %v2828 = vpop.f32.mrf.mxu0
  %v2829 = vadd.f32 %v2780, %v2828
  %2830 = vmatmul.bf16.gmra.mxu0 %v2631
  %v2831 = vpop.f32.mrf.mxu0
  %v2832 = vadd.f32 %v2783, %v2831
  %v2833 = vpop.f32.mrf.mxu0
  %v2834 = vadd.f32 %v2785, %v2833
  %2835 = vmatmul.bf16.gmra.mxu0 %v2633
  %v2836 = vpop.f32.mrf.mxu0
  %v2837 = vadd.f32 %v2788, %v2836
  %v2838 = vpop.f32.mrf.mxu0
  %v2839 = vadd.f32 %v2790, %v2838
  %2840 = vmatmul.bf16.gmra.mxu0 %v2635
  %v2841 = vpop.f32.mrf.mxu0
  %v2842 = vadd.f32 %v2793, %v2841
  %v2843 = vpop.f32.mrf.mxu0
  %v2844 = vadd.f32 %v2795, %v2843
  %2845 = vdwg.mxu0
  %v2846 = vmax.f32 %v2807, 0.0
  %v2847 = vmax.f32 %v2809, 0.0
  %v2848 = vmax.f32 %v2812, 0.0
  %v2849 = vmax.f32 %v2814, 0.0
  %v2850 = vmax.f32 %v2817, 0.0
  %v2851 = vmax.f32 %v2819, 0.0
  %v2852 = vmax.f32 %v2822, 0.0
  %v2853 = vmax.f32 %v2824, 0.0
  %v2854 = vmax.f32 %v2827, 0.0
  %v2855 = vmax.f32 %v2829, 0.0
  %v2856 = vmax.f32 %v2832, 0.0
  %v2857 = vmax.f32 %v2834, 0.0
  %v2858 = vmax.f32 %v2837, 0.0
  %v2859 = vmax.f32 %v2839, 0.0
  %v2860 = vmax.f32 %v2842, 0.0
  %v2861 = vmax.f32 %v2844, 0.0
  %v2862 = vpack.c.bf16 %v2847, %v2846
  %v2863 = vpack.c.bf16 %v2849, %v2848
  %v2864 = vpack.c.bf16 %v2851, %v2850
  %v2865 = vpack.c.bf16 %v2853, %v2852
  %v2866 = vpack.c.bf16 %v2855, %v2854
  %v2867 = vpack.c.bf16 %v2857, %v2856
  %v2868 = vpack.c.bf16 %v2859, %v2858
  %v2869 = vpack.c.bf16 %v2861, %v2860
  %v2902 = vunpack.c.l.b16 %v2540
  %v2903 = vunpack.c.l.b16 %v2541
  %v2904 = vunpack.c.l.b16 %v2542
  %v2905 = vunpack.c.l.b16 %v2543
  %v2906 = vunpack.c.l.b16 %v2544
  %v2907 = vunpack.c.l.b16 %v2545
  %v2908 = vunpack.c.l.b16 %v2546
  %v2909 = vunpack.c.l.b16 %v2547
  %v2910 = vunpack.c.l.b16 %v2548
  %v2911 = vunpack.c.l.b16 %v2549
  %v2912 = vunpack.c.l.b16 %v2550
  %v2913 = vunpack.c.l.b16 %v2551
  %v2914 = vunpack.c.l.b16 %v2552
  %v2915 = vunpack.c.l.b16 %v2553
  %v2916 = vunpack.c.l.b16 %v2554
  %v2917 = vunpack.c.l.b16 %v2555
  %v2918 = vunpack.c.l.b16 %v2556
  %v2919 = vunpack.c.l.b16 %v2557
  %v2920 = vunpack.c.l.b16 %v2558
  %v2921 = vunpack.c.l.b16 %v2559
  %v2922 = vunpack.c.l.b16 %v2560
  %v2923 = vunpack.c.l.b16 %v2561
  %v2924 = vunpack.c.l.b16 %v2562
  %v2925 = vunpack.c.l.b16 %v2563
  %v2926 = vunpack.c.l.b16 %v2564
  %v2927 = vunpack.c.l.b16 %v2565
  %v2928 = vunpack.c.l.b16 %v2566
  %v2929 = vunpack.c.l.b16 %v2567
  %v2930 = vunpack.c.l.b16 %v2568
  %v2931 = vunpack.c.l.b16 %v2569
  %v2932 = vunpack.c.l.b16 %v2570
  %v2933 = vunpack.c.l.b16 %v2571
  %v2934 = vpack.c.b16 %v2903, %v2902
  %v2935 = vpack.c.b16 %v2905, %v2904
  %v2936 = vpack.c.b16 %v2907, %v2906
  %v2937 = vpack.c.b16 %v2909, %v2908
  %v2938 = vpack.c.b16 %v2911, %v2910
  %v2939 = vpack.c.b16 %v2913, %v2912
  %v2940 = vpack.c.b16 %v2915, %v2914
  %v2941 = vpack.c.b16 %v2917, %v2916
  %v2942 = vpack.c.b16 %v2919, %v2918
  %v2943 = vpack.c.b16 %v2921, %v2920
  %v2944 = vpack.c.b16 %v2923, %v2922
  %v2945 = vpack.c.b16 %v2925, %v2924
  %v2946 = vpack.c.b16 %v2927, %v2926
  %v2947 = vpack.c.b16 %v2929, %v2928
  %v2948 = vpack.c.b16 %v2931, %v2930
  %v2949 = vpack.c.b16 %v2933, %v2932
  %2966 = vmatpush.bf16.msra.mxu0 %v2869
  %2967 = vmatpush.bf16.msra.mxu0 %v2868
  %2968 = vmatpush.bf16.msra.mxu0 %v2867
  %2969 = vmatpush.bf16.msra.mxu0 %v2866
  %2970 = vmatpush.bf16.msra.mxu0 %v2865
  %2971 = vmatpush.bf16.msra.mxu0 %v2864
  %2972 = vmatpush.bf16.msra.mxu0 %v2863
  %2973 = vmatpush.bf16.msra.mxu0 %v2862
  %2974 = vmatmul.bf16.gmra.mxu0 %v2934
  %v2975 = vpop.f32.mrf.mxu0
  %v2976 = vadd.f32 0.0, %v2975
  %v2977 = vpop.f32.mrf.mxu0
  %v2978 = vadd.f32 0.0, %v2977
  %2979 = vmatmul.bf16.gmra.mxu0 %v2935
  %v2980 = vpop.f32.mrf.mxu0
  %v2981 = vadd.f32 0.0, %v2980
  %v2982 = vpop.f32.mrf.mxu0
  %v2983 = vadd.f32 0.0, %v2982
  %2984 = vmatmul.bf16.gmra.mxu0 %v2936
  %v2985 = vpop.f32.mrf.mxu0
  %v2986 = vadd.f32 0.0, %v2985
  %v2987 = vpop.f32.mrf.mxu0
  %v2988 = vadd.f32 0.0, %v2987
  %2989 = vmatmul.bf16.gmra.mxu0 %v2937
  %v2990 = vpop.f32.mrf.mxu0
  %v2991 = vadd.f32 0.0, %v2990
  %v2992 = vpop.f32.mrf.mxu0
  %v2993 = vadd.f32 0.0, %v2992
  %2994 = vmatmul.bf16.gmra.mxu0 %v2938
  %v2995 = vpop.f32.mrf.mxu0
  %v2996 = vadd.f32 0.0, %v2995
  %v2997 = vpop.f32.mrf.mxu0
  %v2998 = vadd.f32 0.0, %v2997
  %2999 = vmatmul.bf16.gmra.mxu0 %v2939
  %v3000 = vpop.f32.mrf.mxu0
  %v3001 = vadd.f32 0.0, %v3000
  %v3002 = vpop.f32.mrf.mxu0
  %v3003 = vadd.f32 0.0, %v3002
  %3004 = vmatmul.bf16.gmra.mxu0 %v2940
  %v3005 = vpop.f32.mrf.mxu0
  %v3006 = vadd.f32 0.0, %v3005
  %v3007 = vpop.f32.mrf.mxu0
  %v3008 = vadd.f32 0.0, %v3007
  %3009 = vmatmul.bf16.gmra.mxu0 %v2941
  %v3010 = vpop.f32.mrf.mxu0
  %v3011 = vadd.f32 0.0, %v3010
  %v3012 = vpop.f32.mrf.mxu0
  %v3013 = vadd.f32 0.0, %v3012
  %3014 = vmatmul.bf16.gmra.mxu0 %v2942
  %v3015 = vpop.f32.mrf.mxu0
  %v3016 = vadd.f32 0.0, %v3015
  %v3017 = vpop.f32.mrf.mxu0
  %v3018 = vadd.f32 0.0, %v3017
  %3019 = vmatmul.bf16.gmra.mxu0 %v2943
  %v3020 = vpop.f32.mrf.mxu0
  %v3021 = vadd.f32 0.0, %v3020
  %v3022 = vpop.f32.mrf.mxu0
  %v3023 = vadd.f32 0.0, %v3022
  %3024 = vmatmul.bf16.gmra.mxu0 %v2944
  %v3025 = vpop.f32.mrf.mxu0
  %v3026 = vadd.f32 0.0, %v3025
  %v3027 = vpop.f32.mrf.mxu0
  %v3028 = vadd.f32 0.0, %v3027
  %3029 = vmatmul.bf16.gmra.mxu0 %v2945
  %v3030 = vpop.f32.mrf.mxu0
  %v3031 = vadd.f32 0.0, %v3030
  %v3032 = vpop.f32.mrf.mxu0
  %v3033 = vadd.f32 0.0, %v3032
  %3034 = vmatmul.bf16.gmra.mxu0 %v2946
  %v3035 = vpop.f32.mrf.mxu0
  %v3036 = vadd.f32 0.0, %v3035
  %v3037 = vpop.f32.mrf.mxu0
  %v3038 = vadd.f32 0.0, %v3037
  %3039 = vmatmul.bf16.gmra.mxu0 %v2947
  %v3040 = vpop.f32.mrf.mxu0
  %v3041 = vadd.f32 0.0, %v3040
  %v3042 = vpop.f32.mrf.mxu0
  %v3043 = vadd.f32 0.0, %v3042
  %3044 = vmatmul.bf16.gmra.mxu0 %v2948
  %v3045 = vpop.f32.mrf.mxu0
  %v3046 = vadd.f32 0.0, %v3045
  %v3047 = vpop.f32.mrf.mxu0
  %v3048 = vadd.f32 0.0, %v3047
  %3049 = vmatmul.bf16.gmra.mxu0 %v2949
  %v3050 = vpop.f32.mrf.mxu0
  %v3051 = vadd.f32 0.0, %v3050
  %v3052 = vpop.f32.mrf.mxu0
  %v3053 = vadd.f32 0.0, %v3052
  %3054 = vdwg.mxu0
  %v3087 = vunpack.c.l.b16 %v2492
  %v3088 = vunpack.c.l.b16 %v2493
  %v3089 = vunpack.c.l.b16 %v2494
  %v3090 = vunpack.c.l.b16 %v2495
  %v3091 = vunpack.c.l.b16 %v2496
  %v3092 = vunpack.c.l.b16 %v2497
  %v3093 = vunpack.c.l.b16 %v2498
  %v3094 = vunpack.c.l.b16 %v2499
  %v3095 = vunpack.c.l.b16 %v2500
  %v3096 = vunpack.c.l.b16 %v2501
  %v3097 = vunpack.c.l.b16 %v2502
  %v3098 = vunpack.c.l.b16 %v2503
  %v3099 = vunpack.c.l.b16 %v2504
  %v3100 = vunpack.c.l.b16 %v2505
  %v3101 = vunpack.c.l.b16 %v2506
  %v3102 = vunpack.c.l.b16 %v2507
  %v3103 = vunpack.c.l.b16 %v2508
  %v3104 = vunpack.c.l.b16 %v2509
  %v3105 = vunpack.c.l.b16 %v2510
  %v3106 = vunpack.c.l.b16 %v2511
  %v3107 = vunpack.c.l.b16 %v2512
  %v3108 = vunpack.c.l.b16 %v2513
  %v3109 = vunpack.c.l.b16 %v2514
  %v3110 = vunpack.c.l.b16 %v2515
  %v3111 = vunpack.c.l.b16 %v2516
  %v3112 = vunpack.c.l.b16 %v2517
  %v3113 = vunpack.c.l.b16 %v2518
  %v3114 = vunpack.c.l.b16 %v2519
  %v3115 = vunpack.c.l.b16 %v2520
  %v3116 = vunpack.c.l.b16 %v2521
  %v3117 = vunpack.c.l.b16 %v2522
  %v3118 = vunpack.c.l.b16 %v2523
  %v3119 = vpack.c.b16 %v3088, %v3087
  %v3120 = vpack.c.b16 %v3090, %v3089
  %v3121 = vpack.c.b16 %v3092, %v3091
  %v3122 = vpack.c.b16 %v3094, %v3093
  %v3123 = vpack.c.b16 %v3096, %v3095
  %v3124 = vpack.c.b16 %v3098, %v3097
  %v3125 = vpack.c.b16 %v3100, %v3099
  %v3126 = vpack.c.b16 %v3102, %v3101
  %v3127 = vpack.c.b16 %v3104, %v3103
  %v3128 = vpack.c.b16 %v3106, %v3105
  %v3129 = vpack.c.b16 %v3108, %v3107
  %v3130 = vpack.c.b16 %v3110, %v3109
  %v3131 = vpack.c.b16 %v3112, %v3111
  %v3132 = vpack.c.b16 %v3114, %v3113
  %v3133 = vpack.c.b16 %v3116, %v3115
  %v3134 = vpack.c.b16 %v3118, %v3117
  %3151 = vmatpush.bf16.msra.mxu0 %v3126
  %3152 = vmatpush.bf16.msra.mxu0 %v3125
  %3153 = vmatpush.bf16.msra.mxu0 %v3124
  %3154 = vmatpush.bf16.msra.mxu0 %v3123
  %3155 = vmatpush.bf16.msra.mxu0 %v3122
  %3156 = vmatpush.bf16.msra.mxu0 %v3121
  %3157 = vmatpush.bf16.msra.mxu0 %v3120
  %3158 = vmatpush.bf16.msra.mxu0 %v3119
  %3159 = vmatmul.bf16.gmra.mxu0 %v2620
  %v3160 = vpop.f32.mrf.mxu0
  %v3161 = vadd.f32 0.0, %v3160
  %v3162 = vpop.f32.mrf.mxu0
  %v3163 = vadd.f32 0.0, %v3162
  %3164 = vmatmul.bf16.gmra.mxu0 %v2622
  %v3165 = vpop.f32.mrf.mxu0
  %v3166 = vadd.f32 0.0, %v3165
  %v3167 = vpop.f32.mrf.mxu0
  %v3168 = vadd.f32 0.0, %v3167
  %3169 = vmatmul.bf16.gmra.mxu0 %v2624
  %v3170 = vpop.f32.mrf.mxu0
  %v3171 = vadd.f32 0.0, %v3170
  %v3172 = vpop.f32.mrf.mxu0
  %v3173 = vadd.f32 0.0, %v3172
  %3174 = vmatmul.bf16.gmra.mxu0 %v2626
  %v3175 = vpop.f32.mrf.mxu0
  %v3176 = vadd.f32 0.0, %v3175
  %v3177 = vpop.f32.mrf.mxu0
  %v3178 = vadd.f32 0.0, %v3177
  %3179 = vmatmul.bf16.gmra.mxu0 %v2628
  %v3180 = vpop.f32.mrf.mxu0
  %v3181 = vadd.f32 0.0, %v3180
  %v3182 = vpop.f32.mrf.mxu0
  %v3183 = vadd.f32 0.0, %v3182
  %3184 = vmatmul.bf16.gmra.mxu0 %v2630
  %v3185 = vpop.f32.mrf.mxu0
  %v3186 = vadd.f32 0.0, %v3185
  %v3187 = vpop.f32.mrf.mxu0
  %v3188 = vadd.f32 0.0, %v3187
  %3189 = vmatmul.bf16.gmra.mxu0 %v2632
  %v3190 = vpop.f32.mrf.mxu0
  %v3191 = vadd.f32 0.0, %v3190
  %v3192 = vpop.f32.mrf.mxu0
  %v3193 = vadd.f32 0.0, %v3192
  %3194 = vmatmul.bf16.gmra.mxu0 %v2634
  %v3195 = vpop.f32.mrf.mxu0
  %v3196 = vadd.f32 0.0, %v3195
  %v3197 = vpop.f32.mrf.mxu0
  %v3198 = vadd.f32 0.0, %v3197
  %3199 = vdwg.mxu0
  %3200 = vmatpush.bf16.msra.mxu0 %v3134
  %3201 = vmatpush.bf16.msra.mxu0 %v3133
  %3202 = vmatpush.bf16.msra.mxu0 %v3132
  %3203 = vmatpush.bf16.msra.mxu0 %v3131
  %3204 = vmatpush.bf16.msra.mxu0 %v3130
  %3205 = vmatpush.bf16.msra.mxu0 %v3129
  %3206 = vmatpush.bf16.msra.mxu0 %v3128
  %3207 = vmatpush.bf16.msra.mxu0 %v3127
  %3208 = vmatmul.bf16.gmra.mxu0 %v2621
  %v3209 = vpop.f32.mrf.mxu0
  %v3210 = vadd.f32 %v3161, %v3209
  %v3211 = vpop.f32.mrf.mxu0
  %v3212 = vadd.f32 %v3163, %v3211
  %3213 = vmatmul.bf16.gmra.mxu0 %v2623
  %v3214 = vpop.f32.mrf.mxu0
  %v3215 = vadd.f32 %v3166, %v3214
  %v3216 = vpop.f32.mrf.mxu0
  %v3217 = vadd.f32 %v3168, %v3216
  %3218 = vmatmul.bf16.gmra.mxu0 %v2625
  %v3219 = vpop.f32.mrf.mxu0
  %v3220 = vadd.f32 %v3171, %v3219
  %v3221 = vpop.f32.mrf.mxu0
  %v3222 = vadd.f32 %v3173, %v3221
  %3223 = vmatmul.bf16.gmra.mxu0 %v2627
  %v3224 = vpop.f32.mrf.mxu0
  %v3225 = vadd.f32 %v3176, %v3224
  %v3226 = vpop.f32.mrf.mxu0
  %v3227 = vadd.f32 %v3178, %v3226
  %3228 = vmatmul.bf16.gmra.mxu0 %v2629
  %v3229 = vpop.f32.mrf.mxu0
  %v3230 = vadd.f32 %v3181, %v3229
  %v3231 = vpop.f32.mrf.mxu0
  %v3232 = vadd.f32 %v3183, %v3231
  %3233 = vmatmul.bf16.gmra.mxu0 %v2631
  %v3234 = vpop.f32.mrf.mxu0
  %v3235 = vadd.f32 %v3186, %v3234
  %v3236 = vpop.f32.mrf.mxu0
  %v3237 = vadd.f32 %v3188, %v3236
  %3238 = vmatmul.bf16.gmra.mxu0 %v2633
  %v3239 = vpop.f32.mrf.mxu0
  %v3240 = vadd.f32 %v3191, %v3239
  %v3241 = vpop.f32.mrf.mxu0
  %v3242 = vadd.f32 %v3193, %v3241
  %3243 = vmatmul.bf16.gmra.mxu0 %v2635
  %v3244 = vpop.f32.mrf.mxu0
  %v3245 = vadd.f32 %v3196, %v3244
  %v3246 = vpop.f32.mrf.mxu0
  %v3247 = vadd.f32 %v3198, %v3246
  %3248 = vdwg.mxu0
  %v3249 = vmax.f32 %v3210, 0.0
  %v3250 = vmax.f32 %v3212, 0.0
  %v3251 = vmax.f32 %v3215, 0.0
  %v3252 = vmax.f32 %v3217, 0.0
  %v3253 = vmax.f32 %v3220, 0.0
  %v3254 = vmax.f32 %v3222, 0.0
  %v3255 = vmax.f32 %v3225, 0.0
  %v3256 = vmax.f32 %v3227, 0.0
  %v3257 = vmax.f32 %v3230, 0.0
  %v3258 = vmax.f32 %v3232, 0.0
  %v3259 = vmax.f32 %v3235, 0.0
  %v3260 = vmax.f32 %v3237, 0.0
  %v3261 = vmax.f32 %v3240, 0.0
  %v3262 = vmax.f32 %v3242, 0.0
  %v3263 = vmax.f32 %v3245, 0.0
  %v3264 = vmax.f32 %v3247, 0.0
  %v3265 = vpack.c.bf16 %v3250, %v3249
  %v3266 = vpack.c.bf16 %v3252, %v3251
  %v3267 = vpack.c.bf16 %v3254, %v3253
  %v3268 = vpack.c.bf16 %v3256, %v3255
  %v3269 = vpack.c.bf16 %v3258, %v3257
  %v3270 = vpack.c.bf16 %v3260, %v3259
  %v3271 = vpack.c.bf16 %v3262, %v3261
  %v3272 = vpack.c.bf16 %v3264, %v3263
  %3273 = vmatpush.bf16.msra.mxu0 %v3272
  %3274 = vmatpush.bf16.msra.mxu0 %v3271
  %3275 = vmatpush.bf16.msra.mxu0 %v3270
  %3276 = vmatpush.bf16.msra.mxu0 %v3269
  %3277 = vmatpush.bf16.msra.mxu0 %v3268
  %3278 = vmatpush.bf16.msra.mxu0 %v3267
  %3279 = vmatpush.bf16.msra.mxu0 %v3266
  %3280 = vmatpush.bf16.msra.mxu0 %v3265
  %3281 = vmatmul.bf16.gmra.mxu0 %v2934
  %v3282 = vpop.f32.mrf.mxu0
  %v3283 = vadd.f32 0.0, %v3282
  %v3284 = vpop.f32.mrf.mxu0
  %v3285 = vadd.f32 0.0, %v3284
  %3286 = vmatmul.bf16.gmra.mxu0 %v2935
  %v3287 = vpop.f32.mrf.mxu0
  %v3288 = vadd.f32 0.0, %v3287
  %v3289 = vpop.f32.mrf.mxu0
  %v3290 = vadd.f32 0.0, %v3289
  %3291 = vmatmul.bf16.gmra.mxu0 %v2936
  %v3292 = vpop.f32.mrf.mxu0
  %v3293 = vadd.f32 0.0, %v3292
  %v3294 = vpop.f32.mrf.mxu0
  %v3295 = vadd.f32 0.0, %v3294
  %3296 = vmatmul.bf16.gmra.mxu0 %v2937
  %v3297 = vpop.f32.mrf.mxu0
  %v3298 = vadd.f32 0.0, %v3297
  %v3299 = vpop.f32.mrf.mxu0
  %v3300 = vadd.f32 0.0, %v3299
  %3301 = vmatmul.bf16.gmra.mxu0 %v2938
  %v3302 = vpop.f32.mrf.mxu0
  %v3303 = vadd.f32 0.0, %v3302
  %v3304 = vpop.f32.mrf.mxu0
  %v3305 = vadd.f32 0.0, %v3304
  %3306 = vmatmul.bf16.gmra.mxu0 %v2939
  %v3307 = vpop.f32.mrf.mxu0
  %v3308 = vadd.f32 0.0, %v3307
  %v3309 = vpop.f32.mrf.mxu0
  %v3310 = vadd.f32 0.0, %v3309
  %3311 = vmatmul.bf16.gmra.mxu0 %v2940
  %v3312 = vpop.f32.mrf.mxu0
  %v3313 = vadd.f32 0.0, %v3312
  %v3314 = vpop.f32.mrf.mxu0
  %v3315 = vadd.f32 0.0, %v3314
  %3316 = vmatmul.bf16.gmra.mxu0 %v2941
  %v3317 = vpop.f32.mrf.mxu0
  %v3318 = vadd.f32 0.0, %v3317
  %v3319 = vpop.f32.mrf.mxu0
  %v3320 = vadd.f32 0.0, %v3319
  %3321 = vmatmul.bf16.gmra.mxu0 %v2942
  %v3322 = vpop.f32.mrf.mxu0
  %v3323 = vadd.f32 0.0, %v3322
  %v3324 = vpop.f32.mrf.mxu0
  %v3325 = vadd.f32 0.0, %v3324
  %3326 = vmatmul.bf16.gmra.mxu0 %v2943
  %v3327 = vpop.f32.mrf.mxu0
  %v3328 = vadd.f32 0.0, %v3327
  %v3329 = vpop.f32.mrf.mxu0
  %v3330 = vadd.f32 0.0, %v3329
  %3331 = vmatmul.bf16.gmra.mxu0 %v2944
  %v3332 = vpop.f32.mrf.mxu0
  %v3333 = vadd.f32 0.0, %v3332
  %v3334 = vpop.f32.mrf.mxu0
  %v3335 = vadd.f32 0.0, %v3334
  %3336 = vmatmul.bf16.gmra.mxu0 %v2945
  %v3337 = vpop.f32.mrf.mxu0
  %v3338 = vadd.f32 0.0, %v3337
  %v3339 = vpop.f32.mrf.mxu0
  %v3340 = vadd.f32 0.0, %v3339
  %3341 = vmatmul.bf16.gmra.mxu0 %v2946
  %v3342 = vpop.f32.mrf.mxu0
  %v3343 = vadd.f32 0.0, %v3342
  %v3344 = vpop.f32.mrf.mxu0
  %v3345 = vadd.f32 0.0, %v3344
  %3346 = vmatmul.bf16.gmra.mxu0 %v2947
  %v3347 = vpop.f32.mrf.mxu0
  %v3348 = vadd.f32 0.0, %v3347
  %v3349 = vpop.f32.mrf.mxu0
  %v3350 = vadd.f32 0.0, %v3349
  %3351 = vmatmul.bf16.gmra.mxu0 %v2948
  %v3352 = vpop.f32.mrf.mxu0
  %v3353 = vadd.f32 0.0, %v3352
  %v3354 = vpop.f32.mrf.mxu0
  %v3355 = vadd.f32 0.0, %v3354
  %3356 = vmatmul.bf16.gmra.mxu0 %v2949
  %v3357 = vpop.f32.mrf.mxu0
  %v3358 = vadd.f32 0.0, %v3357
  %v3359 = vpop.f32.mrf.mxu0
  %v3360 = vadd.f32 0.0, %v3359
  %3361 = vdwg.mxu0
  %v3362 = vxor.u32 %v2976, 2147483648
  %v3363 = vxor.u32 %v2978, 2147483648
  %v3364 = vxor.u32 %v2981, 2147483648
  %v3365 = vxor.u32 %v2983, 2147483648
  %v3366 = vxor.u32 %v2986, 2147483648
  %v3367 = vxor.u32 %v2988, 2147483648
  %v3368 = vxor.u32 %v2991, 2147483648
  %v3369 = vxor.u32 %v2993, 2147483648
  %v3370 = vxor.u32 %v2996, 2147483648
  %v3371 = vxor.u32 %v2998, 2147483648
  %v3372 = vxor.u32 %v3001, 2147483648
  %v3373 = vxor.u32 %v3003, 2147483648
  %v3374 = vxor.u32 %v3006, 2147483648
  %v3375 = vxor.u32 %v3008, 2147483648
  %v3376 = vxor.u32 %v3011, 2147483648
  %v3377 = vxor.u32 %v3013, 2147483648
  %v3378 = vxor.u32 %v3016, 2147483648
  %v3379 = vxor.u32 %v3018, 2147483648
  %v3380 = vxor.u32 %v3021, 2147483648
  %v3381 = vxor.u32 %v3023, 2147483648
  %v3382 = vxor.u32 %v3026, 2147483648
  %v3383 = vxor.u32 %v3028, 2147483648
  %v3384 = vxor.u32 %v3031, 2147483648
  %v3385 = vxor.u32 %v3033, 2147483648
  %v3386 = vxor.u32 %v3036, 2147483648
  %v3387 = vxor.u32 %v3038, 2147483648
  %v3388 = vxor.u32 %v3041, 2147483648
  %v3389 = vxor.u32 %v3043, 2147483648
  %v3390 = vxor.u32 %v3046, 2147483648
  %v3391 = vxor.u32 %v3048, 2147483648
  %v3392 = vxor.u32 %v3051, 2147483648
  %v3393 = vxor.u32 %v3053, 2147483648
  %v3394 = vxor.u32 %v3283, 2147483648
  %v3395 = vxor.u32 %v3285, 2147483648
  %v3396 = vxor.u32 %v3288, 2147483648
  %v3397 = vxor.u32 %v3290, 2147483648
  %v3398 = vxor.u32 %v3293, 2147483648
  %v3399 = vxor.u32 %v3295, 2147483648
  %v3400 = vxor.u32 %v3298, 2147483648
  %v3401 = vxor.u32 %v3300, 2147483648
  %v3402 = vxor.u32 %v3303, 2147483648
  %v3403 = vxor.u32 %v3305, 2147483648
  %v3404 = vxor.u32 %v3308, 2147483648
  %v3405 = vxor.u32 %v3310, 2147483648
  %v3406 = vxor.u32 %v3313, 2147483648
  %v3407 = vxor.u32 %v3315, 2147483648
  %v3408 = vxor.u32 %v3318, 2147483648
  %v3409 = vxor.u32 %v3320, 2147483648
  %v3410 = vxor.u32 %v3323, 2147483648
  %v3411 = vxor.u32 %v3325, 2147483648
  %v3412 = vxor.u32 %v3328, 2147483648
  %v3413 = vxor.u32 %v3330, 2147483648
  %v3414 = vxor.u32 %v3333, 2147483648
  %v3415 = vxor.u32 %v3335, 2147483648
  %v3416 = vxor.u32 %v3338, 2147483648
  %v3417 = vxor.u32 %v3340, 2147483648
  %v3418 = vxor.u32 %v3343, 2147483648
  %v3419 = vxor.u32 %v3345, 2147483648
  %v3420 = vxor.u32 %v3348, 2147483648
  %v3421 = vxor.u32 %v3350, 2147483648
  %v3422 = vxor.u32 %v3353, 2147483648
  %v3423 = vxor.u32 %v3355, 2147483648
  %v3424 = vxor.u32 %v3358, 2147483648
  %v3425 = vxor.u32 %v3360, 2147483648
  %v3426 = vmul.f32 %v3362, 1.442695
  %v3427 = vpow.pop %v3426
  %v3428 = vmul.f32 %v3363, 1.442695
  %v3429 = vpow.pop %v3428
  %v3430 = vmul.f32 %v3364, 1.442695
  %v3431 = vpow.pop %v3430
  %v3432 = vmul.f32 %v3365, 1.442695
  %v3433 = vpow.pop %v3432
  %v3434 = vmul.f32 %v3366, 1.442695
  %v3435 = vpow.pop %v3434
  %v3436 = vmul.f32 %v3367, 1.442695
  %v3437 = vpow.pop %v3436
  %v3438 = vmul.f32 %v3368, 1.442695
  %v3439 = vpow.pop %v3438
  %v3440 = vmul.f32 %v3369, 1.442695
  %v3441 = vpow.pop %v3440
  %v3442 = vmul.f32 %v3370, 1.442695
  %v3443 = vpow.pop %v3442
  %v3444 = vmul.f32 %v3371, 1.442695
  %v3445 = vpow.pop %v3444
  %v3446 = vmul.f32 %v3372, 1.442695
  %v3447 = vpow.pop %v3446
  %v3448 = vmul.f32 %v3373, 1.442695
  %v3449 = vpow.pop %v3448
  %v3450 = vmul.f32 %v3374, 1.442695
  %v3451 = vpow.pop %v3450
  %v3452 = vmul.f32 %v3375, 1.442695
  %v3453 = vpow.pop %v3452
  %v3454 = vmul.f32 %v3376, 1.442695
  %v3455 = vpow.pop %v3454
  %v3456 = vmul.f32 %v3377, 1.442695
  %v3457 = vpow.pop %v3456
  %v3458 = vmul.f32 %v3378, 1.442695
  %v3459 = vpow.pop %v3458
  %v3460 = vmul.f32 %v3379, 1.442695
  %v3461 = vpow.pop %v3460
  %v3462 = vmul.f32 %v3380, 1.442695
  %v3463 = vpow.pop %v3462
  %v3464 = vmul.f32 %v3381, 1.442695
  %v3465 = vpow.pop %v3464
  %v3466 = vmul.f32 %v3382, 1.442695
  %v3467 = vpow.pop %v3466
  %v3468 = vmul.f32 %v3383, 1.442695
  %v3469 = vpow.pop %v3468
  %v3470 = vmul.f32 %v3384, 1.442695
  %v3471 = vpow.pop %v3470
  %v3472 = vmul.f32 %v3385, 1.442695
  %v3473 = vpow.pop %v3472
  %v3474 = vmul.f32 %v3386, 1.442695
  %v3475 = vpow.pop %v3474
  %v3476 = vmul.f32 %v3387, 1.442695
  %v3477 = vpow.pop %v3476
  %v3478 = vmul.f32 %v3388, 1.442695
  %v3479 = vpow.pop %v3478
  %v3480 = vmul.f32 %v3389, 1.442695
  %v3481 = vpow.pop %v3480
  %v3482 = vmul.f32 %v3390, 1.442695
  %v3483 = vpow.pop %v3482
  %v3484 = vmul.f32 %v3391, 1.442695
  %v3485 = vpow.pop %v3484
  %v3486 = vmul.f32 %v3392, 1.442695
  %v3487 = vpow.pop %v3486
  %v3488 = vmul.f32 %v3393, 1.442695
  %v3489 = vpow.pop %v3488
  %v3490 = vmul.f32 %v3394, 1.442695
  %v3491 = vpow.pop %v3490
  %v3492 = vmul.f32 %v3395, 1.442695
  %v3493 = vpow.pop %v3492
  %v3494 = vmul.f32 %v3396, 1.442695
  %v3495 = vpow.pop %v3494
  %v3496 = vmul.f32 %v3397, 1.442695
  %v3497 = vpow.pop %v3496
  %v3498 = vmul.f32 %v3398, 1.442695
  %v3499 = vpow.pop %v3498
  %v3500 = vmul.f32 %v3399, 1.442695
  %v3501 = vpow.pop %v3500
  %v3502 = vmul.f32 %v3400, 1.442695
  %v3503 = vpow.pop %v3502
  %v3504 = vmul.f32 %v3401, 1.442695
  %v3505 = vpow.pop %v3504
  %v3506 = vmul.f32 %v3402, 1.442695
  %v3507 = vpow.pop %v3506
  %v3508 = vmul.f32 %v3403, 1.442695
  %v3509 = vpow.pop %v3508
  %v3510 = vmul.f32 %v3404, 1.442695
  %v3511 = vpow.pop %v3510
  %v3512 = vmul.f32 %v3405, 1.442695
  %v3513 = vpow.pop %v3512
  %v3514 = vmul.f32 %v3406, 1.442695
  %v3515 = vpow.pop %v3514
  %v3516 = vmul.f32 %v3407, 1.442695
  %v3517 = vpow.pop %v3516
  %v3518 = vmul.f32 %v3408, 1.442695
  %v3519 = vpow.pop %v3518
  %v3520 = vmul.f32 %v3409, 1.442695
  %v3521 = vpow.pop %v3520
  %v3522 = vmul.f32 %v3410, 1.442695
  %v3523 = vpow.pop %v3522
  %v3524 = vmul.f32 %v3411, 1.442695
  %v3525 = vpow.pop %v3524
  %v3526 = vmul.f32 %v3412, 1.442695
  %v3527 = vpow.pop %v3526
  %v3528 = vmul.f32 %v3413, 1.442695
  %v3529 = vpow.pop %v3528
  %v3530 = vmul.f32 %v3414, 1.442695
  %v3531 = vpow.pop %v3530
  %v3532 = vmul.f32 %v3415, 1.442695
  %v3533 = vpow.pop %v3532
  %v3534 = vmul.f32 %v3416, 1.442695
  %v3535 = vpow.pop %v3534
  %v3536 = vmul.f32 %v3417, 1.442695
  %v3537 = vpow.pop %v3536
  %v3538 = vmul.f32 %v3418, 1.442695
  %v3539 = vpow.pop %v3538
  %v3540 = vmul.f32 %v3419, 1.442695
  %v3541 = vpow.pop %v3540
  %v3542 = vmul.f32 %v3420, 1.442695
  %v3543 = vpow.pop %v3542
  %v3544 = vmul.f32 %v3421, 1.442695
  %v3545 = vpow.pop %v3544
  %v3546 = vmul.f32 %v3422, 1.442695
  %v3547 = vpow.pop %v3546
  %v3548 = vmul.f32 %v3423, 1.442695
  %v3549 = vpow.pop %v3548
  %v3550 = vmul.f32 %v3424, 1.442695
  %v3551 = vpow.pop %v3550
  %v3552 = vmul.f32 %v3425, 1.442695
  %v3553 = vpow.pop %v3552
  %v3554 = vadd.f32 %v3427, 1.0
  %v3555 = vadd.f32 %v3429, 1.0
  %v3556 = vadd.f32 %v3431, 1.0
  %v3557 = vadd.f32 %v3433, 1.0
  %v3558 = vadd.f32 %v3435, 1.0
  %v3559 = vadd.f32 %v3437, 1.0
  %v3560 = vadd.f32 %v3439, 1.0
  %v3561 = vadd.f32 %v3441, 1.0
  %v3562 = vadd.f32 %v3443, 1.0
  %v3563 = vadd.f32 %v3445, 1.0
  %v3564 = vadd.f32 %v3447, 1.0
  %v3565 = vadd.f32 %v3449, 1.0
  %v3566 = vadd.f32 %v3451, 1.0
  %v3567 = vadd.f32 %v3453, 1.0
  %v3568 = vadd.f32 %v3455, 1.0
  %v3569 = vadd.f32 %v3457, 1.0
  %v3570 = vadd.f32 %v3459, 1.0
  %v3571 = vadd.f32 %v3461, 1.0
  %v3572 = vadd.f32 %v3463, 1.0
  %v3573 = vadd.f32 %v3465, 1.0
  %v3574 = vadd.f32 %v3467, 1.0
  %v3575 = vadd.f32 %v3469, 1.0
  %v3576 = vadd.f32 %v3471, 1.0
  %v3577 = vadd.f32 %v3473, 1.0
  %v3578 = vadd.f32 %v3475, 1.0
  %v3579 = vadd.f32 %v3477, 1.0
  %v3580 = vadd.f32 %v3479, 1.0
  %v3581 = vadd.f32 %v3481, 1.0
  %v3582 = vadd.f32 %v3483, 1.0
  %v3583 = vadd.f32 %v3485, 1.0
  %v3584 = vadd.f32 %v3487, 1.0
  %v3585 = vadd.f32 %v3489, 1.0
  %v3586 = vadd.f32 %v3491, 1.0
  %v3587 = vadd.f32 %v3493, 1.0
  %v3588 = vadd.f32 %v3495, 1.0
  %v3589 = vadd.f32 %v3497, 1.0
  %v3590 = vadd.f32 %v3499, 1.0
  %v3591 = vadd.f32 %v3501, 1.0
  %v3592 = vadd.f32 %v3503, 1.0
  %v3593 = vadd.f32 %v3505, 1.0
  %v3594 = vadd.f32 %v3507, 1.0
  %v3595 = vadd.f32 %v3509, 1.0
  %v3596 = vadd.f32 %v3511, 1.0
  %v3597 = vadd.f32 %v3513, 1.0
  %v3598 = vadd.f32 %v3515, 1.0
  %v3599 = vadd.f32 %v3517, 1.0
  %v3600 = vadd.f32 %v3519, 1.0
  %v3601 = vadd.f32 %v3521, 1.0
  %v3602 = vadd.f32 %v3523, 1.0
  %v3603 = vadd.f32 %v3525, 1.0
  %v3604 = vadd.f32 %v3527, 1.0
  %v3605 = vadd.f32 %v3529, 1.0
  %v3606 = vadd.f32 %v3531, 1.0
  %v3607 = vadd.f32 %v3533, 1.0
  %v3608 = vadd.f32 %v3535, 1.0
  %v3609 = vadd.f32 %v3537, 1.0
  %v3610 = vadd.f32 %v3539, 1.0
  %v3611 = vadd.f32 %v3541, 1.0
  %v3612 = vadd.f32 %v3543, 1.0
  %v3613 = vadd.f32 %v3545, 1.0
  %v3614 = vadd.f32 %v3547, 1.0
  %v3615 = vadd.f32 %v3549, 1.0
  %v3616 = vadd.f32 %v3551, 1.0
  %v3617 = vadd.f32 %v3553, 1.0
  %v3618 = vrcp.pop %v3554
  %v3619 = vmul.f32 %v3554, %v3618
  %v3620 = vsub.f32 1.0, %v3619
  %v3621 = vmul.f32 %v3618, %v3620
  %v3622 = vadd.f32 %v3618, %v3621
  %vm3623 = vweird.f32 %v3554
  %vm3624 = vweird.f32 %v3618
  %vm3625 = vmor %vm3623, %vm3624
  %v3626 = vsel %vm3625, %v3618, %v3622
  %v3627 = vand.u32 2147483647, %v3554
  %vm3628 = vcmp.eq.f32.partialorder %v3627, 8.507059e+37
  %v3629 = vand.u32 %v3554, 2147483648
  %v3630 = vor.u32 1.1754944e-38, %v3629
  %v3631 = vsel %vm3628, %v3630, %v3626
  %v3632 = vmul.f32 1.0, %v3631
  %v3633 = vrcp.pop %v3555
  %v3634 = vmul.f32 %v3555, %v3633
  %v3635 = vsub.f32 1.0, %v3634
  %v3636 = vmul.f32 %v3633, %v3635
  %v3637 = vadd.f32 %v3633, %v3636
  %vm3638 = vweird.f32 %v3555
  %vm3639 = vweird.f32 %v3633
  %vm3640 = vmor %vm3638, %vm3639
  %v3641 = vsel %vm3640, %v3633, %v3637
  %v3642 = vand.u32 2147483647, %v3555
  %vm3643 = vcmp.eq.f32.partialorder %v3642, 8.507059e+37
  %v3644 = vand.u32 %v3555, 2147483648
  %v3645 = vor.u32 1.1754944e-38, %v3644
  %v3646 = vsel %vm3643, %v3645, %v3641
  %v3647 = vmul.f32 1.0, %v3646
  %v3648 = vrcp.pop %v3556
  %v3649 = vmul.f32 %v3556, %v3648
  %v3650 = vsub.f32 1.0, %v3649
  %v3651 = vmul.f32 %v3648, %v3650
  %v3652 = vadd.f32 %v3648, %v3651
  %vm3653 = vweird.f32 %v3556
  %vm3654 = vweird.f32 %v3648
  %vm3655 = vmor %vm3653, %vm3654
  %v3656 = vsel %vm3655, %v3648, %v3652
  %v3657 = vand.u32 2147483647, %v3556
  %vm3658 = vcmp.eq.f32.partialorder %v3657, 8.507059e+37
  %v3659 = vand.u32 %v3556, 2147483648
  %v3660 = vor.u32 1.1754944e-38, %v3659
  %v3661 = vsel %vm3658, %v3660, %v3656
  %v3662 = vmul.f32 1.0, %v3661
  %v3663 = vrcp.pop %v3557
  %v3664 = vmul.f32 %v3557, %v3663
  %v3665 = vsub.f32 1.0, %v3664
  %v3666 = vmul.f32 %v3663, %v3665
  %v3667 = vadd.f32 %v3663, %v3666
  %vm3668 = vweird.f32 %v3557
  %vm3669 = vweird.f32 %v3663
  %vm3670 = vmor %vm3668, %vm3669
  %v3671 = vsel %vm3670, %v3663, %v3667
  %v3672 = vand.u32 2147483647, %v3557
  %vm3673 = vcmp.eq.f32.partialorder %v3672, 8.507059e+37
  %v3674 = vand.u32 %v3557, 2147483648
  %v3675 = vor.u32 1.1754944e-38, %v3674
  %v3676 = vsel %vm3673, %v3675, %v3671
  %v3677 = vmul.f32 1.0, %v3676
  %v3678 = vrcp.pop %v3558
  %v3679 = vmul.f32 %v3558, %v3678
  %v3680 = vsub.f32 1.0, %v3679
  %v3681 = vmul.f32 %v3678, %v3680
  %v3682 = vadd.f32 %v3678, %v3681
  %vm3683 = vweird.f32 %v3558
  %vm3684 = vweird.f32 %v3678
  %vm3685 = vmor %vm3683, %vm3684
  %v3686 = vsel %vm3685, %v3678, %v3682
  %v3687 = vand.u32 2147483647, %v3558
  %vm3688 = vcmp.eq.f32.partialorder %v3687, 8.507059e+37
  %v3689 = vand.u32 %v3558, 2147483648
  %v3690 = vor.u32 1.1754944e-38, %v3689
  %v3691 = vsel %vm3688, %v3690, %v3686
  %v3692 = vmul.f32 1.0, %v3691
  %v3693 = vrcp.pop %v3559
  %v3694 = vmul.f32 %v3559, %v3693
  %v3695 = vsub.f32 1.0, %v3694
  %v3696 = vmul.f32 %v3693, %v3695
  %v3697 = vadd.f32 %v3693, %v3696
  %vm3698 = vweird.f32 %v3559
  %vm3699 = vweird.f32 %v3693
  %vm3700 = vmor %vm3698, %vm3699
  %v3701 = vsel %vm3700, %v3693, %v3697
  %v3702 = vand.u32 2147483647, %v3559
  %vm3703 = vcmp.eq.f32.partialorder %v3702, 8.507059e+37
  %v3704 = vand.u32 %v3559, 2147483648
  %v3705 = vor.u32 1.1754944e-38, %v3704
  %v3706 = vsel %vm3703, %v3705, %v3701
  %v3707 = vmul.f32 1.0, %v3706
  %v3708 = vrcp.pop %v3560
  %v3709 = vmul.f32 %v3560, %v3708
  %v3710 = vsub.f32 1.0, %v3709
  %v3711 = vmul.f32 %v3708, %v3710
  %v3712 = vadd.f32 %v3708, %v3711
  %vm3713 = vweird.f32 %v3560
  %vm3714 = vweird.f32 %v3708
  %vm3715 = vmor %vm3713, %vm3714
  %v3716 = vsel %vm3715, %v3708, %v3712
  %v3717 = vand.u32 2147483647, %v3560
  %vm3718 = vcmp.eq.f32.partialorder %v3717, 8.507059e+37
  %v3719 = vand.u32 %v3560, 2147483648
  %v3720 = vor.u32 1.1754944e-38, %v3719
  %v3721 = vsel %vm3718, %v3720, %v3716
  %v3722 = vmul.f32 1.0, %v3721
  %v3723 = vrcp.pop %v3561
  %v3724 = vmul.f32 %v3561, %v3723
  %v3725 = vsub.f32 1.0, %v3724
  %v3726 = vmul.f32 %v3723, %v3725
  %v3727 = vadd.f32 %v3723, %v3726
  %vm3728 = vweird.f32 %v3561
  %vm3729 = vweird.f32 %v3723
  %vm3730 = vmor %vm3728, %vm3729
  %v3731 = vsel %vm3730, %v3723, %v3727
  %v3732 = vand.u32 2147483647, %v3561
  %vm3733 = vcmp.eq.f32.partialorder %v3732, 8.507059e+37
  %v3734 = vand.u32 %v3561, 2147483648
  %v3735 = vor.u32 1.1754944e-38, %v3734
  %v3736 = vsel %vm3733, %v3735, %v3731
  %v3737 = vmul.f32 1.0, %v3736
  %v3738 = vrcp.pop %v3562
  %v3739 = vmul.f32 %v3562, %v3738
  %v3740 = vsub.f32 1.0, %v3739
  %v3741 = vmul.f32 %v3738, %v3740
  %v3742 = vadd.f32 %v3738, %v3741
  %vm3743 = vweird.f32 %v3562
  %vm3744 = vweird.f32 %v3738
  %vm3745 = vmor %vm3743, %vm3744
  %v3746 = vsel %vm3745, %v3738, %v3742
  %v3747 = vand.u32 2147483647, %v3562
  %vm3748 = vcmp.eq.f32.partialorder %v3747, 8.507059e+37
  %v3749 = vand.u32 %v3562, 2147483648
  %v3750 = vor.u32 1.1754944e-38, %v3749
  %v3751 = vsel %vm3748, %v3750, %v3746
  %v3752 = vmul.f32 1.0, %v3751
  %v3753 = vrcp.pop %v3563
  %v3754 = vmul.f32 %v3563, %v3753
  %v3755 = vsub.f32 1.0, %v3754
  %v3756 = vmul.f32 %v3753, %v3755
  %v3757 = vadd.f32 %v3753, %v3756
  %vm3758 = vweird.f32 %v3563
  %vm3759 = vweird.f32 %v3753
  %vm3760 = vmor %vm3758, %vm3759
  %v3761 = vsel %vm3760, %v3753, %v3757
  %v3762 = vand.u32 2147483647, %v3563
  %vm3763 = vcmp.eq.f32.partialorder %v3762, 8.507059e+37
  %v3764 = vand.u32 %v3563, 2147483648
  %v3765 = vor.u32 1.1754944e-38, %v3764
  %v3766 = vsel %vm3763, %v3765, %v3761
  %v3767 = vmul.f32 1.0, %v3766
  %v3768 = vrcp.pop %v3564
  %v3769 = vmul.f32 %v3564, %v3768
  %v3770 = vsub.f32 1.0, %v3769
  %v3771 = vmul.f32 %v3768, %v3770
  %v3772 = vadd.f32 %v3768, %v3771
  %vm3773 = vweird.f32 %v3564
  %vm3774 = vweird.f32 %v3768
  %vm3775 = vmor %vm3773, %vm3774
  %v3776 = vsel %vm3775, %v3768, %v3772
  %v3777 = vand.u32 2147483647, %v3564
  %vm3778 = vcmp.eq.f32.partialorder %v3777, 8.507059e+37
  %v3779 = vand.u32 %v3564, 2147483648
  %v3780 = vor.u32 1.1754944e-38, %v3779
  %v3781 = vsel %vm3778, %v3780, %v3776
  %v3782 = vmul.f32 1.0, %v3781
  %v3783 = vrcp.pop %v3565
  %v3784 = vmul.f32 %v3565, %v3783
  %v3785 = vsub.f32 1.0, %v3784
  %v3786 = vmul.f32 %v3783, %v3785
  %v3787 = vadd.f32 %v3783, %v3786
  %vm3788 = vweird.f32 %v3565
  %vm3789 = vweird.f32 %v3783
  %vm3790 = vmor %vm3788, %vm3789
  %v3791 = vsel %vm3790, %v3783, %v3787
  %v3792 = vand.u32 2147483647, %v3565
  %vm3793 = vcmp.eq.f32.partialorder %v3792, 8.507059e+37
  %v3794 = vand.u32 %v3565, 2147483648
  %v3795 = vor.u32 1.1754944e-38, %v3794
  %v3796 = vsel %vm3793, %v3795, %v3791
  %v3797 = vmul.f32 1.0, %v3796
  %v3798 = vrcp.pop %v3566
  %v3799 = vmul.f32 %v3566, %v3798
  %v3800 = vsub.f32 1.0, %v3799
  %v3801 = vmul.f32 %v3798, %v3800
  %v3802 = vadd.f32 %v3798, %v3801
  %vm3803 = vweird.f32 %v3566
  %vm3804 = vweird.f32 %v3798
  %vm3805 = vmor %vm3803, %vm3804
  %v3806 = vsel %vm3805, %v3798, %v3802
  %v3807 = vand.u32 2147483647, %v3566
  %vm3808 = vcmp.eq.f32.partialorder %v3807, 8.507059e+37
  %v3809 = vand.u32 %v3566, 2147483648
  %v3810 = vor.u32 1.1754944e-38, %v3809
  %v3811 = vsel %vm3808, %v3810, %v3806
  %v3812 = vmul.f32 1.0, %v3811
  %v3813 = vrcp.pop %v3567
  %v3814 = vmul.f32 %v3567, %v3813
  %v3815 = vsub.f32 1.0, %v3814
  %v3816 = vmul.f32 %v3813, %v3815
  %v3817 = vadd.f32 %v3813, %v3816
  %vm3818 = vweird.f32 %v3567
  %vm3819 = vweird.f32 %v3813
  %vm3820 = vmor %vm3818, %vm3819
  %v3821 = vsel %vm3820, %v3813, %v3817
  %v3822 = vand.u32 2147483647, %v3567
  %vm3823 = vcmp.eq.f32.partialorder %v3822, 8.507059e+37
  %v3824 = vand.u32 %v3567, 2147483648
  %v3825 = vor.u32 1.1754944e-38, %v3824
  %v3826 = vsel %vm3823, %v3825, %v3821
  %v3827 = vmul.f32 1.0, %v3826
  %v3828 = vrcp.pop %v3568
  %v3829 = vmul.f32 %v3568, %v3828
  %v3830 = vsub.f32 1.0, %v3829
  %v3831 = vmul.f32 %v3828, %v3830
  %v3832 = vadd.f32 %v3828, %v3831
  %vm3833 = vweird.f32 %v3568
  %vm3834 = vweird.f32 %v3828
  %vm3835 = vmor %vm3833, %vm3834
  %v3836 = vsel %vm3835, %v3828, %v3832
  %v3837 = vand.u32 2147483647, %v3568
  %vm3838 = vcmp.eq.f32.partialorder %v3837, 8.507059e+37
  %v3839 = vand.u32 %v3568, 2147483648
  %v3840 = vor.u32 1.1754944e-38, %v3839
  %v3841 = vsel %vm3838, %v3840, %v3836
  %v3842 = vmul.f32 1.0, %v3841
  %v3843 = vrcp.pop %v3569
  %v3844 = vmul.f32 %v3569, %v3843
  %v3845 = vsub.f32 1.0, %v3844
  %v3846 = vmul.f32 %v3843, %v3845
  %v3847 = vadd.f32 %v3843, %v3846
  %vm3848 = vweird.f32 %v3569
  %vm3849 = vweird.f32 %v3843
  %vm3850 = vmor %vm3848, %vm3849
  %v3851 = vsel %vm3850, %v3843, %v3847
  %v3852 = vand.u32 2147483647, %v3569
  %vm3853 = vcmp.eq.f32.partialorder %v3852, 8.507059e+37
  %v3854 = vand.u32 %v3569, 2147483648
  %v3855 = vor.u32 1.1754944e-38, %v3854
  %v3856 = vsel %vm3853, %v3855, %v3851
  %v3857 = vmul.f32 1.0, %v3856
  %v3858 = vrcp.pop %v3570
  %v3859 = vmul.f32 %v3570, %v3858
  %v3860 = vsub.f32 1.0, %v3859
  %v3861 = vmul.f32 %v3858, %v3860
  %v3862 = vadd.f32 %v3858, %v3861
  %vm3863 = vweird.f32 %v3570
  %vm3864 = vweird.f32 %v3858
  %vm3865 = vmor %vm3863, %vm3864
  %v3866 = vsel %vm3865, %v3858, %v3862
  %v3867 = vand.u32 2147483647, %v3570
  %vm3868 = vcmp.eq.f32.partialorder %v3867, 8.507059e+37
  %v3869 = vand.u32 %v3570, 2147483648
  %v3870 = vor.u32 1.1754944e-38, %v3869
  %v3871 = vsel %vm3868, %v3870, %v3866
  %v3872 = vmul.f32 1.0, %v3871
  %v3873 = vrcp.pop %v3571
  %v3874 = vmul.f32 %v3571, %v3873
  %v3875 = vsub.f32 1.0, %v3874
  %v3876 = vmul.f32 %v3873, %v3875
  %v3877 = vadd.f32 %v3873, %v3876
  %vm3878 = vweird.f32 %v3571
  %vm3879 = vweird.f32 %v3873
  %vm3880 = vmor %vm3878, %vm3879
  %v3881 = vsel %vm3880, %v3873, %v3877
  %v3882 = vand.u32 2147483647, %v3571
  %vm3883 = vcmp.eq.f32.partialorder %v3882, 8.507059e+37
  %v3884 = vand.u32 %v3571, 2147483648
  %v3885 = vor.u32 1.1754944e-38, %v3884
  %v3886 = vsel %vm3883, %v3885, %v3881
  %v3887 = vmul.f32 1.0, %v3886
  %v3888 = vrcp.pop %v3572
  %v3889 = vmul.f32 %v3572, %v3888
  %v3890 = vsub.f32 1.0, %v3889
  %v3891 = vmul.f32 %v3888, %v3890
  %v3892 = vadd.f32 %v3888, %v3891
  %vm3893 = vweird.f32 %v3572
  %vm3894 = vweird.f32 %v3888
  %vm3895 = vmor %vm3893, %vm3894
  %v3896 = vsel %vm3895, %v3888, %v3892
  %v3897 = vand.u32 2147483647, %v3572
  %vm3898 = vcmp.eq.f32.partialorder %v3897, 8.507059e+37
  %v3899 = vand.u32 %v3572, 2147483648
  %v3900 = vor.u32 1.1754944e-38, %v3899
  %v3901 = vsel %vm3898, %v3900, %v3896
  %v3902 = vmul.f32 1.0, %v3901
  %v3903 = vrcp.pop %v3573
  %v3904 = vmul.f32 %v3573, %v3903
  %v3905 = vsub.f32 1.0, %v3904
  %v3906 = vmul.f32 %v3903, %v3905
  %v3907 = vadd.f32 %v3903, %v3906
  %vm3908 = vweird.f32 %v3573
  %vm3909 = vweird.f32 %v3903
  %vm3910 = vmor %vm3908, %vm3909
  %v3911 = vsel %vm3910, %v3903, %v3907
  %v3912 = vand.u32 2147483647, %v3573
  %vm3913 = vcmp.eq.f32.partialorder %v3912, 8.507059e+37
  %v3914 = vand.u32 %v3573, 2147483648
  %v3915 = vor.u32 1.1754944e-38, %v3914
  %v3916 = vsel %vm3913, %v3915, %v3911
  %v3917 = vmul.f32 1.0, %v3916
  %v3918 = vrcp.pop %v3574
  %v3919 = vmul.f32 %v3574, %v3918
  %v3920 = vsub.f32 1.0, %v3919
  %v3921 = vmul.f32 %v3918, %v3920
  %v3922 = vadd.f32 %v3918, %v3921
  %vm3923 = vweird.f32 %v3574
  %vm3924 = vweird.f32 %v3918
  %vm3925 = vmor %vm3923, %vm3924
  %v3926 = vsel %vm3925, %v3918, %v3922
  %v3927 = vand.u32 2147483647, %v3574
  %vm3928 = vcmp.eq.f32.partialorder %v3927, 8.507059e+37
  %v3929 = vand.u32 %v3574, 2147483648
  %v3930 = vor.u32 1.1754944e-38, %v3929
  %v3931 = vsel %vm3928, %v3930, %v3926
  %v3932 = vmul.f32 1.0, %v3931
  %v3933 = vrcp.pop %v3575
  %v3934 = vmul.f32 %v3575, %v3933
  %v3935 = vsub.f32 1.0, %v3934
  %v3936 = vmul.f32 %v3933, %v3935
  %v3937 = vadd.f32 %v3933, %v3936
  %vm3938 = vweird.f32 %v3575
  %vm3939 = vweird.f32 %v3933
  %vm3940 = vmor %vm3938, %vm3939
  %v3941 = vsel %vm3940, %v3933, %v3937
  %v3942 = vand.u32 2147483647, %v3575
  %vm3943 = vcmp.eq.f32.partialorder %v3942, 8.507059e+37
  %v3944 = vand.u32 %v3575, 2147483648
  %v3945 = vor.u32 1.1754944e-38, %v3944
  %v3946 = vsel %vm3943, %v3945, %v3941
  %v3947 = vmul.f32 1.0, %v3946
  %v3948 = vrcp.pop %v3576
  %v3949 = vmul.f32 %v3576, %v3948
  %v3950 = vsub.f32 1.0, %v3949
  %v3951 = vmul.f32 %v3948, %v3950
  %v3952 = vadd.f32 %v3948, %v3951
  %vm3953 = vweird.f32 %v3576
  %vm3954 = vweird.f32 %v3948
  %vm3955 = vmor %vm3953, %vm3954
  %v3956 = vsel %vm3955, %v3948, %v3952
  %v3957 = vand.u32 2147483647, %v3576
  %vm3958 = vcmp.eq.f32.partialorder %v3957, 8.507059e+37
  %v3959 = vand.u32 %v3576, 2147483648
  %v3960 = vor.u32 1.1754944e-38, %v3959
  %v3961 = vsel %vm3958, %v3960, %v3956
  %v3962 = vmul.f32 1.0, %v3961
  %v3963 = vrcp.pop %v3577
  %v3964 = vmul.f32 %v3577, %v3963
  %v3965 = vsub.f32 1.0, %v3964
  %v3966 = vmul.f32 %v3963, %v3965
  %v3967 = vadd.f32 %v3963, %v3966
  %vm3968 = vweird.f32 %v3577
  %vm3969 = vweird.f32 %v3963
  %vm3970 = vmor %vm3968, %vm3969
  %v3971 = vsel %vm3970, %v3963, %v3967
  %v3972 = vand.u32 2147483647, %v3577
  %vm3973 = vcmp.eq.f32.partialorder %v3972, 8.507059e+37
  %v3974 = vand.u32 %v3577, 2147483648
  %v3975 = vor.u32 1.1754944e-38, %v3974
  %v3976 = vsel %vm3973, %v3975, %v3971
  %v3977 = vmul.f32 1.0, %v3976
  %v3978 = vrcp.pop %v3578
  %v3979 = vmul.f32 %v3578, %v3978
  %v3980 = vsub.f32 1.0, %v3979
  %v3981 = vmul.f32 %v3978, %v3980
  %v3982 = vadd.f32 %v3978, %v3981
  %vm3983 = vweird.f32 %v3578
  %vm3984 = vweird.f32 %v3978
  %vm3985 = vmor %vm3983, %vm3984
  %v3986 = vsel %vm3985, %v3978, %v3982
  %v3987 = vand.u32 2147483647, %v3578
  %vm3988 = vcmp.eq.f32.partialorder %v3987, 8.507059e+37
  %v3989 = vand.u32 %v3578, 2147483648
  %v3990 = vor.u32 1.1754944e-38, %v3989
  %v3991 = vsel %vm3988, %v3990, %v3986
  %v3992 = vmul.f32 1.0, %v3991
  %v3993 = vrcp.pop %v3579
  %v3994 = vmul.f32 %v3579, %v3993
  %v3995 = vsub.f32 1.0, %v3994
  %v3996 = vmul.f32 %v3993, %v3995
  %v3997 = vadd.f32 %v3993, %v3996
  %vm3998 = vweird.f32 %v3579
  %vm3999 = vweird.f32 %v3993
  %vm4000 = vmor %vm3998, %vm3999
  %v4001 = vsel %vm4000, %v3993, %v3997
  %v4002 = vand.u32 2147483647, %v3579
  %vm4003 = vcmp.eq.f32.partialorder %v4002, 8.507059e+37
  %v4004 = vand.u32 %v3579, 2147483648
  %v4005 = vor.u32 1.1754944e-38, %v4004
  %v4006 = vsel %vm4003, %v4005, %v4001
  %v4007 = vmul.f32 1.0, %v4006
  %v4008 = vrcp.pop %v3580
  %v4009 = vmul.f32 %v3580, %v4008
  %v4010 = vsub.f32 1.0, %v4009
  %v4011 = vmul.f32 %v4008, %v4010
  %v4012 = vadd.f32 %v4008, %v4011
  %vm4013 = vweird.f32 %v3580
  %vm4014 = vweird.f32 %v4008
  %vm4015 = vmor %vm4013, %vm4014
  %v4016 = vsel %vm4015, %v4008, %v4012
  %v4017 = vand.u32 2147483647, %v3580
  %vm4018 = vcmp.eq.f32.partialorder %v4017, 8.507059e+37
  %v4019 = vand.u32 %v3580, 2147483648
  %v4020 = vor.u32 1.1754944e-38, %v4019
  %v4021 = vsel %vm4018, %v4020, %v4016
  %v4022 = vmul.f32 1.0, %v4021
  %v4023 = vrcp.pop %v3581
  %v4024 = vmul.f32 %v3581, %v4023
  %v4025 = vsub.f32 1.0, %v4024
  %v4026 = vmul.f32 %v4023, %v4025
  %v4027 = vadd.f32 %v4023, %v4026
  %vm4028 = vweird.f32 %v3581
  %vm4029 = vweird.f32 %v4023
  %vm4030 = vmor %vm4028, %vm4029
  %v4031 = vsel %vm4030, %v4023, %v4027
  %v4032 = vand.u32 2147483647, %v3581
  %vm4033 = vcmp.eq.f32.partialorder %v4032, 8.507059e+37
  %v4034 = vand.u32 %v3581, 2147483648
  %v4035 = vor.u32 1.1754944e-38, %v4034
  %v4036 = vsel %vm4033, %v4035, %v4031
  %v4037 = vmul.f32 1.0, %v4036
  %v4038 = vrcp.pop %v3582
  %v4039 = vmul.f32 %v3582, %v4038
  %v4040 = vsub.f32 1.0, %v4039
  %v4041 = vmul.f32 %v4038, %v4040
  %v4042 = vadd.f32 %v4038, %v4041
  %vm4043 = vweird.f32 %v3582
  %vm4044 = vweird.f32 %v4038
  %vm4045 = vmor %vm4043, %vm4044
  %v4046 = vsel %vm4045, %v4038, %v4042
  %v4047 = vand.u32 2147483647, %v3582
  %vm4048 = vcmp.eq.f32.partialorder %v4047, 8.507059e+37
  %v4049 = vand.u32 %v3582, 2147483648
  %v4050 = vor.u32 1.1754944e-38, %v4049
  %v4051 = vsel %vm4048, %v4050, %v4046
  %v4052 = vmul.f32 1.0, %v4051
  %v4053 = vrcp.pop %v3583
  %v4054 = vmul.f32 %v3583, %v4053
  %v4055 = vsub.f32 1.0, %v4054
  %v4056 = vmul.f32 %v4053, %v4055
  %v4057 = vadd.f32 %v4053, %v4056
  %vm4058 = vweird.f32 %v3583
  %vm4059 = vweird.f32 %v4053
  %vm4060 = vmor %vm4058, %vm4059
  %v4061 = vsel %vm4060, %v4053, %v4057
  %v4062 = vand.u32 2147483647, %v3583
  %vm4063 = vcmp.eq.f32.partialorder %v4062, 8.507059e+37
  %v4064 = vand.u32 %v3583, 2147483648
  %v4065 = vor.u32 1.1754944e-38, %v4064
  %v4066 = vsel %vm4063, %v4065, %v4061
  %v4067 = vmul.f32 1.0, %v4066
  %v4068 = vrcp.pop %v3584
  %v4069 = vmul.f32 %v3584, %v4068
  %v4070 = vsub.f32 1.0, %v4069
  %v4071 = vmul.f32 %v4068, %v4070
  %v4072 = vadd.f32 %v4068, %v4071
  %vm4073 = vweird.f32 %v3584
  %vm4074 = vweird.f32 %v4068
  %vm4075 = vmor %vm4073, %vm4074
  %v4076 = vsel %vm4075, %v4068, %v4072
  %v4077 = vand.u32 2147483647, %v3584
  %vm4078 = vcmp.eq.f32.partialorder %v4077, 8.507059e+37
  %v4079 = vand.u32 %v3584, 2147483648
  %v4080 = vor.u32 1.1754944e-38, %v4079
  %v4081 = vsel %vm4078, %v4080, %v4076
  %v4082 = vmul.f32 1.0, %v4081
  %v4083 = vrcp.pop %v3585
  %v4084 = vmul.f32 %v3585, %v4083
  %v4085 = vsub.f32 1.0, %v4084
  %v4086 = vmul.f32 %v4083, %v4085
  %v4087 = vadd.f32 %v4083, %v4086
  %vm4088 = vweird.f32 %v3585
  %vm4089 = vweird.f32 %v4083
  %vm4090 = vmor %vm4088, %vm4089
  %v4091 = vsel %vm4090, %v4083, %v4087
  %v4092 = vand.u32 2147483647, %v3585
  %vm4093 = vcmp.eq.f32.partialorder %v4092, 8.507059e+37
  %v4094 = vand.u32 %v3585, 2147483648
  %v4095 = vor.u32 1.1754944e-38, %v4094
  %v4096 = vsel %vm4093, %v4095, %v4091
  %v4097 = vmul.f32 1.0, %v4096
  %v4098 = vrcp.pop %v3586
  %v4099 = vmul.f32 %v3586, %v4098
  %v4100 = vsub.f32 1.0, %v4099
  %v4101 = vmul.f32 %v4098, %v4100
  %v4102 = vadd.f32 %v4098, %v4101
  %vm4103 = vweird.f32 %v3586
  %vm4104 = vweird.f32 %v4098
  %vm4105 = vmor %vm4103, %vm4104
  %v4106 = vsel %vm4105, %v4098, %v4102
  %v4107 = vand.u32 2147483647, %v3586
  %vm4108 = vcmp.eq.f32.partialorder %v4107, 8.507059e+37
  %v4109 = vand.u32 %v3586, 2147483648
  %v4110 = vor.u32 1.1754944e-38, %v4109
  %v4111 = vsel %vm4108, %v4110, %v4106
  %v4112 = vmul.f32 1.0, %v4111
  %v4113 = vrcp.pop %v3587
  %v4114 = vmul.f32 %v3587, %v4113
  %v4115 = vsub.f32 1.0, %v4114
  %v4116 = vmul.f32 %v4113, %v4115
  %v4117 = vadd.f32 %v4113, %v4116
  %vm4118 = vweird.f32 %v3587
  %vm4119 = vweird.f32 %v4113
  %vm4120 = vmor %vm4118, %vm4119
  %v4121 = vsel %vm4120, %v4113, %v4117
  %v4122 = vand.u32 2147483647, %v3587
  %vm4123 = vcmp.eq.f32.partialorder %v4122, 8.507059e+37
  %v4124 = vand.u32 %v3587, 2147483648
  %v4125 = vor.u32 1.1754944e-38, %v4124
  %v4126 = vsel %vm4123, %v4125, %v4121
  %v4127 = vmul.f32 1.0, %v4126
  %v4128 = vrcp.pop %v3588
  %v4129 = vmul.f32 %v3588, %v4128
  %v4130 = vsub.f32 1.0, %v4129
  %v4131 = vmul.f32 %v4128, %v4130
  %v4132 = vadd.f32 %v4128, %v4131
  %vm4133 = vweird.f32 %v3588
  %vm4134 = vweird.f32 %v4128
  %vm4135 = vmor %vm4133, %vm4134
  %v4136 = vsel %vm4135, %v4128, %v4132
  %v4137 = vand.u32 2147483647, %v3588
  %vm4138 = vcmp.eq.f32.partialorder %v4137, 8.507059e+37
  %v4139 = vand.u32 %v3588, 2147483648
  %v4140 = vor.u32 1.1754944e-38, %v4139
  %v4141 = vsel %vm4138, %v4140, %v4136
  %v4142 = vmul.f32 1.0, %v4141
  %v4143 = vrcp.pop %v3589
  %v4144 = vmul.f32 %v3589, %v4143
  %v4145 = vsub.f32 1.0, %v4144
  %v4146 = vmul.f32 %v4143, %v4145
  %v4147 = vadd.f32 %v4143, %v4146
  %vm4148 = vweird.f32 %v3589
  %vm4149 = vweird.f32 %v4143
  %vm4150 = vmor %vm4148, %vm4149
  %v4151 = vsel %vm4150, %v4143, %v4147
  %v4152 = vand.u32 2147483647, %v3589
  %vm4153 = vcmp.eq.f32.partialorder %v4152, 8.507059e+37
  %v4154 = vand.u32 %v3589, 2147483648
  %v4155 = vor.u32 1.1754944e-38, %v4154
  %v4156 = vsel %vm4153, %v4155, %v4151
  %v4157 = vmul.f32 1.0, %v4156
  %v4158 = vrcp.pop %v3590
  %v4159 = vmul.f32 %v3590, %v4158
  %v4160 = vsub.f32 1.0, %v4159
  %v4161 = vmul.f32 %v4158, %v4160
  %v4162 = vadd.f32 %v4158, %v4161
  %vm4163 = vweird.f32 %v3590
  %vm4164 = vweird.f32 %v4158
  %vm4165 = vmor %vm4163, %vm4164
  %v4166 = vsel %vm4165, %v4158, %v4162
  %v4167 = vand.u32 2147483647, %v3590
  %vm4168 = vcmp.eq.f32.partialorder %v4167, 8.507059e+37
  %v4169 = vand.u32 %v3590, 2147483648
  %v4170 = vor.u32 1.1754944e-38, %v4169
  %v4171 = vsel %vm4168, %v4170, %v4166
  %v4172 = vmul.f32 1.0, %v4171
  %v4173 = vrcp.pop %v3591
  %v4174 = vmul.f32 %v3591, %v4173
  %v4175 = vsub.f32 1.0, %v4174
  %v4176 = vmul.f32 %v4173, %v4175
  %v4177 = vadd.f32 %v4173, %v4176
  %vm4178 = vweird.f32 %v3591
  %vm4179 = vweird.f32 %v4173
  %vm4180 = vmor %vm4178, %vm4179
  %v4181 = vsel %vm4180, %v4173, %v4177
  %v4182 = vand.u32 2147483647, %v3591
  %vm4183 = vcmp.eq.f32.partialorder %v4182, 8.507059e+37
  %v4184 = vand.u32 %v3591, 2147483648
  %v4185 = vor.u32 1.1754944e-38, %v4184
  %v4186 = vsel %vm4183, %v4185, %v4181
  %v4187 = vmul.f32 1.0, %v4186
  %v4188 = vrcp.pop %v3592
  %v4189 = vmul.f32 %v3592, %v4188
  %v4190 = vsub.f32 1.0, %v4189
  %v4191 = vmul.f32 %v4188, %v4190
  %v4192 = vadd.f32 %v4188, %v4191
  %vm4193 = vweird.f32 %v3592
  %vm4194 = vweird.f32 %v4188
  %vm4195 = vmor %vm4193, %vm4194
  %v4196 = vsel %vm4195, %v4188, %v4192
  %v4197 = vand.u32 2147483647, %v3592
  %vm4198 = vcmp.eq.f32.partialorder %v4197, 8.507059e+37
  %v4199 = vand.u32 %v3592, 2147483648
  %v4200 = vor.u32 1.1754944e-38, %v4199
  %v4201 = vsel %vm4198, %v4200, %v4196
  %v4202 = vmul.f32 1.0, %v4201
  %v4203 = vrcp.pop %v3593
  %v4204 = vmul.f32 %v3593, %v4203
  %v4205 = vsub.f32 1.0, %v4204
  %v4206 = vmul.f32 %v4203, %v4205
  %v4207 = vadd.f32 %v4203, %v4206
  %vm4208 = vweird.f32 %v3593
  %vm4209 = vweird.f32 %v4203
  %vm4210 = vmor %vm4208, %vm4209
  %v4211 = vsel %vm4210, %v4203, %v4207
  %v4212 = vand.u32 2147483647, %v3593
  %vm4213 = vcmp.eq.f32.partialorder %v4212, 8.507059e+37
  %v4214 = vand.u32 %v3593, 2147483648
  %v4215 = vor.u32 1.1754944e-38, %v4214
  %v4216 = vsel %vm4213, %v4215, %v4211
  %v4217 = vmul.f32 1.0, %v4216
  %v4218 = vrcp.pop %v3594
  %v4219 = vmul.f32 %v3594, %v4218
  %v4220 = vsub.f32 1.0, %v4219
  %v4221 = vmul.f32 %v4218, %v4220
  %v4222 = vadd.f32 %v4218, %v4221
  %vm4223 = vweird.f32 %v3594
  %vm4224 = vweird.f32 %v4218
  %vm4225 = vmor %vm4223, %vm4224
  %v4226 = vsel %vm4225, %v4218, %v4222
  %v4227 = vand.u32 2147483647, %v3594
  %vm4228 = vcmp.eq.f32.partialorder %v4227, 8.507059e+37
  %v4229 = vand.u32 %v3594, 2147483648
  %v4230 = vor.u32 1.1754944e-38, %v4229
  %v4231 = vsel %vm4228, %v4230, %v4226
  %v4232 = vmul.f32 1.0, %v4231
  %v4233 = vrcp.pop %v3595
  %v4234 = vmul.f32 %v3595, %v4233
  %v4235 = vsub.f32 1.0, %v4234
  %v4236 = vmul.f32 %v4233, %v4235
  %v4237 = vadd.f32 %v4233, %v4236
  %vm4238 = vweird.f32 %v3595
  %vm4239 = vweird.f32 %v4233
  %vm4240 = vmor %vm4238, %vm4239
  %v4241 = vsel %vm4240, %v4233, %v4237
  %v4242 = vand.u32 2147483647, %v3595
  %vm4243 = vcmp.eq.f32.partialorder %v4242, 8.507059e+37
  %v4244 = vand.u32 %v3595, 2147483648
  %v4245 = vor.u32 1.1754944e-38, %v4244
  %v4246 = vsel %vm4243, %v4245, %v4241
  %v4247 = vmul.f32 1.0, %v4246
  %v4248 = vrcp.pop %v3596
  %v4249 = vmul.f32 %v3596, %v4248
  %v4250 = vsub.f32 1.0, %v4249
  %v4251 = vmul.f32 %v4248, %v4250
  %v4252 = vadd.f32 %v4248, %v4251
  %vm4253 = vweird.f32 %v3596
  %vm4254 = vweird.f32 %v4248
  %vm4255 = vmor %vm4253, %vm4254
  %v4256 = vsel %vm4255, %v4248, %v4252
  %v4257 = vand.u32 2147483647, %v3596
  %vm4258 = vcmp.eq.f32.partialorder %v4257, 8.507059e+37
  %v4259 = vand.u32 %v3596, 2147483648
  %v4260 = vor.u32 1.1754944e-38, %v4259
  %v4261 = vsel %vm4258, %v4260, %v4256
  %v4262 = vmul.f32 1.0, %v4261
  %v4263 = vrcp.pop %v3597
  %v4264 = vmul.f32 %v3597, %v4263
  %v4265 = vsub.f32 1.0, %v4264
  %v4266 = vmul.f32 %v4263, %v4265
  %v4267 = vadd.f32 %v4263, %v4266
  %vm4268 = vweird.f32 %v3597
  %vm4269 = vweird.f32 %v4263
  %vm4270 = vmor %vm4268, %vm4269
  %v4271 = vsel %vm4270, %v4263, %v4267
  %v4272 = vand.u32 2147483647, %v3597
  %vm4273 = vcmp.eq.f32.partialorder %v4272, 8.507059e+37
  %v4274 = vand.u32 %v3597, 2147483648
  %v4275 = vor.u32 1.1754944e-38, %v4274
  %v4276 = vsel %vm4273, %v4275, %v4271
  %v4277 = vmul.f32 1.0, %v4276
  %v4278 = vrcp.pop %v3598
  %v4279 = vmul.f32 %v3598, %v4278
  %v4280 = vsub.f32 1.0, %v4279
  %v4281 = vmul.f32 %v4278, %v4280
  %v4282 = vadd.f32 %v4278, %v4281
  %vm4283 = vweird.f32 %v3598
  %vm4284 = vweird.f32 %v4278
  %vm4285 = vmor %vm4283, %vm4284
  %v4286 = vsel %vm4285, %v4278, %v4282
  %v4287 = vand.u32 2147483647, %v3598
  %vm4288 = vcmp.eq.f32.partialorder %v4287, 8.507059e+37
  %v4289 = vand.u32 %v3598, 2147483648
  %v4290 = vor.u32 1.1754944e-38, %v4289
  %v4291 = vsel %vm4288, %v4290, %v4286
  %v4292 = vmul.f32 1.0, %v4291
  %v4293 = vrcp.pop %v3599
  %v4294 = vmul.f32 %v3599, %v4293
  %v4295 = vsub.f32 1.0, %v4294
  %v4296 = vmul.f32 %v4293, %v4295
  %v4297 = vadd.f32 %v4293, %v4296
  %vm4298 = vweird.f32 %v3599
  %vm4299 = vweird.f32 %v4293
  %vm4300 = vmor %vm4298, %vm4299
  %v4301 = vsel %vm4300, %v4293, %v4297
  %v4302 = vand.u32 2147483647, %v3599
  %vm4303 = vcmp.eq.f32.partialorder %v4302, 8.507059e+37
  %v4304 = vand.u32 %v3599, 2147483648
  %v4305 = vor.u32 1.1754944e-38, %v4304
  %v4306 = vsel %vm4303, %v4305, %v4301
  %v4307 = vmul.f32 1.0, %v4306
  %v4308 = vrcp.pop %v3600
  %v4309 = vmul.f32 %v3600, %v4308
  %v4310 = vsub.f32 1.0, %v4309
  %v4311 = vmul.f32 %v4308, %v4310
  %v4312 = vadd.f32 %v4308, %v4311
  %vm4313 = vweird.f32 %v3600
  %vm4314 = vweird.f32 %v4308
  %vm4315 = vmor %vm4313, %vm4314
  %v4316 = vsel %vm4315, %v4308, %v4312
  %v4317 = vand.u32 2147483647, %v3600
  %vm4318 = vcmp.eq.f32.partialorder %v4317, 8.507059e+37
  %v4319 = vand.u32 %v3600, 2147483648
  %v4320 = vor.u32 1.1754944e-38, %v4319
  %v4321 = vsel %vm4318, %v4320, %v4316
  %v4322 = vmul.f32 1.0, %v4321
  %v4323 = vrcp.pop %v3601
  %v4324 = vmul.f32 %v3601, %v4323
  %v4325 = vsub.f32 1.0, %v4324
  %v4326 = vmul.f32 %v4323, %v4325
  %v4327 = vadd.f32 %v4323, %v4326
  %vm4328 = vweird.f32 %v3601
  %vm4329 = vweird.f32 %v4323
  %vm4330 = vmor %vm4328, %vm4329
  %v4331 = vsel %vm4330, %v4323, %v4327
  %v4332 = vand.u32 2147483647, %v3601
  %vm4333 = vcmp.eq.f32.partialorder %v4332, 8.507059e+37
  %v4334 = vand.u32 %v3601, 2147483648
  %v4335 = vor.u32 1.1754944e-38, %v4334
  %v4336 = vsel %vm4333, %v4335, %v4331
  %v4337 = vmul.f32 1.0, %v4336
  %v4338 = vrcp.pop %v3602
  %v4339 = vmul.f32 %v3602, %v4338
  %v4340 = vsub.f32 1.0, %v4339
  %v4341 = vmul.f32 %v4338, %v4340
  %v4342 = vadd.f32 %v4338, %v4341
  %vm4343 = vweird.f32 %v3602
  %vm4344 = vweird.f32 %v4338
  %vm4345 = vmor %vm4343, %vm4344
  %v4346 = vsel %vm4345, %v4338, %v4342
  %v4347 = vand.u32 2147483647, %v3602
  %vm4348 = vcmp.eq.f32.partialorder %v4347, 8.507059e+37
  %v4349 = vand.u32 %v3602, 2147483648
  %v4350 = vor.u32 1.1754944e-38, %v4349
  %v4351 = vsel %vm4348, %v4350, %v4346
  %v4352 = vmul.f32 1.0, %v4351
  %v4353 = vrcp.pop %v3603
  %v4354 = vmul.f32 %v3603, %v4353
  %v4355 = vsub.f32 1.0, %v4354
  %v4356 = vmul.f32 %v4353, %v4355
  %v4357 = vadd.f32 %v4353, %v4356
  %vm4358 = vweird.f32 %v3603
  %vm4359 = vweird.f32 %v4353
  %vm4360 = vmor %vm4358, %vm4359
  %v4361 = vsel %vm4360, %v4353, %v4357
  %v4362 = vand.u32 2147483647, %v3603
  %vm4363 = vcmp.eq.f32.partialorder %v4362, 8.507059e+37
  %v4364 = vand.u32 %v3603, 2147483648
  %v4365 = vor.u32 1.1754944e-38, %v4364
  %v4366 = vsel %vm4363, %v4365, %v4361
  %v4367 = vmul.f32 1.0, %v4366
  %v4368 = vrcp.pop %v3604
  %v4369 = vmul.f32 %v3604, %v4368
  %v4370 = vsub.f32 1.0, %v4369
  %v4371 = vmul.f32 %v4368, %v4370
  %v4372 = vadd.f32 %v4368, %v4371
  %vm4373 = vweird.f32 %v3604
  %vm4374 = vweird.f32 %v4368
  %vm4375 = vmor %vm4373, %vm4374
  %v4376 = vsel %vm4375, %v4368, %v4372
  %v4377 = vand.u32 2147483647, %v3604
  %vm4378 = vcmp.eq.f32.partialorder %v4377, 8.507059e+37
  %v4379 = vand.u32 %v3604, 2147483648
  %v4380 = vor.u32 1.1754944e-38, %v4379
  %v4381 = vsel %vm4378, %v4380, %v4376
  %v4382 = vmul.f32 1.0, %v4381
  %v4383 = vrcp.pop %v3605
  %v4384 = vmul.f32 %v3605, %v4383
  %v4385 = vsub.f32 1.0, %v4384
  %v4386 = vmul.f32 %v4383, %v4385
  %v4387 = vadd.f32 %v4383, %v4386
  %vm4388 = vweird.f32 %v3605
  %vm4389 = vweird.f32 %v4383
  %vm4390 = vmor %vm4388, %vm4389
  %v4391 = vsel %vm4390, %v4383, %v4387
  %v4392 = vand.u32 2147483647, %v3605
  %vm4393 = vcmp.eq.f32.partialorder %v4392, 8.507059e+37
  %v4394 = vand.u32 %v3605, 2147483648
  %v4395 = vor.u32 1.1754944e-38, %v4394
  %v4396 = vsel %vm4393, %v4395, %v4391
  %v4397 = vmul.f32 1.0, %v4396
  %v4398 = vrcp.pop %v3606
  %v4399 = vmul.f32 %v3606, %v4398
  %v4400 = vsub.f32 1.0, %v4399
  %v4401 = vmul.f32 %v4398, %v4400
  %v4402 = vadd.f32 %v4398, %v4401
  %vm4403 = vweird.f32 %v3606
  %vm4404 = vweird.f32 %v4398
  %vm4405 = vmor %vm4403, %vm4404
  %v4406 = vsel %vm4405, %v4398, %v4402
  %v4407 = vand.u32 2147483647, %v3606
  %vm4408 = vcmp.eq.f32.partialorder %v4407, 8.507059e+37
  %v4409 = vand.u32 %v3606, 2147483648
  %v4410 = vor.u32 1.1754944e-38, %v4409
  %v4411 = vsel %vm4408, %v4410, %v4406
  %v4412 = vmul.f32 1.0, %v4411
  %v4413 = vrcp.pop %v3607
  %v4414 = vmul.f32 %v3607, %v4413
  %v4415 = vsub.f32 1.0, %v4414
  %v4416 = vmul.f32 %v4413, %v4415
  %v4417 = vadd.f32 %v4413, %v4416
  %vm4418 = vweird.f32 %v3607
  %vm4419 = vweird.f32 %v4413
  %vm4420 = vmor %vm4418, %vm4419
  %v4421 = vsel %vm4420, %v4413, %v4417
  %v4422 = vand.u32 2147483647, %v3607
  %vm4423 = vcmp.eq.f32.partialorder %v4422, 8.507059e+37
  %v4424 = vand.u32 %v3607, 2147483648
  %v4425 = vor.u32 1.1754944e-38, %v4424
  %v4426 = vsel %vm4423, %v4425, %v4421
  %v4427 = vmul.f32 1.0, %v4426
  %v4428 = vrcp.pop %v3608
  %v4429 = vmul.f32 %v3608, %v4428
  %v4430 = vsub.f32 1.0, %v4429
  %v4431 = vmul.f32 %v4428, %v4430
  %v4432 = vadd.f32 %v4428, %v4431
  %vm4433 = vweird.f32 %v3608
  %vm4434 = vweird.f32 %v4428
  %vm4435 = vmor %vm4433, %vm4434
  %v4436 = vsel %vm4435, %v4428, %v4432
  %v4437 = vand.u32 2147483647, %v3608
  %vm4438 = vcmp.eq.f32.partialorder %v4437, 8.507059e+37
  %v4439 = vand.u32 %v3608, 2147483648
  %v4440 = vor.u32 1.1754944e-38, %v4439
  %v4441 = vsel %vm4438, %v4440, %v4436
  %v4442 = vmul.f32 1.0, %v4441
  %v4443 = vrcp.pop %v3609
  %v4444 = vmul.f32 %v3609, %v4443
  %v4445 = vsub.f32 1.0, %v4444
  %v4446 = vmul.f32 %v4443, %v4445
  %v4447 = vadd.f32 %v4443, %v4446
  %vm4448 = vweird.f32 %v3609
  %vm4449 = vweird.f32 %v4443
  %vm4450 = vmor %vm4448, %vm4449
  %v4451 = vsel %vm4450, %v4443, %v4447
  %v4452 = vand.u32 2147483647, %v3609
  %vm4453 = vcmp.eq.f32.partialorder %v4452, 8.507059e+37
  %v4454 = vand.u32 %v3609, 2147483648
  %v4455 = vor.u32 1.1754944e-38, %v4454
  %v4456 = vsel %vm4453, %v4455, %v4451
  %v4457 = vmul.f32 1.0, %v4456
  %v4458 = vrcp.pop %v3610
  %v4459 = vmul.f32 %v3610, %v4458
  %v4460 = vsub.f32 1.0, %v4459
  %v4461 = vmul.f32 %v4458, %v4460
  %v4462 = vadd.f32 %v4458, %v4461
  %vm4463 = vweird.f32 %v3610
  %vm4464 = vweird.f32 %v4458
  %vm4465 = vmor %vm4463, %vm4464
  %v4466 = vsel %vm4465, %v4458, %v4462
  %v4467 = vand.u32 2147483647, %v3610
  %vm4468 = vcmp.eq.f32.partialorder %v4467, 8.507059e+37
  %v4469 = vand.u32 %v3610, 2147483648
  %v4470 = vor.u32 1.1754944e-38, %v4469
  %v4471 = vsel %vm4468, %v4470, %v4466
  %v4472 = vmul.f32 1.0, %v4471
  %v4473 = vrcp.pop %v3611
  %v4474 = vmul.f32 %v3611, %v4473
  %v4475 = vsub.f32 1.0, %v4474
  %v4476 = vmul.f32 %v4473, %v4475
  %v4477 = vadd.f32 %v4473, %v4476
  %vm4478 = vweird.f32 %v3611
  %vm4479 = vweird.f32 %v4473
  %vm4480 = vmor %vm4478, %vm4479
  %v4481 = vsel %vm4480, %v4473, %v4477
  %v4482 = vand.u32 2147483647, %v3611
  %vm4483 = vcmp.eq.f32.partialorder %v4482, 8.507059e+37
  %v4484 = vand.u32 %v3611, 2147483648
  %v4485 = vor.u32 1.1754944e-38, %v4484
  %v4486 = vsel %vm4483, %v4485, %v4481
  %v4487 = vmul.f32 1.0, %v4486
  %v4488 = vrcp.pop %v3612
  %v4489 = vmul.f32 %v3612, %v4488
  %v4490 = vsub.f32 1.0, %v4489
  %v4491 = vmul.f32 %v4488, %v4490
  %v4492 = vadd.f32 %v4488, %v4491
  %vm4493 = vweird.f32 %v3612
  %vm4494 = vweird.f32 %v4488
  %vm4495 = vmor %vm4493, %vm4494
  %v4496 = vsel %vm4495, %v4488, %v4492
  %v4497 = vand.u32 2147483647, %v3612
  %vm4498 = vcmp.eq.f32.partialorder %v4497, 8.507059e+37
  %v4499 = vand.u32 %v3612, 2147483648
  %v4500 = vor.u32 1.1754944e-38, %v4499
  %v4501 = vsel %vm4498, %v4500, %v4496
  %v4502 = vmul.f32 1.0, %v4501
  %v4503 = vrcp.pop %v3613
  %v4504 = vmul.f32 %v3613, %v4503
  %v4505 = vsub.f32 1.0, %v4504
  %v4506 = vmul.f32 %v4503, %v4505
  %v4507 = vadd.f32 %v4503, %v4506
  %vm4508 = vweird.f32 %v3613
  %vm4509 = vweird.f32 %v4503
  %vm4510 = vmor %vm4508, %vm4509
  %v4511 = vsel %vm4510, %v4503, %v4507
  %v4512 = vand.u32 2147483647, %v3613
  %vm4513 = vcmp.eq.f32.partialorder %v4512, 8.507059e+37
  %v4514 = vand.u32 %v3613, 2147483648
  %v4515 = vor.u32 1.1754944e-38, %v4514
  %v4516 = vsel %vm4513, %v4515, %v4511
  %v4517 = vmul.f32 1.0, %v4516
  %v4518 = vrcp.pop %v3614
  %v4519 = vmul.f32 %v3614, %v4518
  %v4520 = vsub.f32 1.0, %v4519
  %v4521 = vmul.f32 %v4518, %v4520
  %v4522 = vadd.f32 %v4518, %v4521
  %vm4523 = vweird.f32 %v3614
  %vm4524 = vweird.f32 %v4518
  %vm4525 = vmor %vm4523, %vm4524
  %v4526 = vsel %vm4525, %v4518, %v4522
  %v4527 = vand.u32 2147483647, %v3614
  %vm4528 = vcmp.eq.f32.partialorder %v4527, 8.507059e+37
  %v4529 = vand.u32 %v3614, 2147483648
  %v4530 = vor.u32 1.1754944e-38, %v4529
  %v4531 = vsel %vm4528, %v4530, %v4526
  %v4532 = vmul.f32 1.0, %v4531
  %v4533 = vrcp.pop %v3615
  %v4534 = vmul.f32 %v3615, %v4533
  %v4535 = vsub.f32 1.0, %v4534
  %v4536 = vmul.f32 %v4533, %v4535
  %v4537 = vadd.f32 %v4533, %v4536
  %vm4538 = vweird.f32 %v3615
  %vm4539 = vweird.f32 %v4533
  %vm4540 = vmor %vm4538, %vm4539
  %v4541 = vsel %vm4540, %v4533, %v4537
  %v4542 = vand.u32 2147483647, %v3615
  %vm4543 = vcmp.eq.f32.partialorder %v4542, 8.507059e+37
  %v4544 = vand.u32 %v3615, 2147483648
  %v4545 = vor.u32 1.1754944e-38, %v4544
  %v4546 = vsel %vm4543, %v4545, %v4541
  %v4547 = vmul.f32 1.0, %v4546
  %v4548 = vrcp.pop %v3616
  %v4549 = vmul.f32 %v3616, %v4548
  %v4550 = vsub.f32 1.0, %v4549
  %v4551 = vmul.f32 %v4548, %v4550
  %v4552 = vadd.f32 %v4548, %v4551
  %vm4553 = vweird.f32 %v3616
  %vm4554 = vweird.f32 %v4548
  %vm4555 = vmor %vm4553, %vm4554
  %v4556 = vsel %vm4555, %v4548, %v4552
  %v4557 = vand.u32 2147483647, %v3616
  %vm4558 = vcmp.eq.f32.partialorder %v4557, 8.507059e+37
  %v4559 = vand.u32 %v3616, 2147483648
  %v4560 = vor.u32 1.1754944e-38, %v4559
  %v4561 = vsel %vm4558, %v4560, %v4556
  %v4562 = vmul.f32 1.0, %v4561
  %v4563 = vrcp.pop %v3617
  %v4564 = vmul.f32 %v3617, %v4563
  %v4565 = vsub.f32 1.0, %v4564
  %v4566 = vmul.f32 %v4563, %v4565
  %v4567 = vadd.f32 %v4563, %v4566
  %vm4568 = vweird.f32 %v3617
  %vm4569 = vweird.f32 %v4563
  %vm4570 = vmor %vm4568, %vm4569
  %v4571 = vsel %vm4570, %v4563, %v4567
  %v4572 = vand.u32 2147483647, %v3617
  %vm4573 = vcmp.eq.f32.partialorder %v4572, 8.507059e+37
  %v4574 = vand.u32 %v3617, 2147483648
  %v4575 = vor.u32 1.1754944e-38, %v4574
  %v4576 = vsel %vm4573, %v4575, %v4571
  %v4577 = vmul.f32 1.0, %v4576
  %v4578 = vmul.f32 %v2396, %v3632
  %v4579 = vmul.f32 %v2397, %v3647
  %v4580 = vmul.f32 %v2398, %v3662
  %v4581 = vmul.f32 %v2399, %v3677
  %v4582 = vmul.f32 %v2400, %v3692
  %v4583 = vmul.f32 %v2401, %v3707
  %v4584 = vmul.f32 %v2402, %v3722
  %v4585 = vmul.f32 %v2403, %v3737
  %v4586 = vmul.f32 %v2404, %v3752
  %v4587 = vmul.f32 %v2405, %v3767
  %v4588 = vmul.f32 %v2406, %v3782
  %v4589 = vmul.f32 %v2407, %v3797
  %v4590 = vmul.f32 %v2408, %v3812
  %v4591 = vmul.f32 %v2409, %v3827
  %v4592 = vmul.f32 %v2410, %v3842
  %v4593 = vmul.f32 %v2411, %v3857
  %v4594 = vmul.f32 %v2412, %v3872
  %v4595 = vmul.f32 %v2413, %v3887
  %v4596 = vmul.f32 %v2414, %v3902
  %v4597 = vmul.f32 %v2415, %v3917
  %v4598 = vmul.f32 %v2416, %v3932
  %v4599 = vmul.f32 %v2417, %v3947
  %v4600 = vmul.f32 %v2418, %v3962
  %v4601 = vmul.f32 %v2419, %v3977
  %v4602 = vmul.f32 %v2420, %v3992
  %v4603 = vmul.f32 %v2421, %v4007
  %v4604 = vmul.f32 %v2422, %v4022
  %v4605 = vmul.f32 %v2423, %v4037
  %v4606 = vmul.f32 %v2424, %v4052
  %v4607 = vmul.f32 %v2425, %v4067
  %v4608 = vmul.f32 %v2426, %v4082
  %v4609 = vmul.f32 %v2427, %v4097
  %v4610 = vmul.f32 %v2428, %v4112
  %v4611 = vmul.f32 %v2429, %v4127
  %v4612 = vmul.f32 %v2430, %v4142
  %v4613 = vmul.f32 %v2431, %v4157
  %v4614 = vmul.f32 %v2432, %v4172
  %v4615 = vmul.f32 %v2433, %v4187
  %v4616 = vmul.f32 %v2434, %v4202
  %v4617 = vmul.f32 %v2435, %v4217
  %v4618 = vmul.f32 %v2436, %v4232
  %v4619 = vmul.f32 %v2437, %v4247
  %v4620 = vmul.f32 %v2438, %v4262
  %v4621 = vmul.f32 %v2439, %v4277
  %v4622 = vmul.f32 %v2440, %v4292
  %v4623 = vmul.f32 %v2441, %v4307
  %v4624 = vmul.f32 %v2442, %v4322
  %v4625 = vmul.f32 %v2443, %v4337
  %v4626 = vmul.f32 %v2444, %v4352
  %v4627 = vmul.f32 %v2445, %v4367
  %v4628 = vmul.f32 %v2446, %v4382
  %v4629 = vmul.f32 %v2447, %v4397
  %v4630 = vmul.f32 %v2448, %v4412
  %v4631 = vmul.f32 %v2449, %v4427
  %v4632 = vmul.f32 %v2450, %v4442
  %v4633 = vmul.f32 %v2451, %v4457
  %v4634 = vmul.f32 %v2452, %v4472
  %v4635 = vmul.f32 %v2453, %v4487
  %v4636 = vmul.f32 %v2454, %v4502
  %v4637 = vmul.f32 %v2455, %v4517
  %v4638 = vmul.f32 %v2456, %v4532
  %v4639 = vmul.f32 %v2457, %v4547
  %v4640 = vmul.f32 %v2458, %v4562
  %v4641 = vmul.f32 %v2459, %v4577
  %v4642 = vmax.f32 %v4578, 1e-06
  %v4643 = vmax.f32 %v4579, 1e-06
  %v4644 = vmax.f32 %v4580, 1e-06
  %v4645 = vmax.f32 %v4581, 1e-06
  %v4646 = vmax.f32 %v4582, 1e-06
  %v4647 = vmax.f32 %v4583, 1e-06
  %v4648 = vmax.f32 %v4584, 1e-06
  %v4649 = vmax.f32 %v4585, 1e-06
  %v4650 = vmax.f32 %v4586, 1e-06
  %v4651 = vmax.f32 %v4587, 1e-06
  %v4652 = vmax.f32 %v4588, 1e-06
  %v4653 = vmax.f32 %v4589, 1e-06
  %v4654 = vmax.f32 %v4590, 1e-06
  %v4655 = vmax.f32 %v4591, 1e-06
  %v4656 = vmax.f32 %v4592, 1e-06
  %v4657 = vmax.f32 %v4593, 1e-06
  %v4658 = vmax.f32 %v4594, 1e-06
  %v4659 = vmax.f32 %v4595, 1e-06
  %v4660 = vmax.f32 %v4596, 1e-06
  %v4661 = vmax.f32 %v4597, 1e-06
  %v4662 = vmax.f32 %v4598, 1e-06
  %v4663 = vmax.f32 %v4599, 1e-06
  %v4664 = vmax.f32 %v4600, 1e-06
  %v4665 = vmax.f32 %v4601, 1e-06
  %v4666 = vmax.f32 %v4602, 1e-06
  %v4667 = vmax.f32 %v4603, 1e-06
  %v4668 = vmax.f32 %v4604, 1e-06
  %v4669 = vmax.f32 %v4605, 1e-06
  %v4670 = vmax.f32 %v4606, 1e-06
  %v4671 = vmax.f32 %v4607, 1e-06
  %v4672 = vmax.f32 %v4608, 1e-06
  %v4673 = vmax.f32 %v4609, 1e-06
  %v4674 = vmax.f32 %v4610, 1e-06
  %v4675 = vmax.f32 %v4611, 1e-06
  %v4676 = vmax.f32 %v4612, 1e-06
  %v4677 = vmax.f32 %v4613, 1e-06
  %v4678 = vmax.f32 %v4614, 1e-06
  %v4679 = vmax.f32 %v4615, 1e-06
  %v4680 = vmax.f32 %v4616, 1e-06
  %v4681 = vmax.f32 %v4617, 1e-06
  %v4682 = vmax.f32 %v4618, 1e-06
  %v4683 = vmax.f32 %v4619, 1e-06
  %v4684 = vmax.f32 %v4620, 1e-06
  %v4685 = vmax.f32 %v4621, 1e-06
  %v4686 = vmax.f32 %v4622, 1e-06
  %v4687 = vmax.f32 %v4623, 1e-06
  %v4688 = vmax.f32 %v4624, 1e-06
  %v4689 = vmax.f32 %v4625, 1e-06
  %v4690 = vmax.f32 %v4626, 1e-06
  %v4691 = vmax.f32 %v4627, 1e-06
  %v4692 = vmax.f32 %v4628, 1e-06
  %v4693 = vmax.f32 %v4629, 1e-06
  %v4694 = vmax.f32 %v4630, 1e-06
  %v4695 = vmax.f32 %v4631, 1e-06
  %v4696 = vmax.f32 %v4632, 1e-06
  %v4697 = vmax.f32 %v4633, 1e-06
  %v4698 = vmax.f32 %v4634, 1e-06
  %v4699 = vmax.f32 %v4635, 1e-06
  %v4700 = vmax.f32 %v4636, 1e-06
  %v4701 = vmax.f32 %v4637, 1e-06
  %v4702 = vmax.f32 %v4638, 1e-06
  %v4703 = vmax.f32 %v4639, 1e-06
  %v4704 = vmax.f32 %v4640, 1e-06
  %v4705 = vmax.f32 %v4641, 1e-06
  %v4706 = vmul.f32 %v4642, %v4642
  %v4707 = vmul.f32 %v4643, %v4643
  %v4708 = vmul.f32 %v4644, %v4644
  %v4709 = vmul.f32 %v4645, %v4645
  %v4710 = vmul.f32 %v4646, %v4646
  %v4711 = vmul.f32 %v4647, %v4647
  %v4712 = vmul.f32 %v4648, %v4648
  %v4713 = vmul.f32 %v4649, %v4649
  %v4714 = vmul.f32 %v4650, %v4650
  %v4715 = vmul.f32 %v4651, %v4651
  %v4716 = vmul.f32 %v4652, %v4652
  %v4717 = vmul.f32 %v4653, %v4653
  %v4718 = vmul.f32 %v4654, %v4654
  %v4719 = vmul.f32 %v4655, %v4655
  %v4720 = vmul.f32 %v4656, %v4656
  %v4721 = vmul.f32 %v4657, %v4657
  %v4722 = vmul.f32 %v4658, %v4658
  %v4723 = vmul.f32 %v4659, %v4659
  %v4724 = vmul.f32 %v4660, %v4660
  %v4725 = vmul.f32 %v4661, %v4661
  %v4726 = vmul.f32 %v4662, %v4662
  %v4727 = vmul.f32 %v4663, %v4663
  %v4728 = vmul.f32 %v4664, %v4664
  %v4729 = vmul.f32 %v4665, %v4665
  %v4730 = vmul.f32 %v4666, %v4666
  %v4731 = vmul.f32 %v4667, %v4667
  %v4732 = vmul.f32 %v4668, %v4668
  %v4733 = vmul.f32 %v4669, %v4669
  %v4734 = vmul.f32 %v4670, %v4670
  %v4735 = vmul.f32 %v4671, %v4671
  %v4736 = vmul.f32 %v4672, %v4672
  %v4737 = vmul.f32 %v4673, %v4673
  %v4738 = vmul.f32 %v4674, %v4674
  %v4739 = vmul.f32 %v4675, %v4675
  %v4740 = vmul.f32 %v4676, %v4676
  %v4741 = vmul.f32 %v4677, %v4677
  %v4742 = vmul.f32 %v4678, %v4678
  %v4743 = vmul.f32 %v4679, %v4679
  %v4744 = vmul.f32 %v4680, %v4680
  %v4745 = vmul.f32 %v4681, %v4681
  %v4746 = vmul.f32 %v4682, %v4682
  %v4747 = vmul.f32 %v4683, %v4683
  %v4748 = vmul.f32 %v4684, %v4684
  %v4749 = vmul.f32 %v4685, %v4685
  %v4750 = vmul.f32 %v4686, %v4686
  %v4751 = vmul.f32 %v4687, %v4687
  %v4752 = vmul.f32 %v4688, %v4688
  %v4753 = vmul.f32 %v4689, %v4689
  %v4754 = vmul.f32 %v4690, %v4690
  %v4755 = vmul.f32 %v4691, %v4691
  %v4756 = vmul.f32 %v4692, %v4692
  %v4757 = vmul.f32 %v4693, %v4693
  %v4758 = vmul.f32 %v4694, %v4694
  %v4759 = vmul.f32 %v4695, %v4695
  %v4760 = vmul.f32 %v4696, %v4696
  %v4761 = vmul.f32 %v4697, %v4697
  %v4762 = vmul.f32 %v4698, %v4698
  %v4763 = vmul.f32 %v4699, %v4699
  %v4764 = vmul.f32 %v4700, %v4700
  %v4765 = vmul.f32 %v4701, %v4701
  %v4766 = vmul.f32 %v4702, %v4702
  %v4767 = vmul.f32 %v4703, %v4703
  %v4768 = vmul.f32 %v4704, %v4704
  %v4769 = vmul.f32 %v4705, %v4705
  %v4770 = vmul.f32 %v4706, %v4642
  %v4771 = vmul.f32 %v4707, %v4643
  %v4772 = vmul.f32 %v4708, %v4644
  %v4773 = vmul.f32 %v4709, %v4645
  %v4774 = vmul.f32 %v4710, %v4646
  %v4775 = vmul.f32 %v4711, %v4647
  %v4776 = vmul.f32 %v4712, %v4648
  %v4777 = vmul.f32 %v4713, %v4649
  %v4778 = vmul.f32 %v4714, %v4650
  %v4779 = vmul.f32 %v4715, %v4651
  %v4780 = vmul.f32 %v4716, %v4652
  %v4781 = vmul.f32 %v4717, %v4653
  %v4782 = vmul.f32 %v4718, %v4654
  %v4783 = vmul.f32 %v4719, %v4655
  %v4784 = vmul.f32 %v4720, %v4656
  %v4785 = vmul.f32 %v4721, %v4657
  %v4786 = vmul.f32 %v4722, %v4658
  %v4787 = vmul.f32 %v4723, %v4659
  %v4788 = vmul.f32 %v4724, %v4660
  %v4789 = vmul.f32 %v4725, %v4661
  %v4790 = vmul.f32 %v4726, %v4662
  %v4791 = vmul.f32 %v4727, %v4663
  %v4792 = vmul.f32 %v4728, %v4664
  %v4793 = vmul.f32 %v4729, %v4665
  %v4794 = vmul.f32 %v4730, %v4666
  %v4795 = vmul.f32 %v4731, %v4667
  %v4796 = vmul.f32 %v4732, %v4668
  %v4797 = vmul.f32 %v4733, %v4669
  %v4798 = vmul.f32 %v4734, %v4670
  %v4799 = vmul.f32 %v4735, %v4671
  %v4800 = vmul.f32 %v4736, %v4672
  %v4801 = vmul.f32 %v4737, %v4673
  %v4802 = vmul.f32 %v4738, %v4674
  %v4803 = vmul.f32 %v4739, %v4675
  %v4804 = vmul.f32 %v4740, %v4676
  %v4805 = vmul.f32 %v4741, %v4677
  %v4806 = vmul.f32 %v4742, %v4678
  %v4807 = vmul.f32 %v4743, %v4679
  %v4808 = vmul.f32 %v4744, %v4680
  %v4809 = vmul.f32 %v4745, %v4681
  %v4810 = vmul.f32 %v4746, %v4682
  %v4811 = vmul.f32 %v4747, %v4683
  %v4812 = vmul.f32 %v4748, %v4684
  %v4813 = vmul.f32 %v4749, %v4685
  %v4814 = vmul.f32 %v4750, %v4686
  %v4815 = vmul.f32 %v4751, %v4687
  %v4816 = vmul.f32 %v4752, %v4688
  %v4817 = vmul.f32 %v4753, %v4689
  %v4818 = vmul.f32 %v4754, %v4690
  %v4819 = vmul.f32 %v4755, %v4691
  %v4820 = vmul.f32 %v4756, %v4692
  %v4821 = vmul.f32 %v4757, %v4693
  %v4822 = vmul.f32 %v4758, %v4694
  %v4823 = vmul.f32 %v4759, %v4695
  %v4824 = vmul.f32 %v4760, %v4696
  %v4825 = vmul.f32 %v4761, %v4697
  %v4826 = vmul.f32 %v4762, %v4698
  %v4827 = vmul.f32 %v4763, %v4699
  %v4828 = vmul.f32 %v4764, %v4700
  %v4829 = vmul.f32 %v4765, %v4701
  %v4830 = vmul.f32 %v4766, %v4702
  %v4831 = vmul.f32 %v4767, %v4703
  %v4832 = vmul.f32 %v4768, %v4704
  %v4833 = vmul.f32 %v4769, %v4705
  %v4834 = vsel %vm84, %v4770, 0.0
  %4835 = vadd.xlane.f32.xlu0 %v4834
  %v4836 = vpop.xlane.xlu0 %4835
  %v4837 = vsel %vm84, %v4771, 0.0
  %4838 = vadd.xlane.f32.xlu0 %v4837
  %v4839 = vpop.xlane.xlu0 %4838
  %v4840 = vsel %vm84, %v4772, 0.0
  %4841 = vadd.xlane.f32.xlu0 %v4840
  %v4842 = vpop.xlane.xlu0 %4841
  %v4843 = vsel %vm84, %v4773, 0.0
  %4844 = vadd.xlane.f32.xlu0 %v4843
  %v4845 = vpop.xlane.xlu0 %4844
  %v4846 = vsel %vm84, %v4774, 0.0
  %4847 = vadd.xlane.f32.xlu0 %v4846
  %v4848 = vpop.xlane.xlu0 %4847
  %v4849 = vsel %vm84, %v4775, 0.0
  %4850 = vadd.xlane.f32.xlu0 %v4849
  %v4851 = vpop.xlane.xlu0 %4850
  %v4852 = vsel %vm84, %v4776, 0.0
  %4853 = vadd.xlane.f32.xlu0 %v4852
  %v4854 = vpop.xlane.xlu0 %4853
  %v4855 = vsel %vm84, %v4777, 0.0
  %4856 = vadd.xlane.f32.xlu0 %v4855
  %v4857 = vpop.xlane.xlu0 %4856
  %v4858 = vsel %vm84, %v4778, 0.0
  %4859 = vadd.xlane.f32.xlu0 %v4858
  %v4860 = vpop.xlane.xlu0 %4859
  %v4861 = vsel %vm84, %v4779, 0.0
  %4862 = vadd.xlane.f32.xlu0 %v4861
  %v4863 = vpop.xlane.xlu0 %4862
  %v4864 = vsel %vm84, %v4780, 0.0
  %4865 = vadd.xlane.f32.xlu0 %v4864
  %v4866 = vpop.xlane.xlu0 %4865
  %v4867 = vsel %vm84, %v4781, 0.0
  %4868 = vadd.xlane.f32.xlu0 %v4867
  %v4869 = vpop.xlane.xlu0 %4868
  %v4870 = vsel %vm84, %v4782, 0.0
  %4871 = vadd.xlane.f32.xlu0 %v4870
  %v4872 = vpop.xlane.xlu0 %4871
  %v4873 = vsel %vm84, %v4783, 0.0
  %4874 = vadd.xlane.f32.xlu0 %v4873
  %v4875 = vpop.xlane.xlu0 %4874
  %v4876 = vsel %vm84, %v4784, 0.0
  %4877 = vadd.xlane.f32.xlu0 %v4876
  %v4878 = vpop.xlane.xlu0 %4877
  %v4879 = vsel %vm84, %v4785, 0.0
  %4880 = vadd.xlane.f32.xlu0 %v4879
  %v4881 = vpop.xlane.xlu0 %4880
  %v4882 = vsel %vm84, %v4786, 0.0
  %4883 = vadd.xlane.f32.xlu0 %v4882
  %v4884 = vpop.xlane.xlu0 %4883
  %v4885 = vsel %vm84, %v4787, 0.0
  %4886 = vadd.xlane.f32.xlu0 %v4885
  %v4887 = vpop.xlane.xlu0 %4886
  %v4888 = vsel %vm84, %v4788, 0.0
  %4889 = vadd.xlane.f32.xlu0 %v4888
  %v4890 = vpop.xlane.xlu0 %4889
  %v4891 = vsel %vm84, %v4789, 0.0
  %4892 = vadd.xlane.f32.xlu0 %v4891
  %v4893 = vpop.xlane.xlu0 %4892
  %v4894 = vsel %vm84, %v4790, 0.0
  %4895 = vadd.xlane.f32.xlu0 %v4894
  %v4896 = vpop.xlane.xlu0 %4895
  %v4897 = vsel %vm84, %v4791, 0.0
  %4898 = vadd.xlane.f32.xlu0 %v4897
  %v4899 = vpop.xlane.xlu0 %4898
  %v4900 = vsel %vm84, %v4792, 0.0
  %4901 = vadd.xlane.f32.xlu0 %v4900
  %v4902 = vpop.xlane.xlu0 %4901
  %v4903 = vsel %vm84, %v4793, 0.0
  %4904 = vadd.xlane.f32.xlu0 %v4903
  %v4905 = vpop.xlane.xlu0 %4904
  %v4906 = vsel %vm84, %v4794, 0.0
  %4907 = vadd.xlane.f32.xlu0 %v4906
  %v4908 = vpop.xlane.xlu0 %4907
  %v4909 = vsel %vm84, %v4795, 0.0
  %4910 = vadd.xlane.f32.xlu0 %v4909
  %v4911 = vpop.xlane.xlu0 %4910
  %v4912 = vsel %vm84, %v4796, 0.0
  %4913 = vadd.xlane.f32.xlu0 %v4912
  %v4914 = vpop.xlane.xlu0 %4913
  %v4915 = vsel %vm84, %v4797, 0.0
  %4916 = vadd.xlane.f32.xlu0 %v4915
  %v4917 = vpop.xlane.xlu0 %4916
  %v4918 = vsel %vm84, %v4798, 0.0
  %4919 = vadd.xlane.f32.xlu0 %v4918
  %v4920 = vpop.xlane.xlu0 %4919
  %v4921 = vsel %vm84, %v4799, 0.0
  %4922 = vadd.xlane.f32.xlu0 %v4921
  %v4923 = vpop.xlane.xlu0 %4922
  %v4924 = vsel %vm84, %v4800, 0.0
  %4925 = vadd.xlane.f32.xlu0 %v4924
  %v4926 = vpop.xlane.xlu0 %4925
  %v4927 = vsel %vm84, %v4801, 0.0
  %4928 = vadd.xlane.f32.xlu0 %v4927
  %v4929 = vpop.xlane.xlu0 %4928
  %v4930 = vsel %vm84, %v4802, 0.0
  %4931 = vadd.xlane.f32.xlu0 %v4930
  %v4932 = vpop.xlane.xlu0 %4931
  %v4933 = vsel %vm84, %v4803, 0.0
  %4934 = vadd.xlane.f32.xlu0 %v4933
  %v4935 = vpop.xlane.xlu0 %4934
  %v4936 = vsel %vm84, %v4804, 0.0
  %4937 = vadd.xlane.f32.xlu0 %v4936
  %v4938 = vpop.xlane.xlu0 %4937
  %v4939 = vsel %vm84, %v4805, 0.0
  %4940 = vadd.xlane.f32.xlu0 %v4939
  %v4941 = vpop.xlane.xlu0 %4940
  %v4942 = vsel %vm84, %v4806, 0.0
  %4943 = vadd.xlane.f32.xlu0 %v4942
  %v4944 = vpop.xlane.xlu0 %4943
  %v4945 = vsel %vm84, %v4807, 0.0
  %4946 = vadd.xlane.f32.xlu0 %v4945
  %v4947 = vpop.xlane.xlu0 %4946
  %v4948 = vsel %vm84, %v4808, 0.0
  %4949 = vadd.xlane.f32.xlu0 %v4948
  %v4950 = vpop.xlane.xlu0 %4949
  %v4951 = vsel %vm84, %v4809, 0.0
  %4952 = vadd.xlane.f32.xlu0 %v4951
  %v4953 = vpop.xlane.xlu0 %4952
  %v4954 = vsel %vm84, %v4810, 0.0
  %4955 = vadd.xlane.f32.xlu0 %v4954
  %v4956 = vpop.xlane.xlu0 %4955
  %v4957 = vsel %vm84, %v4811, 0.0
  %4958 = vadd.xlane.f32.xlu0 %v4957
  %v4959 = vpop.xlane.xlu0 %4958
  %v4960 = vsel %vm84, %v4812, 0.0
  %4961 = vadd.xlane.f32.xlu0 %v4960
  %v4962 = vpop.xlane.xlu0 %4961
  %v4963 = vsel %vm84, %v4813, 0.0
  %4964 = vadd.xlane.f32.xlu0 %v4963
  %v4965 = vpop.xlane.xlu0 %4964
  %v4966 = vsel %vm84, %v4814, 0.0
  %4967 = vadd.xlane.f32.xlu0 %v4966
  %v4968 = vpop.xlane.xlu0 %4967
  %v4969 = vsel %vm84, %v4815, 0.0
  %4970 = vadd.xlane.f32.xlu0 %v4969
  %v4971 = vpop.xlane.xlu0 %4970
  %v4972 = vsel %vm84, %v4816, 0.0
  %4973 = vadd.xlane.f32.xlu0 %v4972
  %v4974 = vpop.xlane.xlu0 %4973
  %v4975 = vsel %vm84, %v4817, 0.0
  %4976 = vadd.xlane.f32.xlu0 %v4975
  %v4977 = vpop.xlane.xlu0 %4976
  %v4978 = vsel %vm84, %v4818, 0.0
  %4979 = vadd.xlane.f32.xlu0 %v4978
  %v4980 = vpop.xlane.xlu0 %4979
  %v4981 = vsel %vm84, %v4819, 0.0
  %4982 = vadd.xlane.f32.xlu0 %v4981
  %v4983 = vpop.xlane.xlu0 %4982
  %v4984 = vsel %vm84, %v4820, 0.0
  %4985 = vadd.xlane.f32.xlu0 %v4984
  %v4986 = vpop.xlane.xlu0 %4985
  %v4987 = vsel %vm84, %v4821, 0.0
  %4988 = vadd.xlane.f32.xlu0 %v4987
  %v4989 = vpop.xlane.xlu0 %4988
  %v4990 = vsel %vm84, %v4822, 0.0
  %4991 = vadd.xlane.f32.xlu0 %v4990
  %v4992 = vpop.xlane.xlu0 %4991
  %v4993 = vsel %vm84, %v4823, 0.0
  %4994 = vadd.xlane.f32.xlu0 %v4993
  %v4995 = vpop.xlane.xlu0 %4994
  %v4996 = vsel %vm84, %v4824, 0.0
  %4997 = vadd.xlane.f32.xlu0 %v4996
  %v4998 = vpop.xlane.xlu0 %4997
  %v4999 = vsel %vm84, %v4825, 0.0
  %5000 = vadd.xlane.f32.xlu0 %v4999
  %v5001 = vpop.xlane.xlu0 %5000
  %v5002 = vsel %vm84, %v4826, 0.0
  %5003 = vadd.xlane.f32.xlu0 %v5002
  %v5004 = vpop.xlane.xlu0 %5003
  %v5005 = vsel %vm84, %v4827, 0.0
  %5006 = vadd.xlane.f32.xlu0 %v5005
  %v5007 = vpop.xlane.xlu0 %5006
  %v5008 = vsel %vm84, %v4828, 0.0
  %5009 = vadd.xlane.f32.xlu0 %v5008
  %v5010 = vpop.xlane.xlu0 %5009
  %v5011 = vsel %vm84, %v4829, 0.0
  %5012 = vadd.xlane.f32.xlu0 %v5011
  %v5013 = vpop.xlane.xlu0 %5012
  %v5014 = vsel %vm84, %v4830, 0.0
  %5015 = vadd.xlane.f32.xlu0 %v5014
  %v5016 = vpop.xlane.xlu0 %5015
  %v5017 = vsel %vm84, %v4831, 0.0
  %5018 = vadd.xlane.f32.xlu0 %v5017
  %v5019 = vpop.xlane.xlu0 %5018
  %v5020 = vsel %vm84, %v4832, 0.0
  %5021 = vadd.xlane.f32.xlu0 %v5020
  %v5022 = vpop.xlane.xlu0 %5021
  %v5023 = vsel %vm84, %v4833, 0.0
  %5024 = vadd.xlane.f32.xlu0 %v5023
  %v5025 = vpop.xlane.xlu0 %5024
  %v5026 = vmul.f32 %v4836, %v283
  %v5027 = vmul.f32 %v4839, %v283
  %v5028 = vmul.f32 %v4842, %v283
  %v5029 = vmul.f32 %v4845, %v283
  %v5030 = vmul.f32 %v4848, %v283
  %v5031 = vmul.f32 %v4851, %v283
  %v5032 = vmul.f32 %v4854, %v283
  %v5033 = vmul.f32 %v4857, %v283
  %v5034 = vmul.f32 %v4860, %v283
  %v5035 = vmul.f32 %v4863, %v283
  %v5036 = vmul.f32 %v4866, %v283
  %v5037 = vmul.f32 %v4869, %v283
  %v5038 = vmul.f32 %v4872, %v283
  %v5039 = vmul.f32 %v4875, %v283
  %v5040 = vmul.f32 %v4878, %v283
  %v5041 = vmul.f32 %v4881, %v283
  %v5042 = vmul.f32 %v4884, %v283
  %v5043 = vmul.f32 %v4887, %v283
  %v5044 = vmul.f32 %v4890, %v283
  %v5045 = vmul.f32 %v4893, %v283
  %v5046 = vmul.f32 %v4896, %v283
  %v5047 = vmul.f32 %v4899, %v283
  %v5048 = vmul.f32 %v4902, %v283
  %v5049 = vmul.f32 %v4905, %v283
  %v5050 = vmul.f32 %v4908, %v283
  %v5051 = vmul.f32 %v4911, %v283
  %v5052 = vmul.f32 %v4914, %v283
  %v5053 = vmul.f32 %v4917, %v283
  %v5054 = vmul.f32 %v4920, %v283
  %v5055 = vmul.f32 %v4923, %v283
  %v5056 = vmul.f32 %v4926, %v283
  %v5057 = vmul.f32 %v4929, %v283
  %v5058 = vmul.f32 %v4932, %v283
  %v5059 = vmul.f32 %v4935, %v283
  %v5060 = vmul.f32 %v4938, %v283
  %v5061 = vmul.f32 %v4941, %v283
  %v5062 = vmul.f32 %v4944, %v283
  %v5063 = vmul.f32 %v4947, %v283
  %v5064 = vmul.f32 %v4950, %v283
  %v5065 = vmul.f32 %v4953, %v283
  %v5066 = vmul.f32 %v4956, %v283
  %v5067 = vmul.f32 %v4959, %v283
  %v5068 = vmul.f32 %v4962, %v283
  %v5069 = vmul.f32 %v4965, %v283
  %v5070 = vmul.f32 %v4968, %v283
  %v5071 = vmul.f32 %v4971, %v283
  %v5072 = vmul.f32 %v4974, %v283
  %v5073 = vmul.f32 %v4977, %v283
  %v5074 = vmul.f32 %v4980, %v283
  %v5075 = vmul.f32 %v4983, %v283
  %v5076 = vmul.f32 %v4986, %v283
  %v5077 = vmul.f32 %v4989, %v283
  %v5078 = vmul.f32 %v4992, %v283
  %v5079 = vmul.f32 %v4995, %v283
  %v5080 = vmul.f32 %v4998, %v283
  %v5081 = vmul.f32 %v5001, %v283
  %v5082 = vmul.f32 %v5004, %v283
  %v5083 = vmul.f32 %v5007, %v283
  %v5084 = vmul.f32 %v5010, %v283
  %v5085 = vmul.f32 %v5013, %v283
  %v5086 = vmul.f32 %v5016, %v283
  %v5087 = vmul.f32 %v5019, %v283
  %v5088 = vmul.f32 %v5022, %v283
  %v5089 = vmul.f32 %v5025, %v283
  %v5090 = vlog2.pop %v5026
  %v5091 = vmul.f32 %v5090, 0.6931472
  %v5092 = vlog2.pop %v5027
  %v5093 = vmul.f32 %v5092, 0.6931472
  %v5094 = vlog2.pop %v5028
  %v5095 = vmul.f32 %v5094, 0.6931472
  %v5096 = vlog2.pop %v5029
  %v5097 = vmul.f32 %v5096, 0.6931472
  %v5098 = vlog2.pop %v5030
  %v5099 = vmul.f32 %v5098, 0.6931472
  %v5100 = vlog2.pop %v5031
  %v5101 = vmul.f32 %v5100, 0.6931472
  %v5102 = vlog2.pop %v5032
  %v5103 = vmul.f32 %v5102, 0.6931472
  %v5104 = vlog2.pop %v5033
  %v5105 = vmul.f32 %v5104, 0.6931472
  %v5106 = vlog2.pop %v5034
  %v5107 = vmul.f32 %v5106, 0.6931472
  %v5108 = vlog2.pop %v5035
  %v5109 = vmul.f32 %v5108, 0.6931472
  %v5110 = vlog2.pop %v5036
  %v5111 = vmul.f32 %v5110, 0.6931472
  %v5112 = vlog2.pop %v5037
  %v5113 = vmul.f32 %v5112, 0.6931472
  %v5114 = vlog2.pop %v5038
  %v5115 = vmul.f32 %v5114, 0.6931472
  %v5116 = vlog2.pop %v5039
  %v5117 = vmul.f32 %v5116, 0.6931472
  %v5118 = vlog2.pop %v5040
  %v5119 = vmul.f32 %v5118, 0.6931472
  %v5120 = vlog2.pop %v5041
  %v5121 = vmul.f32 %v5120, 0.6931472
  %v5122 = vlog2.pop %v5042
  %v5123 = vmul.f32 %v5122, 0.6931472
  %v5124 = vlog2.pop %v5043
  %v5125 = vmul.f32 %v5124, 0.6931472
  %v5126 = vlog2.pop %v5044
  %v5127 = vmul.f32 %v5126, 0.6931472
  %v5128 = vlog2.pop %v5045
  %v5129 = vmul.f32 %v5128, 0.6931472
  %v5130 = vlog2.pop %v5046
  %v5131 = vmul.f32 %v5130, 0.6931472
  %v5132 = vlog2.pop %v5047
  %v5133 = vmul.f32 %v5132, 0.6931472
  %v5134 = vlog2.pop %v5048
  %v5135 = vmul.f32 %v5134, 0.6931472
  %v5136 = vlog2.pop %v5049
  %v5137 = vmul.f32 %v5136, 0.6931472
  %v5138 = vlog2.pop %v5050
  %v5139 = vmul.f32 %v5138, 0.6931472
  %v5140 = vlog2.pop %v5051
  %v5141 = vmul.f32 %v5140, 0.6931472
  %v5142 = vlog2.pop %v5052
  %v5143 = vmul.f32 %v5142, 0.6931472
  %v5144 = vlog2.pop %v5053
  %v5145 = vmul.f32 %v5144, 0.6931472
  %v5146 = vlog2.pop %v5054
  %v5147 = vmul.f32 %v5146, 0.6931472
  %v5148 = vlog2.pop %v5055
  %v5149 = vmul.f32 %v5148, 0.6931472
  %v5150 = vlog2.pop %v5056
  %v5151 = vmul.f32 %v5150, 0.6931472
  %v5152 = vlog2.pop %v5057
  %v5153 = vmul.f32 %v5152, 0.6931472
  %v5154 = vlog2.pop %v5058
  %v5155 = vmul.f32 %v5154, 0.6931472
  %v5156 = vlog2.pop %v5059
  %v5157 = vmul.f32 %v5156, 0.6931472
  %v5158 = vlog2.pop %v5060
  %v5159 = vmul.f32 %v5158, 0.6931472
  %v5160 = vlog2.pop %v5061
  %v5161 = vmul.f32 %v5160, 0.6931472
  %v5162 = vlog2.pop %v5062
  %v5163 = vmul.f32 %v5162, 0.6931472
  %v5164 = vlog2.pop %v5063
  %v5165 = vmul.f32 %v5164, 0.6931472
  %v5166 = vlog2.pop %v5064
  %v5167 = vmul.f32 %v5166, 0.6931472
  %v5168 = vlog2.pop %v5065
  %v5169 = vmul.f32 %v5168, 0.6931472
  %v5170 = vlog2.pop %v5066
  %v5171 = vmul.f32 %v5170, 0.6931472
  %v5172 = vlog2.pop %v5067
  %v5173 = vmul.f32 %v5172, 0.6931472
  %v5174 = vlog2.pop %v5068
  %v5175 = vmul.f32 %v5174, 0.6931472
  %v5176 = vlog2.pop %v5069
  %v5177 = vmul.f32 %v5176, 0.6931472
  %v5178 = vlog2.pop %v5070
  %v5179 = vmul.f32 %v5178, 0.6931472
  %v5180 = vlog2.pop %v5071
  %v5181 = vmul.f32 %v5180, 0.6931472
  %v5182 = vlog2.pop %v5072
  %v5183 = vmul.f32 %v5182, 0.6931472
  %v5184 = vlog2.pop %v5073
  %v5185 = vmul.f32 %v5184, 0.6931472
  %v5186 = vlog2.pop %v5074
  %v5187 = vmul.f32 %v5186, 0.6931472
  %v5188 = vlog2.pop %v5075
  %v5189 = vmul.f32 %v5188, 0.6931472
  %v5190 = vlog2.pop %v5076
  %v5191 = vmul.f32 %v5190, 0.6931472
  %v5192 = vlog2.pop %v5077
  %v5193 = vmul.f32 %v5192, 0.6931472
  %v5194 = vlog2.pop %v5078
  %v5195 = vmul.f32 %v5194, 0.6931472
  %v5196 = vlog2.pop %v5079
  %v5197 = vmul.f32 %v5196, 0.6931472
  %v5198 = vlog2.pop %v5080
  %v5199 = vmul.f32 %v5198, 0.6931472
  %v5200 = vlog2.pop %v5081
  %v5201 = vmul.f32 %v5200, 0.6931472
  %v5202 = vlog2.pop %v5082
  %v5203 = vmul.f32 %v5202, 0.6931472
  %v5204 = vlog2.pop %v5083
  %v5205 = vmul.f32 %v5204, 0.6931472
  %v5206 = vlog2.pop %v5084
  %v5207 = vmul.f32 %v5206, 0.6931472
  %v5208 = vlog2.pop %v5085
  %v5209 = vmul.f32 %v5208, 0.6931472
  %v5210 = vlog2.pop %v5086
  %v5211 = vmul.f32 %v5210, 0.6931472
  %v5212 = vlog2.pop %v5087
  %v5213 = vmul.f32 %v5212, 0.6931472
  %v5214 = vlog2.pop %v5088
  %v5215 = vmul.f32 %v5214, 0.6931472
  %v5216 = vlog2.pop %v5089
  %v5217 = vmul.f32 %v5216, 0.6931472
  %v5218 = vmul.f32 %v5091, 0.33333334
  %v5219 = vmul.f32 %v5093, 0.33333334
  %v5220 = vmul.f32 %v5095, 0.33333334
  %v5221 = vmul.f32 %v5097, 0.33333334
  %v5222 = vmul.f32 %v5099, 0.33333334
  %v5223 = vmul.f32 %v5101, 0.33333334
  %v5224 = vmul.f32 %v5103, 0.33333334
  %v5225 = vmul.f32 %v5105, 0.33333334
  %v5226 = vmul.f32 %v5107, 0.33333334
  %v5227 = vmul.f32 %v5109, 0.33333334
  %v5228 = vmul.f32 %v5111, 0.33333334
  %v5229 = vmul.f32 %v5113, 0.33333334
  %v5230 = vmul.f32 %v5115, 0.33333334
  %v5231 = vmul.f32 %v5117, 0.33333334
  %v5232 = vmul.f32 %v5119, 0.33333334
  %v5233 = vmul.f32 %v5121, 0.33333334
  %v5234 = vmul.f32 %v5123, 0.33333334
  %v5235 = vmul.f32 %v5125, 0.33333334
  %v5236 = vmul.f32 %v5127, 0.33333334
  %v5237 = vmul.f32 %v5129, 0.33333334
  %v5238 = vmul.f32 %v5131, 0.33333334
  %v5239 = vmul.f32 %v5133, 0.33333334
  %v5240 = vmul.f32 %v5135, 0.33333334
  %v5241 = vmul.f32 %v5137, 0.33333334
  %v5242 = vmul.f32 %v5139, 0.33333334
  %v5243 = vmul.f32 %v5141, 0.33333334
  %v5244 = vmul.f32 %v5143, 0.33333334
  %v5245 = vmul.f32 %v5145, 0.33333334
  %v5246 = vmul.f32 %v5147, 0.33333334
  %v5247 = vmul.f32 %v5149, 0.33333334
  %v5248 = vmul.f32 %v5151, 0.33333334
  %v5249 = vmul.f32 %v5153, 0.33333334
  %v5250 = vmul.f32 %v5155, 0.33333334
  %v5251 = vmul.f32 %v5157, 0.33333334
  %v5252 = vmul.f32 %v5159, 0.33333334
  %v5253 = vmul.f32 %v5161, 0.33333334
  %v5254 = vmul.f32 %v5163, 0.33333334
  %v5255 = vmul.f32 %v5165, 0.33333334
  %v5256 = vmul.f32 %v5167, 0.33333334
  %v5257 = vmul.f32 %v5169, 0.33333334
  %v5258 = vmul.f32 %v5171, 0.33333334
  %v5259 = vmul.f32 %v5173, 0.33333334
  %v5260 = vmul.f32 %v5175, 0.33333334
  %v5261 = vmul.f32 %v5177, 0.33333334
  %v5262 = vmul.f32 %v5179, 0.33333334
  %v5263 = vmul.f32 %v5181, 0.33333334
  %v5264 = vmul.f32 %v5183, 0.33333334
  %v5265 = vmul.f32 %v5185, 0.33333334
  %v5266 = vmul.f32 %v5187, 0.33333334
  %v5267 = vmul.f32 %v5189, 0.33333334
  %v5268 = vmul.f32 %v5191, 0.33333334
  %v5269 = vmul.f32 %v5193, 0.33333334
  %v5270 = vmul.f32 %v5195, 0.33333334
  %v5271 = vmul.f32 %v5197, 0.33333334
  %v5272 = vmul.f32 %v5199, 0.33333334
  %v5273 = vmul.f32 %v5201, 0.33333334
  %v5274 = vmul.f32 %v5203, 0.33333334
  %v5275 = vmul.f32 %v5205, 0.33333334
  %v5276 = vmul.f32 %v5207, 0.33333334
  %v5277 = vmul.f32 %v5209, 0.33333334
  %v5278 = vmul.f32 %v5211, 0.33333334
  %v5279 = vmul.f32 %v5213, 0.33333334
  %v5280 = vmul.f32 %v5215, 0.33333334
  %v5281 = vmul.f32 %v5217, 0.33333334
  %v5282 = vmul.f32 %v5218, 1.442695
  %v5283 = vpow.pop %v5282
  %v5284 = vmul.f32 %v5219, 1.442695
  %v5285 = vpow.pop %v5284
  %v5286 = vmul.f32 %v5220, 1.442695
  %v5287 = vpow.pop %v5286
  %v5288 = vmul.f32 %v5221, 1.442695
  %v5289 = vpow.pop %v5288
  %v5290 = vmul.f32 %v5222, 1.442695
  %v5291 = vpow.pop %v5290
  %v5292 = vmul.f32 %v5223, 1.442695
  %v5293 = vpow.pop %v5292
  %v5294 = vmul.f32 %v5224, 1.442695
  %v5295 = vpow.pop %v5294
  %v5296 = vmul.f32 %v5225, 1.442695
  %v5297 = vpow.pop %v5296
  %v5298 = vmul.f32 %v5226, 1.442695
  %v5299 = vpow.pop %v5298
  %v5300 = vmul.f32 %v5227, 1.442695
  %v5301 = vpow.pop %v5300
  %v5302 = vmul.f32 %v5228, 1.442695
  %v5303 = vpow.pop %v5302
  %v5304 = vmul.f32 %v5229, 1.442695
  %v5305 = vpow.pop %v5304
  %v5306 = vmul.f32 %v5230, 1.442695
  %v5307 = vpow.pop %v5306
  %v5308 = vmul.f32 %v5231, 1.442695
  %v5309 = vpow.pop %v5308
  %v5310 = vmul.f32 %v5232, 1.442695
  %v5311 = vpow.pop %v5310
  %v5312 = vmul.f32 %v5233, 1.442695
  %v5313 = vpow.pop %v5312
  %v5314 = vmul.f32 %v5234, 1.442695
  %v5315 = vpow.pop %v5314
  %v5316 = vmul.f32 %v5235, 1.442695
  %v5317 = vpow.pop %v5316
  %v5318 = vmul.f32 %v5236, 1.442695
  %v5319 = vpow.pop %v5318
  %v5320 = vmul.f32 %v5237, 1.442695
  %v5321 = vpow.pop %v5320
  %v5322 = vmul.f32 %v5238, 1.442695
  %v5323 = vpow.pop %v5322
  %v5324 = vmul.f32 %v5239, 1.442695
  %v5325 = vpow.pop %v5324
  %v5326 = vmul.f32 %v5240, 1.442695
  %v5327 = vpow.pop %v5326
  %v5328 = vmul.f32 %v5241, 1.442695
  %v5329 = vpow.pop %v5328
  %v5330 = vmul.f32 %v5242, 1.442695
  %v5331 = vpow.pop %v5330
  %v5332 = vmul.f32 %v5243, 1.442695
  %v5333 = vpow.pop %v5332
  %v5334 = vmul.f32 %v5244, 1.442695
  %v5335 = vpow.pop %v5334
  %v5336 = vmul.f32 %v5245, 1.442695
  %v5337 = vpow.pop %v5336
  %v5338 = vmul.f32 %v5246, 1.442695
  %v5339 = vpow.pop %v5338
  %v5340 = vmul.f32 %v5247, 1.442695
  %v5341 = vpow.pop %v5340
  %v5342 = vmul.f32 %v5248, 1.442695
  %v5343 = vpow.pop %v5342
  %v5344 = vmul.f32 %v5249, 1.442695
  %v5345 = vpow.pop %v5344
  %v5346 = vmul.f32 %v5250, 1.442695
  %v5347 = vpow.pop %v5346
  %v5348 = vmul.f32 %v5251, 1.442695
  %v5349 = vpow.pop %v5348
  %v5350 = vmul.f32 %v5252, 1.442695
  %v5351 = vpow.pop %v5350
  %v5352 = vmul.f32 %v5253, 1.442695
  %v5353 = vpow.pop %v5352
  %v5354 = vmul.f32 %v5254, 1.442695
  %v5355 = vpow.pop %v5354
  %v5356 = vmul.f32 %v5255, 1.442695
  %v5357 = vpow.pop %v5356
  %v5358 = vmul.f32 %v5256, 1.442695
  %v5359 = vpow.pop %v5358
  %v5360 = vmul.f32 %v5257, 1.442695
  %v5361 = vpow.pop %v5360
  %v5362 = vmul.f32 %v5258, 1.442695
  %v5363 = vpow.pop %v5362
  %v5364 = vmul.f32 %v5259, 1.442695
  %v5365 = vpow.pop %v5364
  %v5366 = vmul.f32 %v5260, 1.442695
  %v5367 = vpow.pop %v5366
  %v5368 = vmul.f32 %v5261, 1.442695
  %v5369 = vpow.pop %v5368
  %v5370 = vmul.f32 %v5262, 1.442695
  %v5371 = vpow.pop %v5370
  %v5372 = vmul.f32 %v5263, 1.442695
  %v5373 = vpow.pop %v5372
  %v5374 = vmul.f32 %v5264, 1.442695
  %v5375 = vpow.pop %v5374
  %v5376 = vmul.f32 %v5265, 1.442695
  %v5377 = vpow.pop %v5376
  %v5378 = vmul.f32 %v5266, 1.442695
  %v5379 = vpow.pop %v5378
  %v5380 = vmul.f32 %v5267, 1.442695
  %v5381 = vpow.pop %v5380
  %v5382 = vmul.f32 %v5268, 1.442695
  %v5383 = vpow.pop %v5382
  %v5384 = vmul.f32 %v5269, 1.442695
  %v5385 = vpow.pop %v5384
  %v5386 = vmul.f32 %v5270, 1.442695
  %v5387 = vpow.pop %v5386
  %v5388 = vmul.f32 %v5271, 1.442695
  %v5389 = vpow.pop %v5388
  %v5390 = vmul.f32 %v5272, 1.442695
  %v5391 = vpow.pop %v5390
  %v5392 = vmul.f32 %v5273, 1.442695
  %v5393 = vpow.pop %v5392
  %v5394 = vmul.f32 %v5274, 1.442695
  %v5395 = vpow.pop %v5394
  %v5396 = vmul.f32 %v5275, 1.442695
  %v5397 = vpow.pop %v5396
  %v5398 = vmul.f32 %v5276, 1.442695
  %v5399 = vpow.pop %v5398
  %v5400 = vmul.f32 %v5277, 1.442695
  %v5401 = vpow.pop %v5400
  %v5402 = vmul.f32 %v5278, 1.442695
  %v5403 = vpow.pop %v5402
  %v5404 = vmul.f32 %v5279, 1.442695
  %v5405 = vpow.pop %v5404
  %v5406 = vmul.f32 %v5280, 1.442695
  %v5407 = vpow.pop %v5406
  %v5408 = vmul.f32 %v5281, 1.442695
  %v5409 = vpow.pop %v5408
  %v5475 = vunpack.c.l.s4 269488144
  %v5476 = vunpack.c.0.s8 %v5475
  %v5477 = vperm.slane %v5283, %v5476
  %v5479 = vunpack.c.l.s4 842150450
  %v5480 = vunpack.c.0.s8 %v5479
  %v5481 = vperm.slane %v5283, %v5480
  %v5483 = vunpack.c.l.s4 1414812756
  %v5484 = vunpack.c.0.s8 %v5483
  %v5485 = vperm.slane %v5283, %v5484
  %v5487 = vunpack.c.l.s4 1987475062
  %v5488 = vunpack.c.0.s8 %v5487
  %v5489 = vperm.slane %v5283, %v5488
  %v5491 = vunpack.c.l.s4 269488144
  %v5492 = vunpack.c.0.s8 %v5491
  %v5493 = vperm.slane %v5285, %v5492
  %v5495 = vunpack.c.l.s4 842150450
  %v5496 = vunpack.c.0.s8 %v5495
  %v5497 = vperm.slane %v5285, %v5496
  %v5499 = vunpack.c.l.s4 1414812756
  %v5500 = vunpack.c.0.s8 %v5499
  %v5501 = vperm.slane %v5285, %v5500
  %v5503 = vunpack.c.l.s4 1987475062
  %v5504 = vunpack.c.0.s8 %v5503
  %v5505 = vperm.slane %v5285, %v5504
  %v5507 = vunpack.c.l.s4 269488144
  %v5508 = vunpack.c.0.s8 %v5507
  %v5509 = vperm.slane %v5287, %v5508
  %v5511 = vunpack.c.l.s4 842150450
  %v5512 = vunpack.c.0.s8 %v5511
  %v5513 = vperm.slane %v5287, %v5512
  %v5515 = vunpack.c.l.s4 1414812756
  %v5516 = vunpack.c.0.s8 %v5515
  %v5517 = vperm.slane %v5287, %v5516
  %v5519 = vunpack.c.l.s4 1987475062
  %v5520 = vunpack.c.0.s8 %v5519
  %v5521 = vperm.slane %v5287, %v5520
  %v5523 = vunpack.c.l.s4 269488144
  %v5524 = vunpack.c.0.s8 %v5523
  %v5525 = vperm.slane %v5289, %v5524
  %v5527 = vunpack.c.l.s4 842150450
  %v5528 = vunpack.c.0.s8 %v5527
  %v5529 = vperm.slane %v5289, %v5528
  %v5531 = vunpack.c.l.s4 1414812756
  %v5532 = vunpack.c.0.s8 %v5531
  %v5533 = vperm.slane %v5289, %v5532
  %v5535 = vunpack.c.l.s4 1987475062
  %v5536 = vunpack.c.0.s8 %v5535
  %v5537 = vperm.slane %v5289, %v5536
  %v5539 = vunpack.c.l.s4 269488144
  %v5540 = vunpack.c.0.s8 %v5539
  %v5541 = vperm.slane %v5291, %v5540
  %v5543 = vunpack.c.l.s4 842150450
  %v5544 = vunpack.c.0.s8 %v5543
  %v5545 = vperm.slane %v5291, %v5544
  %v5547 = vunpack.c.l.s4 1414812756
  %v5548 = vunpack.c.0.s8 %v5547
  %v5549 = vperm.slane %v5291, %v5548
  %v5551 = vunpack.c.l.s4 1987475062
  %v5552 = vunpack.c.0.s8 %v5551
  %v5553 = vperm.slane %v5291, %v5552
  %v5555 = vunpack.c.l.s4 269488144
  %v5556 = vunpack.c.0.s8 %v5555
  %v5557 = vperm.slane %v5293, %v5556
  %v5559 = vunpack.c.l.s4 842150450
  %v5560 = vunpack.c.0.s8 %v5559
  %v5561 = vperm.slane %v5293, %v5560
  %v5563 = vunpack.c.l.s4 1414812756
  %v5564 = vunpack.c.0.s8 %v5563
  %v5565 = vperm.slane %v5293, %v5564
  %v5567 = vunpack.c.l.s4 1987475062
  %v5568 = vunpack.c.0.s8 %v5567
  %v5569 = vperm.slane %v5293, %v5568
  %v5571 = vunpack.c.l.s4 269488144
  %v5572 = vunpack.c.0.s8 %v5571
  %v5573 = vperm.slane %v5295, %v5572
  %v5575 = vunpack.c.l.s4 842150450
  %v5576 = vunpack.c.0.s8 %v5575
  %v5577 = vperm.slane %v5295, %v5576
  %v5579 = vunpack.c.l.s4 1414812756
  %v5580 = vunpack.c.0.s8 %v5579
  %v5581 = vperm.slane %v5295, %v5580
  %v5583 = vunpack.c.l.s4 1987475062
  %v5584 = vunpack.c.0.s8 %v5583
  %v5585 = vperm.slane %v5295, %v5584
  %v5587 = vunpack.c.l.s4 269488144
  %v5588 = vunpack.c.0.s8 %v5587
  %v5589 = vperm.slane %v5297, %v5588
  %v5591 = vunpack.c.l.s4 842150450
  %v5592 = vunpack.c.0.s8 %v5591
  %v5593 = vperm.slane %v5297, %v5592
  %v5595 = vunpack.c.l.s4 1414812756
  %v5596 = vunpack.c.0.s8 %v5595
  %v5597 = vperm.slane %v5297, %v5596
  %v5599 = vunpack.c.l.s4 1987475062
  %v5600 = vunpack.c.0.s8 %v5599
  %v5601 = vperm.slane %v5297, %v5600
  %v5603 = vunpack.c.l.s4 269488144
  %v5604 = vunpack.c.0.s8 %v5603
  %v5605 = vperm.slane %v5299, %v5604
  %v5607 = vunpack.c.l.s4 842150450
  %v5608 = vunpack.c.0.s8 %v5607
  %v5609 = vperm.slane %v5299, %v5608
  %v5611 = vunpack.c.l.s4 1414812756
  %v5612 = vunpack.c.0.s8 %v5611
  %v5613 = vperm.slane %v5299, %v5612
  %v5615 = vunpack.c.l.s4 1987475062
  %v5616 = vunpack.c.0.s8 %v5615
  %v5617 = vperm.slane %v5299, %v5616
  %v5619 = vunpack.c.l.s4 269488144
  %v5620 = vunpack.c.0.s8 %v5619
  %v5621 = vperm.slane %v5301, %v5620
  %v5623 = vunpack.c.l.s4 842150450
  %v5624 = vunpack.c.0.s8 %v5623
  %v5625 = vperm.slane %v5301, %v5624
  %v5627 = vunpack.c.l.s4 1414812756
  %v5628 = vunpack.c.0.s8 %v5627
  %v5629 = vperm.slane %v5301, %v5628
  %v5631 = vunpack.c.l.s4 1987475062
  %v5632 = vunpack.c.0.s8 %v5631
  %v5633 = vperm.slane %v5301, %v5632
  %v5635 = vunpack.c.l.s4 269488144
  %v5636 = vunpack.c.0.s8 %v5635
  %v5637 = vperm.slane %v5303, %v5636
  %v5639 = vunpack.c.l.s4 842150450
  %v5640 = vunpack.c.0.s8 %v5639
  %v5641 = vperm.slane %v5303, %v5640
  %v5643 = vunpack.c.l.s4 1414812756
  %v5644 = vunpack.c.0.s8 %v5643
  %v5645 = vperm.slane %v5303, %v5644
  %v5647 = vunpack.c.l.s4 1987475062
  %v5648 = vunpack.c.0.s8 %v5647
  %v5649 = vperm.slane %v5303, %v5648
  %v5651 = vunpack.c.l.s4 269488144
  %v5652 = vunpack.c.0.s8 %v5651
  %v5653 = vperm.slane %v5305, %v5652
  %v5655 = vunpack.c.l.s4 842150450
  %v5656 = vunpack.c.0.s8 %v5655
  %v5657 = vperm.slane %v5305, %v5656
  %v5659 = vunpack.c.l.s4 1414812756
  %v5660 = vunpack.c.0.s8 %v5659
  %v5661 = vperm.slane %v5305, %v5660
  %v5663 = vunpack.c.l.s4 1987475062
  %v5664 = vunpack.c.0.s8 %v5663
  %v5665 = vperm.slane %v5305, %v5664
  %v5667 = vunpack.c.l.s4 269488144
  %v5668 = vunpack.c.0.s8 %v5667
  %v5669 = vperm.slane %v5307, %v5668
  %v5671 = vunpack.c.l.s4 842150450
  %v5672 = vunpack.c.0.s8 %v5671
  %v5673 = vperm.slane %v5307, %v5672
  %v5675 = vunpack.c.l.s4 1414812756
  %v5676 = vunpack.c.0.s8 %v5675
  %v5677 = vperm.slane %v5307, %v5676
  %v5679 = vunpack.c.l.s4 1987475062
  %v5680 = vunpack.c.0.s8 %v5679
  %v5681 = vperm.slane %v5307, %v5680
  %v5683 = vunpack.c.l.s4 269488144
  %v5684 = vunpack.c.0.s8 %v5683
  %v5685 = vperm.slane %v5309, %v5684
  %v5687 = vunpack.c.l.s4 842150450
  %v5688 = vunpack.c.0.s8 %v5687
  %v5689 = vperm.slane %v5309, %v5688
  %v5691 = vunpack.c.l.s4 1414812756
  %v5692 = vunpack.c.0.s8 %v5691
  %v5693 = vperm.slane %v5309, %v5692
  %v5695 = vunpack.c.l.s4 1987475062
  %v5696 = vunpack.c.0.s8 %v5695
  %v5697 = vperm.slane %v5309, %v5696
  %v5699 = vunpack.c.l.s4 269488144
  %v5700 = vunpack.c.0.s8 %v5699
  %v5701 = vperm.slane %v5311, %v5700
  %v5703 = vunpack.c.l.s4 842150450
  %v5704 = vunpack.c.0.s8 %v5703
  %v5705 = vperm.slane %v5311, %v5704
  %v5707 = vunpack.c.l.s4 1414812756
  %v5708 = vunpack.c.0.s8 %v5707
  %v5709 = vperm.slane %v5311, %v5708
  %v5711 = vunpack.c.l.s4 1987475062
  %v5712 = vunpack.c.0.s8 %v5711
  %v5713 = vperm.slane %v5311, %v5712
  %v5715 = vunpack.c.l.s4 269488144
  %v5716 = vunpack.c.0.s8 %v5715
  %v5717 = vperm.slane %v5313, %v5716
  %v5719 = vunpack.c.l.s4 842150450
  %v5720 = vunpack.c.0.s8 %v5719
  %v5721 = vperm.slane %v5313, %v5720
  %v5723 = vunpack.c.l.s4 1414812756
  %v5724 = vunpack.c.0.s8 %v5723
  %v5725 = vperm.slane %v5313, %v5724
  %v5727 = vunpack.c.l.s4 1987475062
  %v5728 = vunpack.c.0.s8 %v5727
  %v5729 = vperm.slane %v5313, %v5728
  %v5731 = vunpack.c.l.s4 269488144
  %v5732 = vunpack.c.0.s8 %v5731
  %v5733 = vperm.slane %v5315, %v5732
  %v5735 = vunpack.c.l.s4 842150450
  %v5736 = vunpack.c.0.s8 %v5735
  %v5737 = vperm.slane %v5315, %v5736
  %v5739 = vunpack.c.l.s4 1414812756
  %v5740 = vunpack.c.0.s8 %v5739
  %v5741 = vperm.slane %v5315, %v5740
  %v5743 = vunpack.c.l.s4 1987475062
  %v5744 = vunpack.c.0.s8 %v5743
  %v5745 = vperm.slane %v5315, %v5744
  %v5747 = vunpack.c.l.s4 269488144
  %v5748 = vunpack.c.0.s8 %v5747
  %v5749 = vperm.slane %v5317, %v5748
  %v5751 = vunpack.c.l.s4 842150450
  %v5752 = vunpack.c.0.s8 %v5751
  %v5753 = vperm.slane %v5317, %v5752
  %v5755 = vunpack.c.l.s4 1414812756
  %v5756 = vunpack.c.0.s8 %v5755
  %v5757 = vperm.slane %v5317, %v5756
  %v5759 = vunpack.c.l.s4 1987475062
  %v5760 = vunpack.c.0.s8 %v5759
  %v5761 = vperm.slane %v5317, %v5760
  %v5763 = vunpack.c.l.s4 269488144
  %v5764 = vunpack.c.0.s8 %v5763
  %v5765 = vperm.slane %v5319, %v5764
  %v5767 = vunpack.c.l.s4 842150450
  %v5768 = vunpack.c.0.s8 %v5767
  %v5769 = vperm.slane %v5319, %v5768
  %v5771 = vunpack.c.l.s4 1414812756
  %v5772 = vunpack.c.0.s8 %v5771
  %v5773 = vperm.slane %v5319, %v5772
  %v5775 = vunpack.c.l.s4 1987475062
  %v5776 = vunpack.c.0.s8 %v5775
  %v5777 = vperm.slane %v5319, %v5776
  %v5779 = vunpack.c.l.s4 269488144
  %v5780 = vunpack.c.0.s8 %v5779
  %v5781 = vperm.slane %v5321, %v5780
  %v5783 = vunpack.c.l.s4 842150450
  %v5784 = vunpack.c.0.s8 %v5783
  %v5785 = vperm.slane %v5321, %v5784
  %v5787 = vunpack.c.l.s4 1414812756
  %v5788 = vunpack.c.0.s8 %v5787
  %v5789 = vperm.slane %v5321, %v5788
  %v5791 = vunpack.c.l.s4 1987475062
  %v5792 = vunpack.c.0.s8 %v5791
  %v5793 = vperm.slane %v5321, %v5792
  %v5795 = vunpack.c.l.s4 269488144
  %v5796 = vunpack.c.0.s8 %v5795
  %v5797 = vperm.slane %v5323, %v5796
  %v5799 = vunpack.c.l.s4 842150450
  %v5800 = vunpack.c.0.s8 %v5799
  %v5801 = vperm.slane %v5323, %v5800
  %v5803 = vunpack.c.l.s4 1414812756
  %v5804 = vunpack.c.0.s8 %v5803
  %v5805 = vperm.slane %v5323, %v5804
  %v5807 = vunpack.c.l.s4 1987475062
  %v5808 = vunpack.c.0.s8 %v5807
  %v5809 = vperm.slane %v5323, %v5808
  %v5811 = vunpack.c.l.s4 269488144
  %v5812 = vunpack.c.0.s8 %v5811
  %v5813 = vperm.slane %v5325, %v5812
  %v5815 = vunpack.c.l.s4 842150450
  %v5816 = vunpack.c.0.s8 %v5815
  %v5817 = vperm.slane %v5325, %v5816
  %v5819 = vunpack.c.l.s4 1414812756
  %v5820 = vunpack.c.0.s8 %v5819
  %v5821 = vperm.slane %v5325, %v5820
  %v5823 = vunpack.c.l.s4 1987475062
  %v5824 = vunpack.c.0.s8 %v5823
  %v5825 = vperm.slane %v5325, %v5824
  %v5827 = vunpack.c.l.s4 269488144
  %v5828 = vunpack.c.0.s8 %v5827
  %v5829 = vperm.slane %v5327, %v5828
  %v5831 = vunpack.c.l.s4 842150450
  %v5832 = vunpack.c.0.s8 %v5831
  %v5833 = vperm.slane %v5327, %v5832
  %v5835 = vunpack.c.l.s4 1414812756
  %v5836 = vunpack.c.0.s8 %v5835
  %v5837 = vperm.slane %v5327, %v5836
  %v5839 = vunpack.c.l.s4 1987475062
  %v5840 = vunpack.c.0.s8 %v5839
  %v5841 = vperm.slane %v5327, %v5840
  %v5843 = vunpack.c.l.s4 269488144
  %v5844 = vunpack.c.0.s8 %v5843
  %v5845 = vperm.slane %v5329, %v5844
  %v5847 = vunpack.c.l.s4 842150450
  %v5848 = vunpack.c.0.s8 %v5847
  %v5849 = vperm.slane %v5329, %v5848
  %v5851 = vunpack.c.l.s4 1414812756
  %v5852 = vunpack.c.0.s8 %v5851
  %v5853 = vperm.slane %v5329, %v5852
  %v5855 = vunpack.c.l.s4 1987475062
  %v5856 = vunpack.c.0.s8 %v5855
  %v5857 = vperm.slane %v5329, %v5856
  %v5859 = vunpack.c.l.s4 269488144
  %v5860 = vunpack.c.0.s8 %v5859
  %v5861 = vperm.slane %v5331, %v5860
  %v5863 = vunpack.c.l.s4 842150450
  %v5864 = vunpack.c.0.s8 %v5863
  %v5865 = vperm.slane %v5331, %v5864
  %v5867 = vunpack.c.l.s4 1414812756
  %v5868 = vunpack.c.0.s8 %v5867
  %v5869 = vperm.slane %v5331, %v5868
  %v5871 = vunpack.c.l.s4 1987475062
  %v5872 = vunpack.c.0.s8 %v5871
  %v5873 = vperm.slane %v5331, %v5872
  %v5875 = vunpack.c.l.s4 269488144
  %v5876 = vunpack.c.0.s8 %v5875
  %v5877 = vperm.slane %v5333, %v5876
  %v5879 = vunpack.c.l.s4 842150450
  %v5880 = vunpack.c.0.s8 %v5879
  %v5881 = vperm.slane %v5333, %v5880
  %v5883 = vunpack.c.l.s4 1414812756
  %v5884 = vunpack.c.0.s8 %v5883
  %v5885 = vperm.slane %v5333, %v5884
  %v5887 = vunpack.c.l.s4 1987475062
  %v5888 = vunpack.c.0.s8 %v5887
  %v5889 = vperm.slane %v5333, %v5888
  %v5891 = vunpack.c.l.s4 269488144
  %v5892 = vunpack.c.0.s8 %v5891
  %v5893 = vperm.slane %v5335, %v5892
  %v5895 = vunpack.c.l.s4 842150450
  %v5896 = vunpack.c.0.s8 %v5895
  %v5897 = vperm.slane %v5335, %v5896
  %v5899 = vunpack.c.l.s4 1414812756
  %v5900 = vunpack.c.0.s8 %v5899
  %v5901 = vperm.slane %v5335, %v5900
  %v5903 = vunpack.c.l.s4 1987475062
  %v5904 = vunpack.c.0.s8 %v5903
  %v5905 = vperm.slane %v5335, %v5904
  %v5907 = vunpack.c.l.s4 269488144
  %v5908 = vunpack.c.0.s8 %v5907
  %v5909 = vperm.slane %v5337, %v5908
  %v5911 = vunpack.c.l.s4 842150450
  %v5912 = vunpack.c.0.s8 %v5911
  %v5913 = vperm.slane %v5337, %v5912
  %v5915 = vunpack.c.l.s4 1414812756
  %v5916 = vunpack.c.0.s8 %v5915
  %v5917 = vperm.slane %v5337, %v5916
  %v5919 = vunpack.c.l.s4 1987475062
  %v5920 = vunpack.c.0.s8 %v5919
  %v5921 = vperm.slane %v5337, %v5920
  %v5923 = vunpack.c.l.s4 269488144
  %v5924 = vunpack.c.0.s8 %v5923
  %v5925 = vperm.slane %v5339, %v5924
  %v5927 = vunpack.c.l.s4 842150450
  %v5928 = vunpack.c.0.s8 %v5927
  %v5929 = vperm.slane %v5339, %v5928
  %v5931 = vunpack.c.l.s4 1414812756
  %v5932 = vunpack.c.0.s8 %v5931
  %v5933 = vperm.slane %v5339, %v5932
  %v5935 = vunpack.c.l.s4 1987475062
  %v5936 = vunpack.c.0.s8 %v5935
  %v5937 = vperm.slane %v5339, %v5936
  %v5939 = vunpack.c.l.s4 269488144
  %v5940 = vunpack.c.0.s8 %v5939
  %v5941 = vperm.slane %v5341, %v5940
  %v5943 = vunpack.c.l.s4 842150450
  %v5944 = vunpack.c.0.s8 %v5943
  %v5945 = vperm.slane %v5341, %v5944
  %v5947 = vunpack.c.l.s4 1414812756
  %v5948 = vunpack.c.0.s8 %v5947
  %v5949 = vperm.slane %v5341, %v5948
  %v5951 = vunpack.c.l.s4 1987475062
  %v5952 = vunpack.c.0.s8 %v5951
  %v5953 = vperm.slane %v5341, %v5952
  %v5955 = vunpack.c.l.s4 269488144
  %v5956 = vunpack.c.0.s8 %v5955
  %v5957 = vperm.slane %v5343, %v5956
  %v5959 = vunpack.c.l.s4 842150450
  %v5960 = vunpack.c.0.s8 %v5959
  %v5961 = vperm.slane %v5343, %v5960
  %v5963 = vunpack.c.l.s4 1414812756
  %v5964 = vunpack.c.0.s8 %v5963
  %v5965 = vperm.slane %v5343, %v5964
  %v5967 = vunpack.c.l.s4 1987475062
  %v5968 = vunpack.c.0.s8 %v5967
  %v5969 = vperm.slane %v5343, %v5968
  %v5971 = vunpack.c.l.s4 269488144
  %v5972 = vunpack.c.0.s8 %v5971
  %v5973 = vperm.slane %v5345, %v5972
  %v5975 = vunpack.c.l.s4 842150450
  %v5976 = vunpack.c.0.s8 %v5975
  %v5977 = vperm.slane %v5345, %v5976
  %v5979 = vunpack.c.l.s4 1414812756
  %v5980 = vunpack.c.0.s8 %v5979
  %v5981 = vperm.slane %v5345, %v5980
  %v5983 = vunpack.c.l.s4 1987475062
  %v5984 = vunpack.c.0.s8 %v5983
  %v5985 = vperm.slane %v5345, %v5984
  %v5987 = vunpack.c.l.s4 269488144
  %v5988 = vunpack.c.0.s8 %v5987
  %v5989 = vperm.slane %v5347, %v5988
  %v5991 = vunpack.c.l.s4 842150450
  %v5992 = vunpack.c.0.s8 %v5991
  %v5993 = vperm.slane %v5347, %v5992
  %v5995 = vunpack.c.l.s4 1414812756
  %v5996 = vunpack.c.0.s8 %v5995
  %v5997 = vperm.slane %v5347, %v5996
  %v5999 = vunpack.c.l.s4 1987475062
  %v6000 = vunpack.c.0.s8 %v5999
  %v6001 = vperm.slane %v5347, %v6000
  %v6003 = vunpack.c.l.s4 269488144
  %v6004 = vunpack.c.0.s8 %v6003
  %v6005 = vperm.slane %v5349, %v6004
  %v6007 = vunpack.c.l.s4 842150450
  %v6008 = vunpack.c.0.s8 %v6007
  %v6009 = vperm.slane %v5349, %v6008
  %v6011 = vunpack.c.l.s4 1414812756
  %v6012 = vunpack.c.0.s8 %v6011
  %v6013 = vperm.slane %v5349, %v6012
  %v6015 = vunpack.c.l.s4 1987475062
  %v6016 = vunpack.c.0.s8 %v6015
  %v6017 = vperm.slane %v5349, %v6016
  %v6019 = vunpack.c.l.s4 269488144
  %v6020 = vunpack.c.0.s8 %v6019
  %v6021 = vperm.slane %v5351, %v6020
  %v6023 = vunpack.c.l.s4 842150450
  %v6024 = vunpack.c.0.s8 %v6023
  %v6025 = vperm.slane %v5351, %v6024
  %v6027 = vunpack.c.l.s4 1414812756
  %v6028 = vunpack.c.0.s8 %v6027
  %v6029 = vperm.slane %v5351, %v6028
  %v6031 = vunpack.c.l.s4 1987475062
  %v6032 = vunpack.c.0.s8 %v6031
  %v6033 = vperm.slane %v5351, %v6032
  %v6035 = vunpack.c.l.s4 269488144
  %v6036 = vunpack.c.0.s8 %v6035
  %v6037 = vperm.slane %v5353, %v6036
  %v6039 = vunpack.c.l.s4 842150450
  %v6040 = vunpack.c.0.s8 %v6039
  %v6041 = vperm.slane %v5353, %v6040
  %v6043 = vunpack.c.l.s4 1414812756
  %v6044 = vunpack.c.0.s8 %v6043
  %v6045 = vperm.slane %v5353, %v6044
  %v6047 = vunpack.c.l.s4 1987475062
  %v6048 = vunpack.c.0.s8 %v6047
  %v6049 = vperm.slane %v5353, %v6048
  %v6051 = vunpack.c.l.s4 269488144
  %v6052 = vunpack.c.0.s8 %v6051
  %v6053 = vperm.slane %v5355, %v6052
  %v6055 = vunpack.c.l.s4 842150450
  %v6056 = vunpack.c.0.s8 %v6055
  %v6057 = vperm.slane %v5355, %v6056
  %v6059 = vunpack.c.l.s4 1414812756
  %v6060 = vunpack.c.0.s8 %v6059
  %v6061 = vperm.slane %v5355, %v6060
  %v6063 = vunpack.c.l.s4 1987475062
  %v6064 = vunpack.c.0.s8 %v6063
  %v6065 = vperm.slane %v5355, %v6064
  %v6067 = vunpack.c.l.s4 269488144
  %v6068 = vunpack.c.0.s8 %v6067
  %v6069 = vperm.slane %v5357, %v6068
  %v6071 = vunpack.c.l.s4 842150450
  %v6072 = vunpack.c.0.s8 %v6071
  %v6073 = vperm.slane %v5357, %v6072
  %v6075 = vunpack.c.l.s4 1414812756
  %v6076 = vunpack.c.0.s8 %v6075
  %v6077 = vperm.slane %v5357, %v6076
  %v6079 = vunpack.c.l.s4 1987475062
  %v6080 = vunpack.c.0.s8 %v6079
  %v6081 = vperm.slane %v5357, %v6080
  %v6083 = vunpack.c.l.s4 269488144
  %v6084 = vunpack.c.0.s8 %v6083
  %v6085 = vperm.slane %v5359, %v6084
  %v6087 = vunpack.c.l.s4 842150450
  %v6088 = vunpack.c.0.s8 %v6087
  %v6089 = vperm.slane %v5359, %v6088
  %v6091 = vunpack.c.l.s4 1414812756
  %v6092 = vunpack.c.0.s8 %v6091
  %v6093 = vperm.slane %v5359, %v6092
  %v6095 = vunpack.c.l.s4 1987475062
  %v6096 = vunpack.c.0.s8 %v6095
  %v6097 = vperm.slane %v5359, %v6096
  %v6099 = vunpack.c.l.s4 269488144
  %v6100 = vunpack.c.0.s8 %v6099
  %v6101 = vperm.slane %v5361, %v6100
  %v6103 = vunpack.c.l.s4 842150450
  %v6104 = vunpack.c.0.s8 %v6103
  %v6105 = vperm.slane %v5361, %v6104
  %v6107 = vunpack.c.l.s4 1414812756
  %v6108 = vunpack.c.0.s8 %v6107
  %v6109 = vperm.slane %v5361, %v6108
  %v6111 = vunpack.c.l.s4 1987475062
  %v6112 = vunpack.c.0.s8 %v6111
  %v6113 = vperm.slane %v5361, %v6112
  %v6115 = vunpack.c.l.s4 269488144
  %v6116 = vunpack.c.0.s8 %v6115
  %v6117 = vperm.slane %v5363, %v6116
  %v6119 = vunpack.c.l.s4 842150450
  %v6120 = vunpack.c.0.s8 %v6119
  %v6121 = vperm.slane %v5363, %v6120
  %v6123 = vunpack.c.l.s4 1414812756
  %v6124 = vunpack.c.0.s8 %v6123
  %v6125 = vperm.slane %v5363, %v6124
  %v6127 = vunpack.c.l.s4 1987475062
  %v6128 = vunpack.c.0.s8 %v6127
  %v6129 = vperm.slane %v5363, %v6128
  %v6131 = vunpack.c.l.s4 269488144
  %v6132 = vunpack.c.0.s8 %v6131
  %v6133 = vperm.slane %v5365, %v6132
  %v6135 = vunpack.c.l.s4 842150450
  %v6136 = vunpack.c.0.s8 %v6135
  %v6137 = vperm.slane %v5365, %v6136
  %v6139 = vunpack.c.l.s4 1414812756
  %v6140 = vunpack.c.0.s8 %v6139
  %v6141 = vperm.slane %v5365, %v6140
  %v6143 = vunpack.c.l.s4 1987475062
  %v6144 = vunpack.c.0.s8 %v6143
  %v6145 = vperm.slane %v5365, %v6144
  %v6147 = vunpack.c.l.s4 269488144
  %v6148 = vunpack.c.0.s8 %v6147
  %v6149 = vperm.slane %v5367, %v6148
  %v6151 = vunpack.c.l.s4 842150450
  %v6152 = vunpack.c.0.s8 %v6151
  %v6153 = vperm.slane %v5367, %v6152
  %v6155 = vunpack.c.l.s4 1414812756
  %v6156 = vunpack.c.0.s8 %v6155
  %v6157 = vperm.slane %v5367, %v6156
  %v6159 = vunpack.c.l.s4 1987475062
  %v6160 = vunpack.c.0.s8 %v6159
  %v6161 = vperm.slane %v5367, %v6160
  %v6163 = vunpack.c.l.s4 269488144
  %v6164 = vunpack.c.0.s8 %v6163
  %v6165 = vperm.slane %v5369, %v6164
  %v6167 = vunpack.c.l.s4 842150450
  %v6168 = vunpack.c.0.s8 %v6167
  %v6169 = vperm.slane %v5369, %v6168
  %v6171 = vunpack.c.l.s4 1414812756
  %v6172 = vunpack.c.0.s8 %v6171
  %v6173 = vperm.slane %v5369, %v6172
  %v6175 = vunpack.c.l.s4 1987475062
  %v6176 = vunpack.c.0.s8 %v6175
  %v6177 = vperm.slane %v5369, %v6176
  %v6179 = vunpack.c.l.s4 269488144
  %v6180 = vunpack.c.0.s8 %v6179
  %v6181 = vperm.slane %v5371, %v6180
  %v6183 = vunpack.c.l.s4 842150450
  %v6184 = vunpack.c.0.s8 %v6183
  %v6185 = vperm.slane %v5371, %v6184
  %v6187 = vunpack.c.l.s4 1414812756
  %v6188 = vunpack.c.0.s8 %v6187
  %v6189 = vperm.slane %v5371, %v6188
  %v6191 = vunpack.c.l.s4 1987475062
  %v6192 = vunpack.c.0.s8 %v6191
  %v6193 = vperm.slane %v5371, %v6192
  %v6195 = vunpack.c.l.s4 269488144
  %v6196 = vunpack.c.0.s8 %v6195
  %v6197 = vperm.slane %v5373, %v6196
  %v6199 = vunpack.c.l.s4 842150450
  %v6200 = vunpack.c.0.s8 %v6199
  %v6201 = vperm.slane %v5373, %v6200
  %v6203 = vunpack.c.l.s4 1414812756
  %v6204 = vunpack.c.0.s8 %v6203
  %v6205 = vperm.slane %v5373, %v6204
  %v6207 = vunpack.c.l.s4 1987475062
  %v6208 = vunpack.c.0.s8 %v6207
  %v6209 = vperm.slane %v5373, %v6208
  %v6211 = vunpack.c.l.s4 269488144
  %v6212 = vunpack.c.0.s8 %v6211
  %v6213 = vperm.slane %v5375, %v6212
  %v6215 = vunpack.c.l.s4 842150450
  %v6216 = vunpack.c.0.s8 %v6215
  %v6217 = vperm.slane %v5375, %v6216
  %v6219 = vunpack.c.l.s4 1414812756
  %v6220 = vunpack.c.0.s8 %v6219
  %v6221 = vperm.slane %v5375, %v6220
  %v6223 = vunpack.c.l.s4 1987475062
  %v6224 = vunpack.c.0.s8 %v6223
  %v6225 = vperm.slane %v5375, %v6224
  %v6227 = vunpack.c.l.s4 269488144
  %v6228 = vunpack.c.0.s8 %v6227
  %v6229 = vperm.slane %v5377, %v6228
  %v6231 = vunpack.c.l.s4 842150450
  %v6232 = vunpack.c.0.s8 %v6231
  %v6233 = vperm.slane %v5377, %v6232
  %v6235 = vunpack.c.l.s4 1414812756
  %v6236 = vunpack.c.0.s8 %v6235
  %v6237 = vperm.slane %v5377, %v6236
  %v6239 = vunpack.c.l.s4 1987475062
  %v6240 = vunpack.c.0.s8 %v6239
  %v6241 = vperm.slane %v5377, %v6240
  %v6243 = vunpack.c.l.s4 269488144
  %v6244 = vunpack.c.0.s8 %v6243
  %v6245 = vperm.slane %v5379, %v6244
  %v6247 = vunpack.c.l.s4 842150450
  %v6248 = vunpack.c.0.s8 %v6247
  %v6249 = vperm.slane %v5379, %v6248
  %v6251 = vunpack.c.l.s4 1414812756
  %v6252 = vunpack.c.0.s8 %v6251
  %v6253 = vperm.slane %v5379, %v6252
  %v6255 = vunpack.c.l.s4 1987475062
  %v6256 = vunpack.c.0.s8 %v6255
  %v6257 = vperm.slane %v5379, %v6256
  %v6259 = vunpack.c.l.s4 269488144
  %v6260 = vunpack.c.0.s8 %v6259
  %v6261 = vperm.slane %v5381, %v6260
  %v6263 = vunpack.c.l.s4 842150450
  %v6264 = vunpack.c.0.s8 %v6263
  %v6265 = vperm.slane %v5381, %v6264
  %v6267 = vunpack.c.l.s4 1414812756
  %v6268 = vunpack.c.0.s8 %v6267
  %v6269 = vperm.slane %v5381, %v6268
  %v6271 = vunpack.c.l.s4 1987475062
  %v6272 = vunpack.c.0.s8 %v6271
  %v6273 = vperm.slane %v5381, %v6272
  %v6275 = vunpack.c.l.s4 269488144
  %v6276 = vunpack.c.0.s8 %v6275
  %v6277 = vperm.slane %v5383, %v6276
  %v6279 = vunpack.c.l.s4 842150450
  %v6280 = vunpack.c.0.s8 %v6279
  %v6281 = vperm.slane %v5383, %v6280
  %v6283 = vunpack.c.l.s4 1414812756
  %v6284 = vunpack.c.0.s8 %v6283
  %v6285 = vperm.slane %v5383, %v6284
  %v6287 = vunpack.c.l.s4 1987475062
  %v6288 = vunpack.c.0.s8 %v6287
  %v6289 = vperm.slane %v5383, %v6288
  %v6291 = vunpack.c.l.s4 269488144
  %v6292 = vunpack.c.0.s8 %v6291
  %v6293 = vperm.slane %v5385, %v6292
  %v6295 = vunpack.c.l.s4 842150450
  %v6296 = vunpack.c.0.s8 %v6295
  %v6297 = vperm.slane %v5385, %v6296
  %v6299 = vunpack.c.l.s4 1414812756
  %v6300 = vunpack.c.0.s8 %v6299
  %v6301 = vperm.slane %v5385, %v6300
  %v6303 = vunpack.c.l.s4 1987475062
  %v6304 = vunpack.c.0.s8 %v6303
  %v6305 = vperm.slane %v5385, %v6304
  %v6307 = vunpack.c.l.s4 269488144
  %v6308 = vunpack.c.0.s8 %v6307
  %v6309 = vperm.slane %v5387, %v6308
  %v6311 = vunpack.c.l.s4 842150450
  %v6312 = vunpack.c.0.s8 %v6311
  %v6313 = vperm.slane %v5387, %v6312
  %v6315 = vunpack.c.l.s4 1414812756
  %v6316 = vunpack.c.0.s8 %v6315
  %v6317 = vperm.slane %v5387, %v6316
  %v6319 = vunpack.c.l.s4 1987475062
  %v6320 = vunpack.c.0.s8 %v6319
  %v6321 = vperm.slane %v5387, %v6320
  %v6323 = vunpack.c.l.s4 269488144
  %v6324 = vunpack.c.0.s8 %v6323
  %v6325 = vperm.slane %v5389, %v6324
  %v6327 = vunpack.c.l.s4 842150450
  %v6328 = vunpack.c.0.s8 %v6327
  %v6329 = vperm.slane %v5389, %v6328
  %v6331 = vunpack.c.l.s4 1414812756
  %v6332 = vunpack.c.0.s8 %v6331
  %v6333 = vperm.slane %v5389, %v6332
  %v6335 = vunpack.c.l.s4 1987475062
  %v6336 = vunpack.c.0.s8 %v6335
  %v6337 = vperm.slane %v5389, %v6336
  %v6339 = vunpack.c.l.s4 269488144
  %v6340 = vunpack.c.0.s8 %v6339
  %v6341 = vperm.slane %v5391, %v6340
  %v6343 = vunpack.c.l.s4 842150450
  %v6344 = vunpack.c.0.s8 %v6343
  %v6345 = vperm.slane %v5391, %v6344
  %v6347 = vunpack.c.l.s4 1414812756
  %v6348 = vunpack.c.0.s8 %v6347
  %v6349 = vperm.slane %v5391, %v6348
  %v6351 = vunpack.c.l.s4 1987475062
  %v6352 = vunpack.c.0.s8 %v6351
  %v6353 = vperm.slane %v5391, %v6352
  %v6355 = vunpack.c.l.s4 269488144
  %v6356 = vunpack.c.0.s8 %v6355
  %v6357 = vperm.slane %v5393, %v6356
  %v6359 = vunpack.c.l.s4 842150450
  %v6360 = vunpack.c.0.s8 %v6359
  %v6361 = vperm.slane %v5393, %v6360
  %v6363 = vunpack.c.l.s4 1414812756
  %v6364 = vunpack.c.0.s8 %v6363
  %v6365 = vperm.slane %v5393, %v6364
  %v6367 = vunpack.c.l.s4 1987475062
  %v6368 = vunpack.c.0.s8 %v6367
  %v6369 = vperm.slane %v5393, %v6368
  %v6371 = vunpack.c.l.s4 269488144
  %v6372 = vunpack.c.0.s8 %v6371
  %v6373 = vperm.slane %v5395, %v6372
  %v6375 = vunpack.c.l.s4 842150450
  %v6376 = vunpack.c.0.s8 %v6375
  %v6377 = vperm.slane %v5395, %v6376
  %v6379 = vunpack.c.l.s4 1414812756
  %v6380 = vunpack.c.0.s8 %v6379
  %v6381 = vperm.slane %v5395, %v6380
  %v6383 = vunpack.c.l.s4 1987475062
  %v6384 = vunpack.c.0.s8 %v6383
  %v6385 = vperm.slane %v5395, %v6384
  %v6387 = vunpack.c.l.s4 269488144
  %v6388 = vunpack.c.0.s8 %v6387
  %v6389 = vperm.slane %v5397, %v6388
  %v6391 = vunpack.c.l.s4 842150450
  %v6392 = vunpack.c.0.s8 %v6391
  %v6393 = vperm.slane %v5397, %v6392
  %v6395 = vunpack.c.l.s4 1414812756
  %v6396 = vunpack.c.0.s8 %v6395
  %v6397 = vperm.slane %v5397, %v6396
  %v6399 = vunpack.c.l.s4 1987475062
  %v6400 = vunpack.c.0.s8 %v6399
  %v6401 = vperm.slane %v5397, %v6400
  %v6403 = vunpack.c.l.s4 269488144
  %v6404 = vunpack.c.0.s8 %v6403
  %v6405 = vperm.slane %v5399, %v6404
  %v6407 = vunpack.c.l.s4 842150450
  %v6408 = vunpack.c.0.s8 %v6407
  %v6409 = vperm.slane %v5399, %v6408
  %v6411 = vunpack.c.l.s4 1414812756
  %v6412 = vunpack.c.0.s8 %v6411
  %v6413 = vperm.slane %v5399, %v6412
  %v6415 = vunpack.c.l.s4 1987475062
  %v6416 = vunpack.c.0.s8 %v6415
  %v6417 = vperm.slane %v5399, %v6416
  %v6419 = vunpack.c.l.s4 269488144
  %v6420 = vunpack.c.0.s8 %v6419
  %v6421 = vperm.slane %v5401, %v6420
  %v6423 = vunpack.c.l.s4 842150450
  %v6424 = vunpack.c.0.s8 %v6423
  %v6425 = vperm.slane %v5401, %v6424
  %v6427 = vunpack.c.l.s4 1414812756
  %v6428 = vunpack.c.0.s8 %v6427
  %v6429 = vperm.slane %v5401, %v6428
  %v6431 = vunpack.c.l.s4 1987475062
  %v6432 = vunpack.c.0.s8 %v6431
  %v6433 = vperm.slane %v5401, %v6432
  %v6435 = vunpack.c.l.s4 269488144
  %v6436 = vunpack.c.0.s8 %v6435
  %v6437 = vperm.slane %v5403, %v6436
  %v6439 = vunpack.c.l.s4 842150450
  %v6440 = vunpack.c.0.s8 %v6439
  %v6441 = vperm.slane %v5403, %v6440
  %v6443 = vunpack.c.l.s4 1414812756
  %v6444 = vunpack.c.0.s8 %v6443
  %v6445 = vperm.slane %v5403, %v6444
  %v6447 = vunpack.c.l.s4 1987475062
  %v6448 = vunpack.c.0.s8 %v6447
  %v6449 = vperm.slane %v5403, %v6448
  %v6451 = vunpack.c.l.s4 269488144
  %v6452 = vunpack.c.0.s8 %v6451
  %v6453 = vperm.slane %v5405, %v6452
  %v6455 = vunpack.c.l.s4 842150450
  %v6456 = vunpack.c.0.s8 %v6455
  %v6457 = vperm.slane %v5405, %v6456
  %v6459 = vunpack.c.l.s4 1414812756
  %v6460 = vunpack.c.0.s8 %v6459
  %v6461 = vperm.slane %v5405, %v6460
  %v6463 = vunpack.c.l.s4 1987475062
  %v6464 = vunpack.c.0.s8 %v6463
  %v6465 = vperm.slane %v5405, %v6464
  %v6467 = vunpack.c.l.s4 269488144
  %v6468 = vunpack.c.0.s8 %v6467
  %v6469 = vperm.slane %v5407, %v6468
  %v6471 = vunpack.c.l.s4 842150450
  %v6472 = vunpack.c.0.s8 %v6471
  %v6473 = vperm.slane %v5407, %v6472
  %v6475 = vunpack.c.l.s4 1414812756
  %v6476 = vunpack.c.0.s8 %v6475
  %v6477 = vperm.slane %v5407, %v6476
  %v6479 = vunpack.c.l.s4 1987475062
  %v6480 = vunpack.c.0.s8 %v6479
  %v6481 = vperm.slane %v5407, %v6480
  %v6483 = vunpack.c.l.s4 269488144
  %v6484 = vunpack.c.0.s8 %v6483
  %v6485 = vperm.slane %v5409, %v6484
  %v6487 = vunpack.c.l.s4 842150450
  %v6488 = vunpack.c.0.s8 %v6487
  %v6489 = vperm.slane %v5409, %v6488
  %v6491 = vunpack.c.l.s4 1414812756
  %v6492 = vunpack.c.0.s8 %v6491
  %v6493 = vperm.slane %v5409, %v6492
  %v6495 = vunpack.c.l.s4 1987475062
  %v6496 = vunpack.c.0.s8 %v6495
  %v6497 = vperm.slane %v5409, %v6496
  %6498 = vst [vmem:[#allocation1] ss:$4 sm:$0xff] %v5477
  %s6499 = scalar_lea.vmem [#allocation1], 1
  %6500 = vst [vmem:[%s6499] ss:$4 sm:$0xff] %v5481
  %s6501 = scalar_lea.vmem [#allocation1], 2
  %6502 = vst [vmem:[%s6501] ss:$4 sm:$0xff] %v5485
  %s6503 = scalar_lea.vmem [#allocation1], 3
  %6504 = vst [vmem:[%s6503] ss:$4 sm:$0xff] %v5489
  %s6505 = scalar_lea.vmem [#allocation1], 32
  %6506 = vst [vmem:[%s6505] ss:$4 sm:$0xff] %v5493
  %s6507 = scalar_lea.vmem [#allocation1], 33
  %6508 = vst [vmem:[%s6507] ss:$4 sm:$0xff] %v5497
  %s6509 = scalar_lea.vmem [#allocation1], 34
  %6510 = vst [vmem:[%s6509] ss:$4 sm:$0xff] %v5501
  %s6511 = scalar_lea.vmem [#allocation1], 35
  %6512 = vst [vmem:[%s6511] ss:$4 sm:$0xff] %v5505
  %v6513 = vld.sshfl [vmem:[#allocation1] sm:$0xff pattern:$0x73625140]
  %v6514 = vld.sshfl [vmem:[#allocation1 + $0x20] sm:$0xff pattern:$0x73625140]
  %6515 = vst [vmem:[#allocation1] ss:$4 sm:$0xff] %v5509
  %6516 = vst [vmem:[%s6499] ss:$4 sm:$0xff] %v5513
  %6517 = vst [vmem:[%s6501] ss:$4 sm:$0xff] %v5517
  %6518 = vst [vmem:[%s6503] ss:$4 sm:$0xff] %v5521
  %6519 = vst [vmem:[%s6505] ss:$4 sm:$0xff] %v5525
  %6520 = vst [vmem:[%s6507] ss:$4 sm:$0xff] %v5529
  %6521 = vst [vmem:[%s6509] ss:$4 sm:$0xff] %v5533
  %6522 = vst [vmem:[%s6511] ss:$4 sm:$0xff] %v5537
  %v6523 = vld.sshfl [vmem:[#allocation1] sm:$0xff pattern:$0x73625140]
  %v6524 = vld.sshfl [vmem:[#allocation1 + $0x20] sm:$0xff pattern:$0x73625140]
  %6525 = vst [vmem:[#allocation1] ss:$4 sm:$0xff] %v5541
  %6526 = vst [vmem:[%s6499] ss:$4 sm:$0xff] %v5545
  %6527 = vst [vmem:[%s6501] ss:$4 sm:$0xff] %v5549
  %6528 = vst [vmem:[%s6503] ss:$4 sm:$0xff] %v5553
  %6529 = vst [vmem:[%s6505] ss:$4 sm:$0xff] %v5557
  %6530 = vst [vmem:[%s6507] ss:$4 sm:$0xff] %v5561
  %6531 = vst [vmem:[%s6509] ss:$4 sm:$0xff] %v5565
  %6532 = vst [vmem:[%s6511] ss:$4 sm:$0xff] %v5569
  %v6533 = vld.sshfl [vmem:[#allocation1] sm:$0xff pattern:$0x73625140]
  %v6534 = vld.sshfl [vmem:[#allocation1 + $0x20] sm:$0xff pattern:$0x73625140]
  %6535 = vst [vmem:[#allocation1] ss:$4 sm:$0xff] %v5573
  %6536 = vst [vmem:[%s6499] ss:$4 sm:$0xff] %v5577
  %6537 = vst [vmem:[%s6501] ss:$4 sm:$0xff] %v5581
  %6538 = vst [vmem:[%s6503] ss:$4 sm:$0xff] %v5585
  %6539 = vst [vmem:[%s6505] ss:$4 sm:$0xff] %v5589
  %6540 = vst [vmem:[%s6507] ss:$4 sm:$0xff] %v5593
  %6541 = vst [vmem:[%s6509] ss:$4 sm:$0xff] %v5597
  %6542 = vst [vmem:[%s6511] ss:$4 sm:$0xff] %v5601
  %v6543 = vld.sshfl [vmem:[#allocation1] sm:$0xff pattern:$0x73625140]
  %v6544 = vld.sshfl [vmem:[#allocation1 + $0x20] sm:$0xff pattern:$0x73625140]
  %6545 = vst [vmem:[#allocation1] ss:$4 sm:$0xff] %v5605
  %6546 = vst [vmem:[%s6499] ss:$4 sm:$0xff] %v5609
  %6547 = vst [vmem:[%s6501] ss:$4 sm:$0xff] %v5613
  %6548 = vst [vmem:[%s6503] ss:$4 sm:$0xff] %v5617
  %6549 = vst [vmem:[%s6505] ss:$4 sm:$0xff] %v5621
  %6550 = vst [vmem:[%s6507] ss:$4 sm:$0xff] %v5625
  %6551 = vst [vmem:[%s6509] ss:$4 sm:$0xff] %v5629
  %6552 = vst [vmem:[%s6511] ss:$4 sm:$0xff] %v5633
  %v6553 = vld.sshfl [vmem:[#allocation1] sm:$0xff pattern:$0x73625140]
  %v6554 = vld.sshfl [vmem:[#allocation1 + $0x20] sm:$0xff pattern:$0x73625140]
  %6555 = vst [vmem:[#allocation1] ss:$4 sm:$0xff] %v5637
  %6556 = vst [vmem:[%s6499] ss:$4 sm:$0xff] %v5641
  %6557 = vst [vmem:[%s6501] ss:$4 sm:$0xff] %v5645
  %6558 = vst [vmem:[%s6503] ss:$4 sm:$0xff] %v5649
  %6559 = vst [vmem:[%s6505] ss:$4 sm:$0xff] %v5653
  %6560 = vst [vmem:[%s6507] ss:$4 sm:$0xff] %v5657
  %6561 = vst [vmem:[%s6509] ss:$4 sm:$0xff] %v5661
  %6562 = vst [vmem:[%s6511] ss:$4 sm:$0xff] %v5665
  %v6563 = vld.sshfl [vmem:[#allocation1] sm:$0xff pattern:$0x73625140]
  %v6564 = vld.sshfl [vmem:[#allocation1 + $0x20] sm:$0xff pattern:$0x73625140]
  %6565 = vst [vmem:[#allocation1] ss:$4 sm:$0xff] %v5669
  %6566 = vst [vmem:[%s6499] ss:$4 sm:$0xff] %v5673
  %6567 = vst [vmem:[%s6501] ss:$4 sm:$0xff] %v5677
  %6568 = vst [vmem:[%s6503] ss:$4 sm:$0xff] %v5681
  %6569 = vst [vmem:[%s6505] ss:$4 sm:$0xff] %v5685
  %6570 = vst [vmem:[%s6507] ss:$4 sm:$0xff] %v5689
  %6571 = vst [vmem:[%s6509] ss:$4 sm:$0xff] %v5693
  %6572 = vst [vmem:[%s6511] ss:$4 sm:$0xff] %v5697
  %v6573 = vld.sshfl [vmem:[#allocation1] sm:$0xff pattern:$0x73625140]
  %v6574 = vld.sshfl [vmem:[#allocation1 + $0x20] sm:$0xff pattern:$0x73625140]
  %6575 = vst [vmem:[#allocation1] ss:$4 sm:$0xff] %v5701
  %6576 = vst [vmem:[%s6499] ss:$4 sm:$0xff] %v5705
  %6577 = vst [vmem:[%s6501] ss:$4 sm:$0xff] %v5709
  %6578 = vst [vmem:[%s6503] ss:$4 sm:$0xff] %v5713
  %6579 = vst [vmem:[%s6505] ss:$4 sm:$0xff] %v5717
  %6580 = vst [vmem:[%s6507] ss:$4 sm:$0xff] %v5721
  %6581 = vst [vmem:[%s6509] ss:$4 sm:$0xff] %v5725
  %6582 = vst [vmem:[%s6511] ss:$4 sm:$0xff] %v5729
  %v6583 = vld.sshfl [vmem:[#allocation1] sm:$0xff pattern:$0x73625140]
  %v6584 = vld.sshfl [vmem:[#allocation1 + $0x20] sm:$0xff pattern:$0x73625140]
  %6585 = vst [vmem:[#allocation1] ss:$4 sm:$0xff] %v5733
  %6586 = vst [vmem:[%s6499] ss:$4 sm:$0xff] %v5737
  %6587 = vst [vmem:[%s6501] ss:$4 sm:$0xff] %v5741
  %6588 = vst [vmem:[%s6503] ss:$4 sm:$0xff] %v5745
  %6589 = vst [vmem:[%s6505] ss:$4 sm:$0xff] %v5749
  %6590 = vst [vmem:[%s6507] ss:$4 sm:$0xff] %v5753
  %6591 = vst [vmem:[%s6509] ss:$4 sm:$0xff] %v5757
  %6592 = vst [vmem:[%s6511] ss:$4 sm:$0xff] %v5761
  %v6593 = vld.sshfl [vmem:[#allocation1] sm:$0xff pattern:$0x73625140]
  %v6594 = vld.sshfl [vmem:[#allocation1 + $0x20] sm:$0xff pattern:$0x73625140]
  %6595 = vst [vmem:[#allocation1] ss:$4 sm:$0xff] %v5765
  %6596 = vst [vmem:[%s6499] ss:$4 sm:$0xff] %v5769
  %6597 = vst [vmem:[%s6501] ss:$4 sm:$0xff] %v5773
  %6598 = vst [vmem:[%s6503] ss:$4 sm:$0xff] %v5777
  %6599 = vst [vmem:[%s6505] ss:$4 sm:$0xff] %v5781
  %6600 = vst [vmem:[%s6507] ss:$4 sm:$0xff] %v5785
  %6601 = vst [vmem:[%s6509] ss:$4 sm:$0xff] %v5789
  %6602 = vst [vmem:[%s6511] ss:$4 sm:$0xff] %v5793
  %v6603 = vld.sshfl [vmem:[#allocation1] sm:$0xff pattern:$0x73625140]
  %v6604 = vld.sshfl [vmem:[#allocation1 + $0x20] sm:$0xff pattern:$0x73625140]
  %6605 = vst [vmem:[#allocation1] ss:$4 sm:$0xff] %v5797
  %6606 = vst [vmem:[%s6499] ss:$4 sm:$0xff] %v5801
  %6607 = vst [vmem:[%s6501] ss:$4 sm:$0xff] %v5805
  %6608 = vst [vmem:[%s6503] ss:$4 sm:$0xff] %v5809
  %6609 = vst [vmem:[%s6505] ss:$4 sm:$0xff] %v5813
  %6610 = vst [vmem:[%s6507] ss:$4 sm:$0xff] %v5817
  %6611 = vst [vmem:[%s6509] ss:$4 sm:$0xff] %v5821
  %6612 = vst [vmem:[%s6511] ss:$4 sm:$0xff] %v5825
  %v6613 = vld.sshfl [vmem:[#allocation1] sm:$0xff pattern:$0x73625140]
  %v6614 = vld.sshfl [vmem:[#allocation1 + $0x20] sm:$0xff pattern:$0x73625140]
  %6615 = vst [vmem:[#allocation1] ss:$4 sm:$0xff] %v5829
  %6616 = vst [vmem:[%s6499] ss:$4 sm:$0xff] %v5833
  %6617 = vst [vmem:[%s6501] ss:$4 sm:$0xff] %v5837
  %6618 = vst [vmem:[%s6503] ss:$4 sm:$0xff] %v5841
  %6619 = vst [vmem:[%s6505] ss:$4 sm:$0xff] %v5845
  %6620 = vst [vmem:[%s6507] ss:$4 sm:$0xff] %v5849
  %6621 = vst [vmem:[%s6509] ss:$4 sm:$0xff] %v5853
  %6622 = vst [vmem:[%s6511] ss:$4 sm:$0xff] %v5857
  %v6623 = vld.sshfl [vmem:[#allocation1] sm:$0xff pattern:$0x73625140]
  %v6624 = vld.sshfl [vmem:[#allocation1 + $0x20] sm:$0xff pattern:$0x73625140]
  %6625 = vst [vmem:[#allocation1] ss:$4 sm:$0xff] %v5861
  %6626 = vst [vmem:[%s6499] ss:$4 sm:$0xff] %v5865
  %6627 = vst [vmem:[%s6501] ss:$4 sm:$0xff] %v5869
  %6628 = vst [vmem:[%s6503] ss:$4 sm:$0xff] %v5873
  %6629 = vst [vmem:[%s6505] ss:$4 sm:$0xff] %v5877
  %6630 = vst [vmem:[%s6507] ss:$4 sm:$0xff] %v5881
  %6631 = vst [vmem:[%s6509] ss:$4 sm:$0xff] %v5885
  %6632 = vst [vmem:[%s6511] ss:$4 sm:$0xff] %v5889
  %v6633 = vld.sshfl [vmem:[#allocation1] sm:$0xff pattern:$0x73625140]
  %v6634 = vld.sshfl [vmem:[#allocation1 + $0x20] sm:$0xff pattern:$0x73625140]
  %6635 = vst [vmem:[#allocation1] ss:$4 sm:$0xff] %v5893
  %6636 = vst [vmem:[%s6499] ss:$4 sm:$0xff] %v5897
  %6637 = vst [vmem:[%s6501] ss:$4 sm:$0xff] %v5901
  %6638 = vst [vmem:[%s6503] ss:$4 sm:$0xff] %v5905
  %6639 = vst [vmem:[%s6505] ss:$4 sm:$0xff] %v5909
  %6640 = vst [vmem:[%s6507] ss:$4 sm:$0xff] %v5913
  %6641 = vst [vmem:[%s6509] ss:$4 sm:$0xff] %v5917
  %6642 = vst [vmem:[%s6511] ss:$4 sm:$0xff] %v5921
  %v6643 = vld.sshfl [vmem:[#allocation1] sm:$0xff pattern:$0x73625140]
  %v6644 = vld.sshfl [vmem:[#allocation1 + $0x20] sm:$0xff pattern:$0x73625140]
  %6645 = vst [vmem:[#allocation1] ss:$4 sm:$0xff] %v5925
  %6646 = vst [vmem:[%s6499] ss:$4 sm:$0xff] %v5929
  %6647 = vst [vmem:[%s6501] ss:$4 sm:$0xff] %v5933
  %6648 = vst [vmem:[%s6503] ss:$4 sm:$0xff] %v5937
  %6649 = vst [vmem:[%s6505] ss:$4 sm:$0xff] %v5941
  %6650 = vst [vmem:[%s6507] ss:$4 sm:$0xff] %v5945
  %6651 = vst [vmem:[%s6509] ss:$4 sm:$0xff] %v5949
  %6652 = vst [vmem:[%s6511] ss:$4 sm:$0xff] %v5953
  %v6653 = vld.sshfl [vmem:[#allocation1] sm:$0xff pattern:$0x73625140]
  %v6654 = vld.sshfl [vmem:[#allocation1 + $0x20] sm:$0xff pattern:$0x73625140]
  %6655 = vst [vmem:[#allocation1] ss:$4 sm:$0xff] %v5957
  %6656 = vst [vmem:[%s6499] ss:$4 sm:$0xff] %v5961
  %6657 = vst [vmem:[%s6501] ss:$4 sm:$0xff] %v5965
  %6658 = vst [vmem:[%s6503] ss:$4 sm:$0xff] %v5969
  %6659 = vst [vmem:[%s6505] ss:$4 sm:$0xff] %v5973
  %6660 = vst [vmem:[%s6507] ss:$4 sm:$0xff] %v5977
  %6661 = vst [vmem:[%s6509] ss:$4 sm:$0xff] %v5981
  %6662 = vst [vmem:[%s6511] ss:$4 sm:$0xff] %v5985
  %v6663 = vld.sshfl [vmem:[#allocation1] sm:$0xff pattern:$0x73625140]
  %v6664 = vld.sshfl [vmem:[#allocation1 + $0x20] sm:$0xff pattern:$0x73625140]
  %6665 = vst [vmem:[#allocation1] ss:$4 sm:$0xff] %v5989
  %6666 = vst [vmem:[%s6499] ss:$4 sm:$0xff] %v5993
  %6667 = vst [vmem:[%s6501] ss:$4 sm:$0xff] %v5997
  %6668 = vst [vmem:[%s6503] ss:$4 sm:$0xff] %v6001
  %6669 = vst [vmem:[%s6505] ss:$4 sm:$0xff] %v6005
  %6670 = vst [vmem:[%s6507] ss:$4 sm:$0xff] %v6009
  %6671 = vst [vmem:[%s6509] ss:$4 sm:$0xff] %v6013
  %6672 = vst [vmem:[%s6511] ss:$4 sm:$0xff] %v6017
  %v6673 = vld.sshfl [vmem:[#allocation1] sm:$0xff pattern:$0x73625140]
  %v6674 = vld.sshfl [vmem:[#allocation1 + $0x20] sm:$0xff pattern:$0x73625140]
  %6675 = vst [vmem:[#allocation1] ss:$4 sm:$0xff] %v6021
  %6676 = vst [vmem:[%s6499] ss:$4 sm:$0xff] %v6025
  %6677 = vst [vmem:[%s6501] ss:$4 sm:$0xff] %v6029
  %6678 = vst [vmem:[%s6503] ss:$4 sm:$0xff] %v6033
  %6679 = vst [vmem:[%s6505] ss:$4 sm:$0xff] %v6037
  %6680 = vst [vmem:[%s6507] ss:$4 sm:$0xff] %v6041
  %6681 = vst [vmem:[%s6509] ss:$4 sm:$0xff] %v6045
  %6682 = vst [vmem:[%s6511] ss:$4 sm:$0xff] %v6049
  %v6683 = vld.sshfl [vmem:[#allocation1] sm:$0xff pattern:$0x73625140]
  %v6684 = vld.sshfl [vmem:[#allocation1 + $0x20] sm:$0xff pattern:$0x73625140]
  %6685 = vst [vmem:[#allocation1] ss:$4 sm:$0xff] %v6053
  %6686 = vst [vmem:[%s6499] ss:$4 sm:$0xff] %v6057
  %6687 = vst [vmem:[%s6501] ss:$4 sm:$0xff] %v6061
  %6688 = vst [vmem:[%s6503] ss:$4 sm:$0xff] %v6065
  %6689 = vst [vmem:[%s6505] ss:$4 sm:$0xff] %v6069
  %6690 = vst [vmem:[%s6507] ss:$4 sm:$0xff] %v6073
  %6691 = vst [vmem:[%s6509] ss:$4 sm:$0xff] %v6077
  %6692 = vst [vmem:[%s6511] ss:$4 sm:$0xff] %v6081
  %v6693 = vld.sshfl [vmem:[#allocation1] sm:$0xff pattern:$0x73625140]
  %v6694 = vld.sshfl [vmem:[#allocation1 + $0x20] sm:$0xff pattern:$0x73625140]
  %6695 = vst [vmem:[#allocation1] ss:$4 sm:$0xff] %v6085
  %6696 = vst [vmem:[%s6499] ss:$4 sm:$0xff] %v6089
  %6697 = vst [vmem:[%s6501] ss:$4 sm:$0xff] %v6093
  %6698 = vst [vmem:[%s6503] ss:$4 sm:$0xff] %v6097
  %6699 = vst [vmem:[%s6505] ss:$4 sm:$0xff] %v6101
  %6700 = vst [vmem:[%s6507] ss:$4 sm:$0xff] %v6105
  %6701 = vst [vmem:[%s6509] ss:$4 sm:$0xff] %v6109
  %6702 = vst [vmem:[%s6511] ss:$4 sm:$0xff] %v6113
  %v6703 = vld.sshfl [vmem:[#allocation1] sm:$0xff pattern:$0x73625140]
  %v6704 = vld.sshfl [vmem:[#allocation1 + $0x20] sm:$0xff pattern:$0x73625140]
  %6705 = vst [vmem:[#allocation1] ss:$4 sm:$0xff] %v6117
  %6706 = vst [vmem:[%s6499] ss:$4 sm:$0xff] %v6121
  %6707 = vst [vmem:[%s6501] ss:$4 sm:$0xff] %v6125
  %6708 = vst [vmem:[%s6503] ss:$4 sm:$0xff] %v6129
  %6709 = vst [vmem:[%s6505] ss:$4 sm:$0xff] %v6133
  %6710 = vst [vmem:[%s6507] ss:$4 sm:$0xff] %v6137
  %6711 = vst [vmem:[%s6509] ss:$4 sm:$0xff] %v6141
  %6712 = vst [vmem:[%s6511] ss:$4 sm:$0xff] %v6145
  %v6713 = vld.sshfl [vmem:[#allocation1] sm:$0xff pattern:$0x73625140]
  %v6714 = vld.sshfl [vmem:[#allocation1 + $0x20] sm:$0xff pattern:$0x73625140]
  %6715 = vst [vmem:[#allocation1] ss:$4 sm:$0xff] %v6149
  %6716 = vst [vmem:[%s6499] ss:$4 sm:$0xff] %v6153
  %6717 = vst [vmem:[%s6501] ss:$4 sm:$0xff] %v6157
  %6718 = vst [vmem:[%s6503] ss:$4 sm:$0xff] %v6161
  %6719 = vst [vmem:[%s6505] ss:$4 sm:$0xff] %v6165
  %6720 = vst [vmem:[%s6507] ss:$4 sm:$0xff] %v6169
  %6721 = vst [vmem:[%s6509] ss:$4 sm:$0xff] %v6173
  %6722 = vst [vmem:[%s6511] ss:$4 sm:$0xff] %v6177
  %v6723 = vld.sshfl [vmem:[#allocation1] sm:$0xff pattern:$0x73625140]
  %v6724 = vld.sshfl [vmem:[#allocation1 + $0x20] sm:$0xff pattern:$0x73625140]
  %6725 = vst [vmem:[#allocation1] ss:$4 sm:$0xff] %v6181
  %6726 = vst [vmem:[%s6499] ss:$4 sm:$0xff] %v6185
  %6727 = vst [vmem:[%s6501] ss:$4 sm:$0xff] %v6189
  %6728 = vst [vmem:[%s6503] ss:$4 sm:$0xff] %v6193
  %6729 = vst [vmem:[%s6505] ss:$4 sm:$0xff] %v6197
  %6730 = vst [vmem:[%s6507] ss:$4 sm:$0xff] %v6201
  %6731 = vst [vmem:[%s6509] ss:$4 sm:$0xff] %v6205
  %6732 = vst [vmem:[%s6511] ss:$4 sm:$0xff] %v6209
  %v6733 = vld.sshfl [vmem:[#allocation1] sm:$0xff pattern:$0x73625140]
  %v6734 = vld.sshfl [vmem:[#allocation1 + $0x20] sm:$0xff pattern:$0x73625140]
  %6735 = vst [vmem:[#allocation1] ss:$4 sm:$0xff] %v6213
  %6736 = vst [vmem:[%s6499] ss:$4 sm:$0xff] %v6217
  %6737 = vst [vmem:[%s6501] ss:$4 sm:$0xff] %v6221
  %6738 = vst [vmem:[%s6503] ss:$4 sm:$0xff] %v6225
  %6739 = vst [vmem:[%s6505] ss:$4 sm:$0xff] %v6229
  %6740 = vst [vmem:[%s6507] ss:$4 sm:$0xff] %v6233
  %6741 = vst [vmem:[%s6509] ss:$4 sm:$0xff] %v6237
  %6742 = vst [vmem:[%s6511] ss:$4 sm:$0xff] %v6241
  %v6743 = vld.sshfl [vmem:[#allocation1] sm:$0xff pattern:$0x73625140]
  %v6744 = vld.sshfl [vmem:[#allocation1 + $0x20] sm:$0xff pattern:$0x73625140]
  %6745 = vst [vmem:[#allocation1] ss:$4 sm:$0xff] %v6245
  %6746 = vst [vmem:[%s6499] ss:$4 sm:$0xff] %v6249
  %6747 = vst [vmem:[%s6501] ss:$4 sm:$0xff] %v6253
  %6748 = vst [vmem:[%s6503] ss:$4 sm:$0xff] %v6257
  %6749 = vst [vmem:[%s6505] ss:$4 sm:$0xff] %v6261
  %6750 = vst [vmem:[%s6507] ss:$4 sm:$0xff] %v6265
  %6751 = vst [vmem:[%s6509] ss:$4 sm:$0xff] %v6269
  %6752 = vst [vmem:[%s6511] ss:$4 sm:$0xff] %v6273
  %v6753 = vld.sshfl [vmem:[#allocation1] sm:$0xff pattern:$0x73625140]
  %v6754 = vld.sshfl [vmem:[#allocation1 + $0x20] sm:$0xff pattern:$0x73625140]
  %6755 = vst [vmem:[#allocation1] ss:$4 sm:$0xff] %v6277
  %6756 = vst [vmem:[%s6499] ss:$4 sm:$0xff] %v6281
  %6757 = vst [vmem:[%s6501] ss:$4 sm:$0xff] %v6285
  %6758 = vst [vmem:[%s6503] ss:$4 sm:$0xff] %v6289
  %6759 = vst [vmem:[%s6505] ss:$4 sm:$0xff] %v6293
  %6760 = vst [vmem:[%s6507] ss:$4 sm:$0xff] %v6297
  %6761 = vst [vmem:[%s6509] ss:$4 sm:$0xff] %v6301
  %6762 = vst [vmem:[%s6511] ss:$4 sm:$0xff] %v6305
  %v6763 = vld.sshfl [vmem:[#allocation1] sm:$0xff pattern:$0x73625140]
  %v6764 = vld.sshfl [vmem:[#allocation1 + $0x20] sm:$0xff pattern:$0x73625140]
  %6765 = vst [vmem:[#allocation1] ss:$4 sm:$0xff] %v6309
  %6766 = vst [vmem:[%s6499] ss:$4 sm:$0xff] %v6313
  %6767 = vst [vmem:[%s6501] ss:$4 sm:$0xff] %v6317
  %6768 = vst [vmem:[%s6503] ss:$4 sm:$0xff] %v6321
  %6769 = vst [vmem:[%s6505] ss:$4 sm:$0xff] %v6325
  %6770 = vst [vmem:[%s6507] ss:$4 sm:$0xff] %v6329
  %6771 = vst [vmem:[%s6509] ss:$4 sm:$0xff] %v6333
  %6772 = vst [vmem:[%s6511] ss:$4 sm:$0xff] %v6337
  %v6773 = vld.sshfl [vmem:[#allocation1] sm:$0xff pattern:$0x73625140]
  %v6774 = vld.sshfl [vmem:[#allocation1 + $0x20] sm:$0xff pattern:$0x73625140]
  %6775 = vst [vmem:[#allocation1] ss:$4 sm:$0xff] %v6341
  %6776 = vst [vmem:[%s6499] ss:$4 sm:$0xff] %v6345
  %6777 = vst [vmem:[%s6501] ss:$4 sm:$0xff] %v6349
  %6778 = vst [vmem:[%s6503] ss:$4 sm:$0xff] %v6353
  %6779 = vst [vmem:[%s6505] ss:$4 sm:$0xff] %v6357
  %6780 = vst [vmem:[%s6507] ss:$4 sm:$0xff] %v6361
  %6781 = vst [vmem:[%s6509] ss:$4 sm:$0xff] %v6365
  %6782 = vst [vmem:[%s6511] ss:$4 sm:$0xff] %v6369
  %v6783 = vld.sshfl [vmem:[#allocation1] sm:$0xff pattern:$0x73625140]
  %v6784 = vld.sshfl [vmem:[#allocation1 + $0x20] sm:$0xff pattern:$0x73625140]
  %6785 = vst [vmem:[#allocation1] ss:$4 sm:$0xff] %v6373
  %6786 = vst [vmem:[%s6499] ss:$4 sm:$0xff] %v6377
  %6787 = vst [vmem:[%s6501] ss:$4 sm:$0xff] %v6381
  %6788 = vst [vmem:[%s6503] ss:$4 sm:$0xff] %v6385
  %6789 = vst [vmem:[%s6505] ss:$4 sm:$0xff] %v6389
  %6790 = vst [vmem:[%s6507] ss:$4 sm:$0xff] %v6393
  %6791 = vst [vmem:[%s6509] ss:$4 sm:$0xff] %v6397
  %6792 = vst [vmem:[%s6511] ss:$4 sm:$0xff] %v6401
  %v6793 = vld.sshfl [vmem:[#allocation1] sm:$0xff pattern:$0x73625140]
  %v6794 = vld.sshfl [vmem:[#allocation1 + $0x20] sm:$0xff pattern:$0x73625140]
  %6795 = vst [vmem:[#allocation1] ss:$4 sm:$0xff] %v6405
  %6796 = vst [vmem:[%s6499] ss:$4 sm:$0xff] %v6409
  %6797 = vst [vmem:[%s6501] ss:$4 sm:$0xff] %v6413
  %6798 = vst [vmem:[%s6503] ss:$4 sm:$0xff] %v6417
  %6799 = vst [vmem:[%s6505] ss:$4 sm:$0xff] %v6421
  %6800 = vst [vmem:[%s6507] ss:$4 sm:$0xff] %v6425
  %6801 = vst [vmem:[%s6509] ss:$4 sm:$0xff] %v6429
  %6802 = vst [vmem:[%s6511] ss:$4 sm:$0xff] %v6433
  %v6803 = vld.sshfl [vmem:[#allocation1] sm:$0xff pattern:$0x73625140]
  %v6804 = vld.sshfl [vmem:[#allocation1 + $0x20] sm:$0xff pattern:$0x73625140]
  %6805 = vst [vmem:[#allocation1] ss:$4 sm:$0xff] %v6437
  %6806 = vst [vmem:[%s6499] ss:$4 sm:$0xff] %v6441
  %6807 = vst [vmem:[%s6501] ss:$4 sm:$0xff] %v6445
  %6808 = vst [vmem:[%s6503] ss:$4 sm:$0xff] %v6449
  %6809 = vst [vmem:[%s6505] ss:$4 sm:$0xff] %v6453
  %6810 = vst [vmem:[%s6507] ss:$4 sm:$0xff] %v6457
  %6811 = vst [vmem:[%s6509] ss:$4 sm:$0xff] %v6461
  %6812 = vst [vmem:[%s6511] ss:$4 sm:$0xff] %v6465
  %v6813 = vld.sshfl [vmem:[#allocation1] sm:$0xff pattern:$0x73625140]
  %v6814 = vld.sshfl [vmem:[#allocation1 + $0x20] sm:$0xff pattern:$0x73625140]
  %6815 = vst [vmem:[#allocation1] ss:$4 sm:$0xff] %v6469
  %6816 = vst [vmem:[%s6499] ss:$4 sm:$0xff] %v6473
  %6817 = vst [vmem:[%s6501] ss:$4 sm:$0xff] %v6477
  %6818 = vst [vmem:[%s6503] ss:$4 sm:$0xff] %v6481
  %6819 = vst [vmem:[%s6505] ss:$4 sm:$0xff] %v6485
  %6820 = vst [vmem:[%s6507] ss:$4 sm:$0xff] %v6489
  %6821 = vst [vmem:[%s6509] ss:$4 sm:$0xff] %v6493
  %6822 = vst [vmem:[%s6511] ss:$4 sm:$0xff] %v6497
  %v6823 = vld.sshfl [vmem:[#allocation1] sm:$0xff pattern:$0x73625140]
  %v6824 = vld.sshfl [vmem:[#allocation1 + $0x20] sm:$0xff pattern:$0x73625140]
  %6825 = vset.pattern.permute.xlu0 0
  %6826 = vperm.xlu0 %6825, %v6513
  %v6827 = vpop.permute.xlu0 %6826
  %6828 = vset.pattern.permute.xlu0 0
  %6829 = vperm.xlu0 %6828, %v6514
  %v6830 = vpop.permute.xlu0 %6829
  %6831 = vset.pattern.permute.xlu0 0
  %6832 = vperm.xlu0 %6831, %v6523
  %v6833 = vpop.permute.xlu0 %6832
  %6834 = vset.pattern.permute.xlu0 0
  %6835 = vperm.xlu0 %6834, %v6524
  %v6836 = vpop.permute.xlu0 %6835
  %6837 = vset.pattern.permute.xlu0 0
  %6838 = vperm.xlu0 %6837, %v6533
  %v6839 = vpop.permute.xlu0 %6838
  %6840 = vset.pattern.permute.xlu0 0
  %6841 = vperm.xlu0 %6840, %v6534
  %v6842 = vpop.permute.xlu0 %6841
  %6843 = vset.pattern.permute.xlu0 0
  %6844 = vperm.xlu0 %6843, %v6543
  %v6845 = vpop.permute.xlu0 %6844
  %6846 = vset.pattern.permute.xlu0 0
  %6847 = vperm.xlu0 %6846, %v6544
  %v6848 = vpop.permute.xlu0 %6847
  %6849 = vset.pattern.permute.xlu0 0
  %6850 = vperm.xlu0 %6849, %v6553
  %v6851 = vpop.permute.xlu0 %6850
  %6852 = vset.pattern.permute.xlu0 0
  %6853 = vperm.xlu0 %6852, %v6554
  %v6854 = vpop.permute.xlu0 %6853
  %6855 = vset.pattern.permute.xlu0 0
  %6856 = vperm.xlu0 %6855, %v6563
  %v6857 = vpop.permute.xlu0 %6856
  %6858 = vset.pattern.permute.xlu0 0
  %6859 = vperm.xlu0 %6858, %v6564
  %v6860 = vpop.permute.xlu0 %6859
  %6861 = vset.pattern.permute.xlu0 0
  %6862 = vperm.xlu0 %6861, %v6573
  %v6863 = vpop.permute.xlu0 %6862
  %6864 = vset.pattern.permute.xlu0 0
  %6865 = vperm.xlu0 %6864, %v6574
  %v6866 = vpop.permute.xlu0 %6865
  %6867 = vset.pattern.permute.xlu0 0
  %6868 = vperm.xlu0 %6867, %v6583
  %v6869 = vpop.permute.xlu0 %6868
  %6870 = vset.pattern.permute.xlu0 0
  %6871 = vperm.xlu0 %6870, %v6584
  %v6872 = vpop.permute.xlu0 %6871
  %6873 = vset.pattern.permute.xlu0 0
  %6874 = vperm.xlu0 %6873, %v6593
  %v6875 = vpop.permute.xlu0 %6874
  %6876 = vset.pattern.permute.xlu0 0
  %6877 = vperm.xlu0 %6876, %v6594
  %v6878 = vpop.permute.xlu0 %6877
  %6879 = vset.pattern.permute.xlu0 0
  %6880 = vperm.xlu0 %6879, %v6603
  %v6881 = vpop.permute.xlu0 %6880
  %6882 = vset.pattern.permute.xlu0 0
  %6883 = vperm.xlu0 %6882, %v6604
  %v6884 = vpop.permute.xlu0 %6883
  %6885 = vset.pattern.permute.xlu0 0
  %6886 = vperm.xlu0 %6885, %v6613
  %v6887 = vpop.permute.xlu0 %6886
  %6888 = vset.pattern.permute.xlu0 0
  %6889 = vperm.xlu0 %6888, %v6614
  %v6890 = vpop.permute.xlu0 %6889
  %6891 = vset.pattern.permute.xlu0 0
  %6892 = vperm.xlu0 %6891, %v6623
  %v6893 = vpop.permute.xlu0 %6892
  %6894 = vset.pattern.permute.xlu0 0
  %6895 = vperm.xlu0 %6894, %v6624
  %v6896 = vpop.permute.xlu0 %6895
  %6897 = vset.pattern.permute.xlu0 0
  %6898 = vperm.xlu0 %6897, %v6633
  %v6899 = vpop.permute.xlu0 %6898
  %6900 = vset.pattern.permute.xlu0 0
  %6901 = vperm.xlu0 %6900, %v6634
  %v6902 = vpop.permute.xlu0 %6901
  %6903 = vset.pattern.permute.xlu0 0
  %6904 = vperm.xlu0 %6903, %v6643
  %v6905 = vpop.permute.xlu0 %6904
  %6906 = vset.pattern.permute.xlu0 0
  %6907 = vperm.xlu0 %6906, %v6644
  %v6908 = vpop.permute.xlu0 %6907
  %6909 = vset.pattern.permute.xlu0 0
  %6910 = vperm.xlu0 %6909, %v6653
  %v6911 = vpop.permute.xlu0 %6910
  %6912 = vset.pattern.permute.xlu0 0
  %6913 = vperm.xlu0 %6912, %v6654
  %v6914 = vpop.permute.xlu0 %6913
  %6915 = vset.pattern.permute.xlu0 0
  %6916 = vperm.xlu0 %6915, %v6663
  %v6917 = vpop.permute.xlu0 %6916
  %6918 = vset.pattern.permute.xlu0 0
  %6919 = vperm.xlu0 %6918, %v6664
  %v6920 = vpop.permute.xlu0 %6919
  %6921 = vset.pattern.permute.xlu0 0
  %6922 = vperm.xlu0 %6921, %v6673
  %v6923 = vpop.permute.xlu0 %6922
  %6924 = vset.pattern.permute.xlu0 0
  %6925 = vperm.xlu0 %6924, %v6674
  %v6926 = vpop.permute.xlu0 %6925
  %6927 = vset.pattern.permute.xlu0 0
  %6928 = vperm.xlu0 %6927, %v6683
  %v6929 = vpop.permute.xlu0 %6928
  %6930 = vset.pattern.permute.xlu0 0
  %6931 = vperm.xlu0 %6930, %v6684
  %v6932 = vpop.permute.xlu0 %6931
  %6933 = vset.pattern.permute.xlu0 0
  %6934 = vperm.xlu0 %6933, %v6693
  %v6935 = vpop.permute.xlu0 %6934
  %6936 = vset.pattern.permute.xlu0 0
  %6937 = vperm.xlu0 %6936, %v6694
  %v6938 = vpop.permute.xlu0 %6937
  %6939 = vset.pattern.permute.xlu0 0
  %6940 = vperm.xlu0 %6939, %v6703
  %v6941 = vpop.permute.xlu0 %6940
  %6942 = vset.pattern.permute.xlu0 0
  %6943 = vperm.xlu0 %6942, %v6704
  %v6944 = vpop.permute.xlu0 %6943
  %6945 = vset.pattern.permute.xlu0 0
  %6946 = vperm.xlu0 %6945, %v6713
  %v6947 = vpop.permute.xlu0 %6946
  %6948 = vset.pattern.permute.xlu0 0
  %6949 = vperm.xlu0 %6948, %v6714
  %v6950 = vpop.permute.xlu0 %6949
  %6951 = vset.pattern.permute.xlu0 0
  %6952 = vperm.xlu0 %6951, %v6723
  %v6953 = vpop.permute.xlu0 %6952
  %6954 = vset.pattern.permute.xlu0 0
  %6955 = vperm.xlu0 %6954, %v6724
  %v6956 = vpop.permute.xlu0 %6955
  %6957 = vset.pattern.permute.xlu0 0
  %6958 = vperm.xlu0 %6957, %v6733
  %v6959 = vpop.permute.xlu0 %6958
  %6960 = vset.pattern.permute.xlu0 0
  %6961 = vperm.xlu0 %6960, %v6734
  %v6962 = vpop.permute.xlu0 %6961
  %6963 = vset.pattern.permute.xlu0 0
  %6964 = vperm.xlu0 %6963, %v6743
  %v6965 = vpop.permute.xlu0 %6964
  %6966 = vset.pattern.permute.xlu0 0
  %6967 = vperm.xlu0 %6966, %v6744
  %v6968 = vpop.permute.xlu0 %6967
  %6969 = vset.pattern.permute.xlu0 0
  %6970 = vperm.xlu0 %6969, %v6753
  %v6971 = vpop.permute.xlu0 %6970
  %6972 = vset.pattern.permute.xlu0 0
  %6973 = vperm.xlu0 %6972, %v6754
  %v6974 = vpop.permute.xlu0 %6973
  %6975 = vset.pattern.permute.xlu0 0
  %6976 = vperm.xlu0 %6975, %v6763
  %v6977 = vpop.permute.xlu0 %6976
  %6978 = vset.pattern.permute.xlu0 0
  %6979 = vperm.xlu0 %6978, %v6764
  %v6980 = vpop.permute.xlu0 %6979
  %6981 = vset.pattern.permute.xlu0 0
  %6982 = vperm.xlu0 %6981, %v6773
  %v6983 = vpop.permute.xlu0 %6982
  %6984 = vset.pattern.permute.xlu0 0
  %6985 = vperm.xlu0 %6984, %v6774
  %v6986 = vpop.permute.xlu0 %6985
  %6987 = vset.pattern.permute.xlu0 0
  %6988 = vperm.xlu0 %6987, %v6783
  %v6989 = vpop.permute.xlu0 %6988
  %6990 = vset.pattern.permute.xlu0 0
  %6991 = vperm.xlu0 %6990, %v6784
  %v6992 = vpop.permute.xlu0 %6991
  %6993 = vset.pattern.permute.xlu0 0
  %6994 = vperm.xlu0 %6993, %v6793
  %v6995 = vpop.permute.xlu0 %6994
  %6996 = vset.pattern.permute.xlu0 0
  %6997 = vperm.xlu0 %6996, %v6794
  %v6998 = vpop.permute.xlu0 %6997
  %6999 = vset.pattern.permute.xlu0 0
  %7000 = vperm.xlu0 %6999, %v6803
  %v7001 = vpop.permute.xlu0 %7000
  %7002 = vset.pattern.permute.xlu0 0
  %7003 = vperm.xlu0 %7002, %v6804
  %v7004 = vpop.permute.xlu0 %7003
  %7005 = vset.pattern.permute.xlu0 0
  %7006 = vperm.xlu0 %7005, %v6813
  %v7007 = vpop.permute.xlu0 %7006
  %7008 = vset.pattern.permute.xlu0 0
  %7009 = vperm.xlu0 %7008, %v6814
  %v7010 = vpop.permute.xlu0 %7009
  %7011 = vset.pattern.permute.xlu0 0
  %7012 = vperm.xlu0 %7011, %v6823
  %v7013 = vpop.permute.xlu0 %7012
  %7014 = vset.pattern.permute.xlu0 0
  %7015 = vperm.xlu0 %7014, %v6824
  %v7016 = vpop.permute.xlu0 %7015
  %v7017 = vlaneseq
  %v7018 = vand.u32 %v7017, 127
  %v7019 = vperm.slane %v6827, %v7018
  %v7020 = vadd.s32 %v7018, 4294967288
  %v7021 = vperm.slane %v6830, %v7020
  %vm7022 = vcmask 130112
  %v7023 = vsel %vm7022, %v7021, %v7019
  %v7024 = vadd.s32 %v7018, 4294967280
  %v7025 = vperm.slane %v6833, %v7024
  %vm7026 = vcmask 195712
  %v7027 = vsel %vm7026, %v7025, %v7023
  %v7028 = vadd.s32 %v7018, 4294967272
  %v7029 = vperm.slane %v6836, %v7028
  %vm7030 = vcmask 261312
  %v7031 = vsel %vm7030, %v7029, %v7027
  %v7032 = vadd.s32 %v7018, 4294967264
  %v7033 = vperm.slane %v6839, %v7032
  %vm7034 = vcmask 326912
  %v7035 = vsel %vm7034, %v7033, %v7031
  %v7036 = vadd.s32 %v7018, 4294967256
  %v7037 = vperm.slane %v6842, %v7036
  %vm7038 = vcmask 392512
  %v7039 = vsel %vm7038, %v7037, %v7035
  %v7040 = vadd.s32 %v7018, 4294967248
  %v7041 = vperm.slane %v6845, %v7040
  %vm7042 = vcmask 458112
  %v7043 = vsel %vm7042, %v7041, %v7039
  %v7044 = vadd.s32 %v7018, 4294967240
  %v7045 = vperm.slane %v6848, %v7044
  %vm7046 = vcmask 523712
  %v7047 = vsel %vm7046, %v7045, %v7043
  %v7048 = vadd.s32 %v7018, 4294967232
  %v7049 = vperm.slane %v6851, %v7048
  %vm7050 = vcmask 589312
  %v7051 = vsel %vm7050, %v7049, %v7047
  %v7052 = vadd.s32 %v7018, 4294967224
  %v7053 = vperm.slane %v6854, %v7052
  %vm7054 = vcmask 654912
  %v7055 = vsel %vm7054, %v7053, %v7051
  %v7056 = vadd.s32 %v7018, 4294967216
  %v7057 = vperm.slane %v6857, %v7056
  %vm7058 = vcmask 720512
  %v7059 = vsel %vm7058, %v7057, %v7055
  %v7060 = vadd.s32 %v7018, 4294967208
  %v7061 = vperm.slane %v6860, %v7060
  %vm7062 = vcmask 786112
  %v7063 = vsel %vm7062, %v7061, %v7059
  %v7064 = vadd.s32 %v7018, 4294967200
  %v7065 = vperm.slane %v6863, %v7064
  %vm7066 = vcmask 851712
  %v7067 = vsel %vm7066, %v7065, %v7063
  %v7068 = vadd.s32 %v7018, 4294967192
  %v7069 = vperm.slane %v6866, %v7068
  %vm7070 = vcmask 917312
  %v7071 = vsel %vm7070, %v7069, %v7067
  %v7072 = vadd.s32 %v7018, 4294967184
  %v7073 = vperm.slane %v6869, %v7072
  %vm7074 = vcmask 982912
  %v7075 = vsel %vm7074, %v7073, %v7071
  %v7076 = vadd.s32 %v7018, 4294967176
  %v7077 = vperm.slane %v6872, %v7076
  %vm7078 = vcmask 1048512
  %v7079 = vsel %vm7078, %v7077, %v7075
  %v7080 = vperm.slane %v6875, %v7018
  %v7081 = vperm.slane %v6878, %v7020
  %v7082 = vsel %vm7022, %v7081, %v7080
  %v7083 = vperm.slane %v6881, %v7024
  %v7084 = vsel %vm7026, %v7083, %v7082
  %v7085 = vperm.slane %v6884, %v7028
  %v7086 = vsel %vm7030, %v7085, %v7084
  %v7087 = vperm.slane %v6887, %v7032
  %v7088 = vsel %vm7034, %v7087, %v7086
  %v7089 = vperm.slane %v6890, %v7036
  %v7090 = vsel %vm7038, %v7089, %v7088
  %v7091 = vperm.slane %v6893, %v7040
  %v7092 = vsel %vm7042, %v7091, %v7090
  %v7093 = vperm.slane %v6896, %v7044
  %v7094 = vsel %vm7046, %v7093, %v7092
  %v7095 = vperm.slane %v6899, %v7048
  %v7096 = vsel %vm7050, %v7095, %v7094
  %v7097 = vperm.slane %v6902, %v7052
  %v7098 = vsel %vm7054, %v7097, %v7096
  %v7099 = vperm.slane %v6905, %v7056
  %v7100 = vsel %vm7058, %v7099, %v7098
  %v7101 = vperm.slane %v6908, %v7060
  %v7102 = vsel %vm7062, %v7101, %v7100
  %v7103 = vperm.slane %v6911, %v7064
  %v7104 = vsel %vm7066, %v7103, %v7102
  %v7105 = vperm.slane %v6914, %v7068
  %v7106 = vsel %vm7070, %v7105, %v7104
  %v7107 = vperm.slane %v6917, %v7072
  %v7108 = vsel %vm7074, %v7107, %v7106
  %v7109 = vperm.slane %v6920, %v7076
  %v7110 = vsel %vm7078, %v7109, %v7108
  %v7111 = vperm.slane %v6923, %v7018
  %v7112 = vperm.slane %v6926, %v7020
  %v7113 = vsel %vm7022, %v7112, %v7111
  %v7114 = vperm.slane %v6929, %v7024
  %v7115 = vsel %vm7026, %v7114, %v7113
  %v7116 = vperm.slane %v6932, %v7028
  %v7117 = vsel %vm7030, %v7116, %v7115
  %v7118 = vperm.slane %v6935, %v7032
  %v7119 = vsel %vm7034, %v7118, %v7117
  %v7120 = vperm.slane %v6938, %v7036
  %v7121 = vsel %vm7038, %v7120, %v7119
  %v7122 = vperm.slane %v6941, %v7040
  %v7123 = vsel %vm7042, %v7122, %v7121
  %v7124 = vperm.slane %v6944, %v7044
  %v7125 = vsel %vm7046, %v7124, %v7123
  %v7126 = vperm.slane %v6947, %v7048
  %v7127 = vsel %vm7050, %v7126, %v7125
  %v7128 = vperm.slane %v6950, %v7052
  %v7129 = vsel %vm7054, %v7128, %v7127
  %v7130 = vperm.slane %v6953, %v7056
  %v7131 = vsel %vm7058, %v7130, %v7129
  %v7132 = vperm.slane %v6956, %v7060
  %v7133 = vsel %vm7062, %v7132, %v7131
  %v7134 = vperm.slane %v6959, %v7064
  %v7135 = vsel %vm7066, %v7134, %v7133
  %v7136 = vperm.slane %v6962, %v7068
  %v7137 = vsel %vm7070, %v7136, %v7135
  %v7138 = vperm.slane %v6965, %v7072
  %v7139 = vsel %vm7074, %v7138, %v7137
  %v7140 = vperm.slane %v6968, %v7076
  %v7141 = vsel %vm7078, %v7140, %v7139
  %v7142 = vperm.slane %v6971, %v7018
  %v7143 = vperm.slane %v6974, %v7020
  %v7144 = vsel %vm7022, %v7143, %v7142
  %v7145 = vperm.slane %v6977, %v7024
  %v7146 = vsel %vm7026, %v7145, %v7144
  %v7147 = vperm.slane %v6980, %v7028
  %v7148 = vsel %vm7030, %v7147, %v7146
  %v7149 = vperm.slane %v6983, %v7032
  %v7150 = vsel %vm7034, %v7149, %v7148
  %v7151 = vperm.slane %v6986, %v7036
  %v7152 = vsel %vm7038, %v7151, %v7150
  %v7153 = vperm.slane %v6989, %v7040
  %v7154 = vsel %vm7042, %v7153, %v7152
  %v7155 = vperm.slane %v6992, %v7044
  %v7156 = vsel %vm7046, %v7155, %v7154
  %v7157 = vperm.slane %v6995, %v7048
  %v7158 = vsel %vm7050, %v7157, %v7156
  %v7159 = vperm.slane %v6998, %v7052
  %v7160 = vsel %vm7054, %v7159, %v7158
  %v7161 = vperm.slane %v7001, %v7056
  %v7162 = vsel %vm7058, %v7161, %v7160
  %v7163 = vperm.slane %v7004, %v7060
  %v7164 = vsel %vm7062, %v7163, %v7162
  %v7165 = vperm.slane %v7007, %v7064
  %v7166 = vsel %vm7066, %v7165, %v7164
  %v7167 = vperm.slane %v7010, %v7068
  %v7168 = vsel %vm7070, %v7167, %v7166
  %v7169 = vperm.slane %v7013, %v7072
  %v7170 = vsel %vm7074, %v7169, %v7168
  %v7171 = vperm.slane %v7016, %v7076
  %v7172 = vsel %vm7078, %v7171, %v7170
  %vm7173 = vcmask 1041409
  %v7174 = vsel %vm7173, %v7141, %v7079
  %v7175 = vsel %vm7173, %v7172, %v7110
  %v7176 = vrot.slane %v7175, 6
  %vm7177 = vcmask 1041408
  %v7178 = vsel %vm7177, %v7174, %v7176
  %7180 = vst [vmem:[%s5] sm:$0xf] %v7178
  // Predicated region
  $region22: #{ir_teacher_head.1} parent=0 // pred_check
    _
  $region23: #{ir_teacher_head.1} parent=0 // pred_check_branch
    %7182 = sbr.rel (0) target = $region25
  $region24: #{ir_teacher_head.1} parent=0 // pred_region
    _
  $region25: #{ir_teacher_head.1} parent=0 // pred_fallthru
    _
  // Predicated region
  $region26: #{ir_teacher_head.1} parent=0 // pred_check
    _
  $region27: #{ir_teacher_head.1} parent=0 // pred_check_branch
    %7184 = sbr.rel (0) target = $region29
  $region28: #{ir_teacher_head.1} parent=0 // pred_region
    _
  $region29: #{ir_teacher_head.1} parent=0 // pred_fallthru
    _

</llo_original>
